<compile_context>
chip_gen: v5e
topology: v5e:2x2
jax: 0.10.0
libtpu: 0.0.40
codegen_flags: <defaults>
</compile_context>

<pallas_src>
import functools
import math

import jax
import jax.numpy as jnp
from jax import lax
from jax.experimental import pallas as pl
from jax.experimental.pallas import tpu as pltpu

EPS = 1e-6
_NEG_INF = -1e30


def _tile(dim: int, cap: int) -> int:
    """Largest power-of-two tile <= cap that divides dim (falls back to full dim)."""
    if dim <= cap:
        return dim
    t = cap
    while t > 1 and dim % t != 0:
        t //= 2
    return t if (t >= 8 and dim % t == 0) else dim


# ----------------------------------------------------------------------------
# RMSNorm + int8 activation quant prologue (full-K so reductions stay correct)
# ----------------------------------------------------------------------------
def _rmsnorm_quant_kernel(x_ref, q_ref, s_ref):
    x = x_ref[...]                                           # (tm, K) f32
    ms = jnp.mean(x * x, axis=-1, keepdims=True)
    xn = x * lax.rsqrt(ms + EPS)
    amax = jnp.maximum(jnp.max(jnp.abs(xn), axis=-1, keepdims=True), 1e-5)
    scale = 127.0 / amax
    q_ref[...] = jnp.clip(jnp.round(xn * scale), -128.0, 127.0).astype(jnp.bfloat16)
    s_ref[...] = amax * (1.0 / 127.0)                        # per-row dequant scale


def rmsnorm_quant(x2d, row_cap=128):
    M, K = x2d.shape
    tm = _tile(M, row_cap)
    return pl.pallas_call(
        _rmsnorm_quant_kernel,
        out_shape=(jax.ShapeDtypeStruct((M, K), jnp.bfloat16),
                   jax.ShapeDtypeStruct((M, 1), jnp.float32)),
        grid=(M // tm,),
        in_specs=[pl.BlockSpec((tm, K), lambda i: (i, 0))],
        out_specs=(pl.BlockSpec((tm, K), lambda i: (i, 0)),
                   pl.BlockSpec((tm, 1), lambda i: (i, 0))),
        compiler_params=pltpu.CompilerParams(dimension_semantics=("parallel",)),
    )(x2d)


# Fused SiLU gate + RMSNorm + quant prologue for the w2 BitLinear.
def _silu_gate_quant_kernel(a_ref, b_ref, q_ref, s_ref):
    a = a_ref[...]                                           # (tm, F) f32
    g = a * jax.nn.sigmoid(a) * b_ref[...]                   # silu(w1 x) * w3 x
    ms = jnp.mean(g * g, axis=-1, keepdims=True)
    gn = g * lax.rsqrt(ms + EPS)
    amax = jnp.maximum(jnp.max(jnp.abs(gn), axis=-1, keepdims=True), 1e-5)
    scale = 127.0 / amax
    q_ref[...] = jnp.clip(jnp.round(gn * scale), -128.0, 127.0).astype(jnp.bfloat16)
    s_ref[...] = amax * (1.0 / 127.0)


def silu_gate_quant(ab, ff_dim, row_cap=128):
    M, two_f = ab.shape
    assert two_f == 2 * ff_dim
    tm = _tile(M, row_cap)
    return pl.pallas_call(
        _silu_gate_quant_kernel,
        out_shape=(jax.ShapeDtypeStruct((M, ff_dim), jnp.bfloat16),
                   jax.ShapeDtypeStruct((M, 1), jnp.float32)),
        grid=(M // tm,),
        in_specs=[pl.BlockSpec((tm, ff_dim), lambda i: (i, 0)),   # a = ab[:, :F]
                  pl.BlockSpec((tm, ff_dim), lambda i: (i, 1))],  # b = ab[:, F:]
        out_specs=(pl.BlockSpec((tm, ff_dim), lambda i: (i, 0)),
                   pl.BlockSpec((tm, 1), lambda i: (i, 0))),
        compiler_params=pltpu.CompilerParams(dimension_semantics=("parallel",)),
    )(ab, ab)


# ----------------------------------------------------------------------------
# Tiled BitLinear matmul: bf16 MXU, f32 accumulator, dequant epilogue
# ----------------------------------------------------------------------------
def _bitlinear_mm_kernel(x_ref, w_ref, sx_ref, sw_ref, o_ref, acc_ref):
    @pl.when(pl.program_id(2) == 0)
    def _():
        acc_ref[...] = jnp.zeros_like(acc_ref)

    acc_ref[...] += jnp.dot(x_ref[...], w_ref[...],
                            preferred_element_type=jnp.float32)

    @pl.when(pl.program_id(2) == pl.num_programs(2) - 1)
    def _():
        o_ref[...] = acc_ref[...] * sx_ref[...] * sw_ref[...]


def bitlinear_matmul(xq, inv_sx, wt, inv_sw, *, tm_cap=256, tn_cap=512, tk_cap=1024):
    M, K = xq.shape
    K2, N = wt.shape
    assert K == K2 and inv_sx.shape == (M, 1) and inv_sw.shape == (1, N)
    tm, tn, tk = _tile(M, tm_cap), _tile(N, tn_cap), _tile(K, tk_cap)
    cost = pl.CostEstimate(flops=2 * M * N * K, transcendentals=0,
                           bytes_accessed=M * K * 2 + K * N * 2 + M * N * 4)
    return pl.pallas_call(
        _bitlinear_mm_kernel,
        out_shape=jax.ShapeDtypeStruct((M, N), jnp.float32),
        grid=(M // tm, N // tn, K // tk),
        in_specs=[pl.BlockSpec((tm, tk), lambda i, j, k: (i, k)),
                  pl.BlockSpec((tk, tn), lambda i, j, k: (k, j)),
                  pl.BlockSpec((tm, 1), lambda i, j, k: (i, 0)),
                  pl.BlockSpec((1, tn), lambda i, j, k: (0, j))],
        out_specs=pl.BlockSpec((tm, tn), lambda i, j, k: (i, j)),
        scratch_shapes=[pltpu.VMEM((tm, tn), jnp.float32)],
        compiler_params=pltpu.CompilerParams(
            dimension_semantics=("parallel", "parallel", "arbitrary")),
        cost_estimate=cost,
    )(xq, wt, inv_sx, inv_sw)


# ----------------------------------------------------------------------------
# Causal flash attention with fused rotary (half-split form; weights pre-permuted)
# ----------------------------------------------------------------------------
def _flash_attn_kernel(q_ref, k_ref, v_ref, cq_ref, sq_ref, ck_ref, sk_ref,
                       o_ref, m_sc, l_sc, acc_sc, *, n_heads):
    tq = q_ref.shape[1]
    tkv = k_ref.shape[1]
    d_model = q_ref.shape[2]
    dh = d_model // n_heads
    dh2 = dh // 2
    scale = 1.0 / math.sqrt(dh)
    qi = pl.program_id(1)
    kv = pl.program_id(2)

    @pl.when(kv == 0)
    def _():
        m_sc[...] = jnp.full_like(m_sc, _NEG_INF)
        l_sc[...] = jnp.zeros_like(l_sc)
        acc_sc[...] = jnp.zeros_like(acc_sc)

    # Skip kv tiles that lie entirely above the causal diagonal (~2x FLOP save).
    @pl.when(kv * tkv <= qi * tq + (tq - 1))
    def _():
        q_all = q_ref[0]                                     # (tq, D)
        k_all = k_ref[0]                                     # (tkv, D)
        v_all = v_ref[0]
        cq, sq = cq_ref[...], sq_ref[...]                    # (tq, dh2)
        ck, sk = ck_ref[...], sk_ref[...]                    # (tkv, dh2)
        row = qi * tq + lax.broadcasted_iota(jnp.int32, (tq, tkv), 0)
        col = kv * tkv + lax.broadcasted_iota(jnp.int32, (tq, tkv), 1)
        causal = col <= row
        dn = (((1,), (1,)), ((), ()))                        # contract last axes
        for h in range(n_heads):
            qh = q_all[:, h * dh:(h + 1) * dh]
            kh = k_all[:, h * dh:(h + 1) * dh]
            vh = v_all[:, h * dh:(h + 1) * dh]
            # Rotary in half-split form (wq/wk rows were permuted so this equals
            # the interleaved-pair convention of the reference module).
            q1, q2 = qh[:, :dh2], qh[:, dh2:]
            k1, k2 = kh[:, :dh2], kh[:, dh2:]
            qa = q1 * cq - q2 * sq
            qb = q1 * sq + q2 * cq
            ka = k1 * ck - k2 * sk
            kb = k1 * sk + k2 * ck
            s = (lax.dot_general(qa, ka, dn, preferred_element_type=jnp.float32) +
                 lax.dot_general(qb, kb, dn, preferred_element_type=jnp.float32))
            s = s * scale
            s = jnp.where(causal, s, _NEG_INF)
            m_prev = m_sc[h]
            m_new = jnp.maximum(m_prev, jnp.max(s, axis=-1, keepdims=True))
            alpha = jnp.exp(m_prev - m_new)
            p = jnp.exp(s - m_new)
            l_sc[h] = alpha * l_sc[h] + jnp.sum(p, axis=-1, keepdims=True)
            acc_sc[h] = alpha * acc_sc[h] + jnp.dot(
                p, vh, preferred_element_type=jnp.float32)
            m_sc[h] = m_new

    @pl.when(kv == pl.num_programs(2) - 1)
    def _():
        for h in range(n_heads):
            o_ref[0, :, pl.ds(h * dh, dh)] = (
                acc_sc[h] * pl.reciprocal(l_sc[h], approx=True)
            ).astype(o_ref.dtype)


def flash_causal_attention(qkv, cos, sin, n_heads, *, q_cap=256, kv_cap=256):
    B, S, three_d = qkv.shape
    D = three_d // 3
    dh = D // n_heads
    tq = _tile(S, q_cap)
    tkv = _tile(S, kv_cap)
    kern = functools.partial(_flash_attn_kernel, n_heads=n_heads)
    return pl.pallas_call(
        kern,
        out_shape=jax.ShapeDtypeStruct((B, S, D), jnp.float32),
        grid=(B, S // tq, S // tkv),
        in_specs=[
            pl.BlockSpec((1, tq, D), lambda b, qi, ki: (b, qi, 0)),   # Q slab
            pl.BlockSpec((1, tkv, D), lambda b, qi, ki: (b, ki, 1)),  # K slab
            pl.BlockSpec((1, tkv, D), lambda b, qi, ki: (b, ki, 2)),  # V slab
            pl.BlockSpec((tq, dh // 2), lambda b, qi, ki: (qi, 0)),   # cos @ q pos
            pl.BlockSpec((tq, dh // 2), lambda b, qi, ki: (qi, 0)),   # sin @ q pos
            pl.BlockSpec((tkv, dh // 2), lambda b, qi, ki: (ki, 0)),  # cos @ k pos
            pl.BlockSpec((tkv, dh // 2), lambda b, qi, ki: (ki, 0)),  # sin @ k pos
        ],
        out_specs=pl.BlockSpec((1, tq, D), lambda b, qi, ki: (b, qi, 0)),
        scratch_shapes=[pltpu.VMEM((n_heads, tq, 1), jnp.float32),
                        pltpu.VMEM((n_heads, tq, 1), jnp.float32),
                        pltpu.VMEM((n_heads, tq, dh), jnp.float32)],
        compiler_params=pltpu.CompilerParams(
            dimension_semantics=("parallel", "parallel", "arbitrary")),
    )(qkv, qkv, qkv, cos, sin, cos, sin)


# ----------------------------------------------------------------------------
# JAX glue: rotary tables, weight preprocessing, block wiring
# ----------------------------------------------------------------------------
def precompute_freqs_cis(head_dim, seqlen, theta=10000.0):
    freqs = 1.0 / (theta ** (jnp.arange(0, head_dim, 2, dtype=jnp.float32) / head_dim))
    t = jnp.arange(seqlen, dtype=jnp.float32)
    ang = jnp.outer(t, freqs)                                # (S, head_dim // 2)
    return jnp.cos(ang), jnp.sin(ang)


def _quantize_weight(w):
    """BitNet-b1.58 ternary weight quant -> (ternary values, dequant scale)."""
    s = jnp.maximum(jnp.mean(jnp.abs(w)), 1e-5)
    tern = jnp.clip(jnp.round(w / s), -1.0, 1.0)
    return tern, s


def _rope_row_perm(n_heads, head_dim):
    # Reorder output features within each head: even pair-elements then odd ones,
    # turning interleaved-pair rotary into the half-split form used in-kernel.
    d = jnp.arange(head_dim)
    perm = jnp.concatenate([d[0::2], d[1::2]])
    return (jnp.arange(n_heads)[:, None] * head_dim + perm[None, :]).reshape(-1)


def _prepare_weights(params, n_heads, head_dim):
    D = params["wq"].shape[0]
    F = params["w1"].shape[0]

    wq_t, s_q = _quantize_weight(params["wq"])
    wk_t, s_k = _quantize_weight(params["wk"])
    wv_t, s_v = _quantize_weight(params["wv"])
    perm = _rope_row_perm(n_heads, head_dim)
    wq_t = wq_t[perm, :]
    wk_t = wk_t[perm, :]
    w_qkv = jnp.concatenate([wq_t, wk_t, wv_t], axis=0).T.astype(jnp.bfloat16)  # (D,3D)
    s_qkv = jnp.concatenate([jnp.full((D,), s_q), jnp.full((D,), s_k),
                             jnp.full((D,), s_v)]).reshape(1, 3 * D)

    wo_t, s_o = _quantize_weight(params["wo"])
    w_o = wo_t.T.astype(jnp.bfloat16)                                           # (D,D)
    s_ov = jnp.full((1, D), s_o)

    w1_t, s_1 = _quantize_weight(params["w1"])
    w3_t, s_3 = _quantize_weight(params["w3"])
    w_13 = jnp.concatenate([w1_t, w3_t], axis=0).T.astype(jnp.bfloat16)         # (D,2F)
    s_13 = jnp.concatenate([jnp.full((F,), s_1),
                            jnp.full((F,), s_3)]).reshape(1, 2 * F)

    w2_t, s_2 = _quantize_weight(params["w2"])
    w_2 = w2_t.T.astype(jnp.bfloat16)                                           # (F,D)
    s_2v = jnp.full((1, D), s_2)
    return dict(w_qkv=w_qkv, s_qkv=s_qkv, w_o=w_o, s_o=s_ov,
                w_13=w_13, s_13=s_13, w_2=w_2, s_2=s_2v, ff_dim=F)


def transformer_block(x, params, cos, sin, n_heads):
    B, S, D = x.shape
    head_dim = D // n_heads
    M = B * S
    w = _prepare_weights(params, n_heads, head_dim)

    # --- Attention (attn_norm is Identity; RMSNorm lives inside BitLinear) ---
    xq, xs = rmsnorm_quant(x.reshape(M, D))
    qkv = bitlinear_matmul(xq, xs, w["w_qkv"], w["s_qkv"]).reshape(B, S, 3 * D)
    attn = flash_causal_attention(qkv, cos, sin, n_heads)            # (B, S, D)
    aq, as_ = rmsnorm_quant(attn.reshape(M, D))
    attn_out = bitlinear_matmul(aq, as_, w["w_o"], w["s_o"]).reshape(B, S, D)
    h = x + attn_out

    # --- FeedForward (SwiGLU; w1/w3 fused, gate fused into w2's quant prologue) ---
    hq, hs = rmsnorm_quant(h.reshape(M, D))
    ab = bitlinear_matmul(hq, hs, w["w_13"], w["s_13"])              # (M, 2F)
    gq, gs = silu_gate_quant(ab, w["ff_dim"])
    ff = bitlinear_matmul(gq, gs, w["w_2"], w["s_2"]).reshape(B, S, D)
    return h + ff


# ----------------------------------------------------------------------------
# Main
# ----------------------------------------------------------------------------
if __name__ == "__main__":
    B, S, D, H = 2, 16, 128, 4
    head_dim = D // H
    hidden_ff = 4 * D

    key = jax.random.PRNGKey(0)
    ks = jax.random.split(key, 8)
    params = {
        "wq": jax.random.normal(ks[0], (D, D), jnp.float32) * 0.02,
        "wk": jax.random.normal(ks[1], (D, D), jnp.float32) * 0.02,
        "wv": jax.random.normal(ks[2], (D, D), jnp.float32) * 0.02,
        "wo": jax.random.normal(ks[3], (D, D), jnp.float32) * 0.02,
        "w1": jax.random.normal(ks[4], (hidden_ff, D), jnp.float32) * 0.02,
        "w2": jax.random.normal(ks[5], (D, hidden_ff), jnp.float32) * 0.02,
        "w3": jax.random.normal(ks[6], (hidden_ff, D), jnp.float32) * 0.02,
    }
    x = jax.random.normal(ks[7], (B, S, D), jnp.float32)
    cos, sin = precompute_freqs_cis(head_dim, S)

    out = jax.jit(transformer_block, static_argnums=(4,))(x, params, cos, sin, H)
    jax.block_until_ready(out)
    assert out.shape == (B, S, D) and out.dtype == jnp.float32
    assert bool(jnp.all(jnp.isfinite(out)))
    print("KERNEL_OK")
</pallas_src>

<mosaic_0001>
module attributes {stable_mosaic.version = 11 : i64} {
  func.func @_rmsnorm_quant_kernel(%arg0: i32, %arg1: memref<32x128xf32, #tpu.memory_space<vmem>>, %arg2: memref<32x128xbf16, #tpu.memory_space<vmem>>, %arg3: memref<32x1xf32, #tpu.memory_space<vmem>>) attributes {dimension_semantics = [#tpu.dimension_semantics<parallel>], iteration_bounds = array<i64: 1>, scalar_prefetch = 0 : i64, scratch_operands = 0 : i64, tpu.core_type = #tpu.core_type<tc>, window_params = [{transform_indices = @transform_0, window_bounds = array<i64: 32, 128>}, {transform_indices = @transform_1, window_bounds = array<i64: 32, 128>}, {transform_indices = @transform_2, window_bounds = array<i64: 32, 1>}]} {
    %c0 = arith.constant 0 : index
    %c0_0 = arith.constant 0 : index
    %0 = vector.load %arg1[%c0, %c0_0] : memref<32x128xf32, #tpu.memory_space<vmem>>, vector<32x128xf32>
    %1 = arith.mulf %0, %0 : vector<32x128xf32>
    %cst = arith.constant dense<0.000000e+00> : vector<32xf32>
    %2 = vector.multi_reduction <add>, %1, %cst [1] : vector<32x128xf32> to vector<32xf32>
    %3 = vector.shape_cast %2 : vector<32xf32> to vector<32x1xf32>
    %cst_1 = arith.constant 1.280000e+02 : f32
    %4 = vector.broadcast %cst_1 : f32 to vector<32x1xf32>
    %5 = arith.divf %3, %4 : vector<32x1xf32>
    %cst_2 = arith.constant 9.99999997E-7 : f32
    %6 = vector.broadcast %cst_2 : f32 to vector<32x1xf32>
    %7 = arith.addf %5, %6 : vector<32x1xf32>
    %8 = math.rsqrt %7 : vector<32x1xf32>
    %9 = vector.broadcast %8 : vector<32x1xf32> to vector<32x128xf32>
    %10 = arith.mulf %0, %9 : vector<32x128xf32>
    %11 = math.absf %10 : vector<32x128xf32>
    %cst_3 = arith.constant dense<0xFF800000> : vector<32xf32>
    %12 = vector.multi_reduction <maximumf>, %11, %cst_3 [1] : vector<32x128xf32> to vector<32xf32>
    %13 = vector.shape_cast %12 : vector<32xf32> to vector<32x1xf32>
    %cst_4 = arith.constant 9.99999974E-6 : f32
    %14 = vector.broadcast %cst_4 : f32 to vector<32x1xf32>
    %15 = arith.maximumf %13, %14 : vector<32x1xf32>
    %cst_5 = arith.constant 1.270000e+02 : f32
    %16 = vector.broadcast %cst_5 : f32 to vector<32x1xf32>
    %17 = arith.divf %16, %15 : vector<32x1xf32>
    %18 = vector.broadcast %17 : vector<32x1xf32> to vector<32x128xf32>
    %19 = arith.mulf %10, %18 : vector<32x128xf32>
    %20 = math.roundeven %19 : vector<32x128xf32>
    %cst_6 = arith.constant -1.280000e+02 : f32
    %cst_7 = arith.constant 1.270000e+02 : f32
    %21 = vector.broadcast %cst_6 : f32 to vector<32x128xf32>
    %22 = arith.maximumf %21, %20 : vector<32x128xf32>
    %23 = vector.broadcast %cst_7 : f32 to vector<32x128xf32>
    %24 = arith.minimumf %23, %22 : vector<32x128xf32>
    %25 = arith.truncf %24 : vector<32x128xf32> to vector<32x128xbf16>
    %c0_8 = arith.constant 0 : index
    %c0_9 = arith.constant 0 : index
    %26 = vector.load %arg2[%c0_8, %c0_9] : memref<32x128xbf16, #tpu.memory_space<vmem>>, vector<32x128xbf16>
    tpu.vector_store %arg2[%c0_8, %c0_9], %25 {strides = array<i32>} : memref<32x128xbf16, #tpu.memory_space<vmem>>, vector<32x128xbf16>,
    %cst_10 = arith.constant 0.00787401571 : f32
    %27 = vector.broadcast %cst_10 : f32 to vector<32x1xf32>
    %28 = arith.mulf %15, %27 : vector<32x1xf32>
    %c0_11 = arith.constant 0 : index
    %c0_12 = arith.constant 0 : index
    %29 = vector.load %arg3[%c0_11, %c0_12] : memref<32x1xf32, #tpu.memory_space<vmem>>, vector<32x1xf32>
    tpu.vector_store %arg3[%c0_11, %c0_12], %28 {strides = array<i32>} : memref<32x1xf32, #tpu.memory_space<vmem>>, vector<32x1xf32>,
    return
  }
  func.func @transform_0(%arg0: i32) -> (i32, i32) {
    %c0_i32 = arith.constant 0 : i32
    %c0_i32_0 = arith.constant 0 : i32
    return %arg0, %c0_i32 : i32, i32
  }
  func.func @transform_1(%arg0: i32) -> (i32, i32) {
    %c0_i32 = arith.constant 0 : i32
    %c0_i32_0 = arith.constant 0 : i32
    return %arg0, %c0_i32 : i32, i32
  }
  func.func @transform_2(%arg0: i32) -> (i32, i32) {
    %c0_i32 = arith.constant 0 : i32
    %c0_i32_0 = arith.constant 0 : i32
    return %arg0, %c0_i32 : i32, i32
  }
}

module attributes {stable_mosaic.version = 11 : i64} {
  func.func @_bitlinear_mm_kernel(%arg0: i32, %arg1: i32, %arg2: i32, %arg3: memref<32x128xbf16, #tpu.memory_space<vmem>>, %arg4: memref<128x384xbf16, #tpu.memory_space<vmem>>, %arg5: memref<32x1xf32, #tpu.memory_space<vmem>>, %arg6: memref<1x384xf32, #tpu.memory_space<vmem>>, %arg7: memref<32x384xf32, #tpu.memory_space<vmem>>, %arg8: memref<32x384xf32, #tpu.memory_space<vmem>>) attributes {dimension_semantics = [#tpu.dimension_semantics<parallel>, #tpu.dimension_semantics<parallel>, #tpu.dimension_semantics<arbitrary>], iteration_bounds = array<i64: 1, 1, 1>, scalar_prefetch = 0 : i64, scratch_operands = 1 : i64, tpu.core_type = #tpu.core_type<tc>, window_params = [{transform_indices = @transform_0, window_bounds = array<i64: 32, 128>}, {transform_indices = @transform_1, window_bounds = array<i64: 128, 384>}, {transform_indices = @transform_2, window_bounds = array<i64: 32, 1>}, {transform_indices = @transform_3, window_bounds = array<i64: 1, 384>}, {transform_indices = @transform_4, window_bounds = array<i64: 32, 384>}]} {
    %c0_i32 = arith.constant 0 : i32
    %0 = arith.cmpi eq, %arg2, %c0_i32 : i32
    %1 = arith.extui %0 : i1 to i32
    %c0_i32_0 = arith.constant 0 : i32
    %2 = arith.cmpi ne, %1, %c0_i32_0 : i32
    scf.if %2 {
      %cst_10 = arith.constant 0.000000e+00 : f32
      %12 = vector.broadcast %cst_10 : f32 to vector<32x384xf32>
      %c0_11 = arith.constant 0 : index
      %c0_12 = arith.constant 0 : index
      %13 = vector.load %arg8[%c0_11, %c0_12] : memref<32x384xf32, #tpu.memory_space<vmem>>, vector<32x384xf32>
      tpu.vector_store %arg8[%c0_11, %c0_12], %12 {strides = array<i32>} : memref<32x384xf32, #tpu.memory_space<vmem>>, vector<32x384xf32>,
    } else {
    }
    %c0 = arith.constant 0 : index
    %c0_1 = arith.constant 0 : index
    %3 = vector.load %arg8[%c0, %c0_1] : memref<32x384xf32, #tpu.memory_space<vmem>>, vector<32x384xf32>
    %c0_2 = arith.constant 0 : index
    %c0_3 = arith.constant 0 : index
    %4 = vector.load %arg3[%c0_2, %c0_3] : memref<32x128xbf16, #tpu.memory_space<vmem>>, vector<32x128xbf16>
    %c0_4 = arith.constant 0 : index
    %c0_5 = arith.constant 0 : index
    %5 = vector.load %arg4[%c0_4, %c0_5] : memref<128x384xbf16, #tpu.memory_space<vmem>>, vector<128x384xbf16>
    %cst = arith.constant dense<0.000000e+00> : vector<32x384xf32>
    %6 = tpu.matmul %4, %5, %cst {dimension_numbers = #tpu.dot_dimension_numbers<[1], [0], [0], [1], [0, 0, 1, 1], [], []>} : vector<32x128xbf16>, vector<128x384xbf16>, vector<32x384xf32> -> vector<32x384xf32>
    %7 = arith.addf %3, %6 : vector<32x384xf32>
    %c0_6 = arith.constant 0 : index
    %c0_7 = arith.constant 0 : index
    %8 = vector.load %arg8[%c0_6, %c0_7] : memref<32x384xf32, #tpu.memory_space<vmem>>, vector<32x384xf32>
    tpu.vector_store %arg8[%c0_6, %c0_7], %7 {strides = array<i32>} : memref<32x384xf32, #tpu.memory_space<vmem>>, vector<32x384xf32>,
    %c0_i32_8 = arith.constant 0 : i32
    %9 = arith.cmpi eq, %arg2, %c0_i32_8 : i32
    %10 = arith.extui %9 : i1 to i32
    %c0_i32_9 = arith.constant 0 : i32
    %11 = arith.cmpi ne, %10, %c0_i32_9 : i32
    scf.if %11 {
      %c0_10 = arith.constant 0 : index
      %c0_11 = arith.constant 0 : index
      %12 = vector.load %arg8[%c0_10, %c0_11] : memref<32x384xf32, #tpu.memory_space<vmem>>, vector<32x384xf32>
      %c0_12 = arith.constant 0 : index
      %c0_13 = arith.constant 0 : index
      %13 = vector.load %arg5[%c0_12, %c0_13] : memref<32x1xf32, #tpu.memory_space<vmem>>, vector<32x1xf32>
      %14 = vector.broadcast %13 : vector<32x1xf32> to vector<32x384xf32>
      %15 = arith.mulf %12, %14 : vector<32x384xf32>
      %c0_14 = arith.constant 0 : index
      %c0_15 = arith.constant 0 : index
      %16 = vector.load %arg6[%c0_14, %c0_15] : memref<1x384xf32, #tpu.memory_space<vmem>>, vector<1x384xf32>
      %17 = vector.broadcast %16 : vector<1x384xf32> to vector<32x384xf32>
      %18 = arith.mulf %15, %17 : vector<32x384xf32>
      %c0_16 = arith.constant 0 : index
      %c0_17 = arith.constant 0 : index
      %19 = vector.load %arg7[%c0_16, %c0_17] : memref<32x384xf32, #tpu.memory_space<vmem>>, vector<32x384xf32>
      tpu.vector_store %arg7[%c0_16, %c0_17], %18 {strides = array<i32>} : memref<32x384xf32, #tpu.memory_space<vmem>>, vector<32x384xf32>,
    } else {
    }
    return
  }
  func.func @transform_0(%arg0: i32, %arg1: i32, %arg2: i32) -> (i32, i32) {
    %c0_i32 = arith.constant 0 : i32
    return %arg0, %arg2 : i32, i32
  }
  func.func @transform_1(%arg0: i32, %arg1: i32, %arg2: i32) -> (i32, i32) {
    %c0_i32 = arith.constant 0 : i32
    return %arg2, %arg1 : i32, i32
  }
  func.func @transform_2(%arg0: i32, %arg1: i32, %arg2: i32) -> (i32, i32) {
    %c0_i32 = arith.constant 0 : i32
    %c0_i32_0 = arith.constant 0 : i32
    return %arg0, %c0_i32 : i32, i32
  }
  func.func @transform_3(%arg0: i32, %arg1: i32, %arg2: i32) -> (i32, i32) {
    %c0_i32 = arith.constant 0 : i32
    %c0_i32_0 = arith.constant 0 : i32
    return %c0_i32, %arg1 : i32, i32
  }
  func.func @transform_4(%arg0: i32, %arg1: i32, %arg2: i32) -> (i32, i32) {
    %c0_i32 = arith.constant 0 : i32
    return %arg0, %arg1 : i32, i32
  }
}

module attributes {stable_mosaic.version = 11 : i64} {
  func.func @_flash_attn_kernel(%arg0: i32, %arg1: i32, %arg2: i32, %arg3: memref<1x16x128xf32, #tpu.memory_space<vmem>>, %arg4: memref<1x16x128xf32, #tpu.memory_space<vmem>>, %arg5: memref<1x16x128xf32, #tpu.memory_space<vmem>>, %arg6: memref<16x16xf32, #tpu.memory_space<vmem>>, %arg7: memref<16x16xf32, #tpu.memory_space<vmem>>, %arg8: memref<16x16xf32, #tpu.memory_space<vmem>>, %arg9: memref<16x16xf32, #tpu.memory_space<vmem>>, %arg10: memref<1x16x128xf32, #tpu.memory_space<vmem>>, %arg11: memref<4x16x1xf32, #tpu.memory_space<vmem>>, %arg12: memref<4x16x1xf32, #tpu.memory_space<vmem>>, %arg13: memref<4x16x32xf32, #tpu.memory_space<vmem>>) attributes {dimension_semantics = [#tpu.dimension_semantics<parallel>, #tpu.dimension_semantics<parallel>, #tpu.dimension_semantics<arbitrary>], iteration_bounds = array<i64: 2, 1, 1>, scalar_prefetch = 0 : i64, scratch_operands = 3 : i64, tpu.core_type = #tpu.core_type<tc>, window_params = [{transform_indices = @transform_0, window_bounds = array<i64: 1, 16, 128>}, {transform_indices = @transform_1, window_bounds = array<i64: 1, 16, 128>}, {transform_indices = @transform_2, window_bounds = array<i64: 1, 16, 128>}, {transform_indices = @transform_3, window_bounds = array<i64: 16, 16>}, {transform_indices = @transform_4, window_bounds = array<i64: 16, 16>}, {transform_indices = @transform_5, window_bounds = array<i64: 16, 16>}, {transform_indices = @transform_6, window_bounds = array<i64: 16, 16>}, {transform_indices = @transform_7, window_bounds = array<i64: 1, 16, 128>}]} {
    %c0_i32 = arith.constant 0 : i32
    %0 = arith.cmpi eq, %arg2, %c0_i32 : i32
    %1 = arith.extui %0 : i1 to i32
    %c0_i32_0 = arith.constant 0 : i32
    %2 = arith.cmpi ne, %1, %c0_i32_0 : i32
    scf.if %2 {
      %cst = arith.constant -1.000000e+30 : f32
      %12 = vector.broadcast %cst : f32 to vector<4x16x1xf32>
      %c0 = arith.constant 0 : index
      %c0_5 = arith.constant 0 : index
      %c0_6 = arith.constant 0 : index
      %13 = vector.load %arg11[%c0, %c0_5, %c0_6] : memref<4x16x1xf32, #tpu.memory_space<vmem>>, vector<4x16x1xf32>
      tpu.vector_store %arg11[%c0, %c0_5, %c0_6], %12 {strides = array<i32>} : memref<4x16x1xf32, #tpu.memory_space<vmem>>, vector<4x16x1xf32>,
      %cst_7 = arith.constant 0.000000e+00 : f32
      %14 = vector.broadcast %cst_7 : f32 to vector<4x16x1xf32>
      %c0_8 = arith.constant 0 : index
      %c0_9 = arith.constant 0 : index
      %c0_10 = arith.constant 0 : index
      %15 = vector.load %arg12[%c0_8, %c0_9, %c0_10] : memref<4x16x1xf32, #tpu.memory_space<vmem>>, vector<4x16x1xf32>
      tpu.vector_store %arg12[%c0_8, %c0_9, %c0_10], %14 {strides = array<i32>} : memref<4x16x1xf32, #tpu.memory_space<vmem>>, vector<4x16x1xf32>,
      %cst_11 = arith.constant 0.000000e+00 : f32
      %16 = vector.broadcast %cst_11 : f32 to vector<4x16x32xf32>
      %c0_12 = arith.constant 0 : index
      %c0_13 = arith.constant 0 : index
      %c0_14 = arith.constant 0 : index
      %17 = vector.load %arg13[%c0_12, %c0_13, %c0_14] : memref<4x16x32xf32, #tpu.memory_space<vmem>>, vector<4x16x32xf32>
      tpu.vector_store %arg13[%c0_12, %c0_13, %c0_14], %16 {strides = array<i32>} : memref<4x16x32xf32, #tpu.memory_space<vmem>>, vector<4x16x32xf32>,
    } else {
    }
    %c16_i32 = arith.constant 16 : i32
    %3 = arith.muli %arg2, %c16_i32 : i32
    %c16_i32_1 = arith.constant 16 : i32
    %4 = arith.muli %arg1, %c16_i32_1 : i32
    %c15_i32 = arith.constant 15 : i32
    %5 = arith.addi %4, %c15_i32 : i32
    %6 = arith.cmpi sle, %3, %5 : i32
    %7 = arith.extui %6 : i1 to i32
    %c0_i32_2 = arith.constant 0 : i32
    %8 = arith.cmpi ne, %7, %c0_i32_2 : i32
    scf.if %8 {
      %c0 = arith.constant 0 : index
      %c0_5 = arith.constant 0 : index
      %c0_6 = arith.constant 0 : index
      %12 = vector.load %arg3[%c0, %c0_5, %c0_6] : memref<1x16x128xf32, #tpu.memory_space<vmem>>, vector<1x16x128xf32>
      %13 = vector.shape_cast %12 : vector<1x16x128xf32> to vector<16x128xf32>
      %c0_7 = arith.constant 0 : index
      %c0_8 = arith.constant 0 : index
      %c0_9 = arith.constant 0 : index
      %14 = vector.load %arg4[%c0_7, %c0_8, %c0_9] : memref<1x16x128xf32, #tpu.memory_space<vmem>>, vector<1x16x128xf32>
      %15 = vector.shape_cast %14 : vector<1x16x128xf32> to vector<16x128xf32>
      %c0_10 = arith.constant 0 : index
      %c0_11 = arith.constant 0 : index
      %c0_12 = arith.constant 0 : index
      %16 = vector.load %arg5[%c0_10, %c0_11, %c0_12] : memref<1x16x128xf32, #tpu.memory_space<vmem>>, vector<1x16x128xf32>
      %17 = vector.shape_cast %16 : vector<1x16x128xf32> to vector<16x128xf32>
      %c0_13 = arith.constant 0 : index
      %c0_14 = arith.constant 0 : index
      %18 = vector.load %arg6[%c0_13, %c0_14] : memref<16x16xf32, #tpu.memory_space<vmem>>, vector<16x16xf32>
      %c0_15 = arith.constant 0 : index
      %c0_16 = arith.constant 0 : index
      %19 = vector.load %arg7[%c0_15, %c0_16] : memref<16x16xf32, #tpu.memory_space<vmem>>, vector<16x16xf32>
      %c0_17 = arith.constant 0 : index
      %c0_18 = arith.constant 0 : index
      %20 = vector.load %arg8[%c0_17, %c0_18] : memref<16x16xf32, #tpu.memory_space<vmem>>, vector<16x16xf32>
      %c0_19 = arith.constant 0 : index
      %c0_20 = arith.constant 0 : index
      %21 = vector.load %arg9[%c0_19, %c0_20] : memref<16x16xf32, #tpu.memory_space<vmem>>, vector<16x16xf32>
      %c16_i32_21 = arith.constant 16 : i32
      %22 = arith.muli %arg1, %c16_i32_21 : i32
      %23 = tpu.iota {dimensions = array<i32: 0>} : vector<16x16xi32>
      %24 = vector.broadcast %22 : i32 to vector<16x16xi32>
      %25 = arith.addi %24, %23 : vector<16x16xi32>
      %c16_i32_22 = arith.constant 16 : i32
      %26 = arith.muli %arg2, %c16_i32_22 : i32
      %27 = tpu.iota {dimensions = array<i32: 1>} : vector<16x16xi32>
      %28 = vector.broadcast %26 : i32 to vector<16x16xi32>
      %29 = arith.addi %28, %27 : vector<16x16xi32>
      %30 = arith.cmpi sle, %29, %25 : vector<16x16xi32>
      %31 = vector.extract_strided_slice %13 {offsets = [0, 0], sizes = [16, 32], strides = [1, 1]} : vector<16x128xf32> to vector<16x32xf32>
      %32 = vector.extract_strided_slice %15 {offsets = [0, 0], sizes = [16, 32], strides = [1, 1]} : vector<16x128xf32> to vector<16x32xf32>
      %33 = vector.extract_strided_slice %17 {offsets = [0, 0], sizes = [16, 32], strides = [1, 1]} : vector<16x128xf32> to vector<16x32xf32>
      %34 = vector.extract_strided_slice %31 {offsets = [0, 0], sizes = [16, 16], strides = [1, 1]} : vector<16x32xf32> to vector<16x16xf32>
      %35 = vector.extract_strided_slice %31 {offsets = [0, 16], sizes = [16, 16], strides = [1, 1]} : vector<16x32xf32> to vector<16x16xf32>
      %36 = vector.extract_strided_slice %32 {offsets = [0, 0], sizes = [16, 16], strides = [1, 1]} : vector<16x32xf32> to vector<16x16xf32>
      %37 = vector.extract_strided_slice %32 {offsets = [0, 16], sizes = [16, 16], strides = [1, 1]} : vector<16x32xf32> to vector<16x16xf32>
      %38 = arith.mulf %34, %18 : vector<16x16xf32>
      %39 = arith.mulf %35, %19 : vector<16x16xf32>
      %40 = arith.subf %38, %39 : vector<16x16xf32>
      %41 = arith.mulf %34, %19 : vector<16x16xf32>
      %42 = arith.mulf %35, %18 : vector<16x16xf32>
      %43 = arith.addf %41, %42 : vector<16x16xf32>
      %44 = arith.mulf %36, %20 : vector<16x16xf32>
      %45 = arith.mulf %37, %21 : vector<16x16xf32>
      %46 = arith.subf %44, %45 : vector<16x16xf32>
      %47 = arith.mulf %36, %21 : vector<16x16xf32>
      %48 = arith.mulf %37, %20 : vector<16x16xf32>
      %49 = arith.addf %47, %48 : vector<16x16xf32>
      %cst = arith.constant dense<0.000000e+00> : vector<16x16xf32>
      %50 = tpu.matmul %40, %46, %cst {dimension_numbers = #tpu.dot_dimension_numbers<[1], [1], [0], [0], [0, 0, 1, 0], [], []>} : vector<16x16xf32>, vector<16x16xf32>, vector<16x16xf32> -> vector<16x16xf32>
      %cst_23 = arith.constant dense<0.000000e+00> : vector<16x16xf32>
      %51 = tpu.matmul %43, %49, %cst_23 {dimension_numbers = #tpu.dot_dimension_numbers<[1], [1], [0], [0], [0, 0, 1, 0], [], []>} : vector<16x16xf32>, vector<16x16xf32>, vector<16x16xf32> -> vector<16x16xf32>
      %52 = arith.addf %50, %51 : vector<16x16xf32>
      %cst_24 = arith.constant 0.176776692 : f32
      %53 = vector.broadcast %cst_24 : f32 to vector<16x16xf32>
      %54 = arith.mulf %52, %53 : vector<16x16xf32>
      %cst_25 = arith.constant -1.000000e+30 : f32
      %55 = vector.broadcast %cst_25 : f32 to vector<16x16xf32>
      %56 = arith.select %30, %54, %55 : vector<16x16xi1>, vector<16x16xf32>
      %c0_26 = arith.constant 0 : index
      %c0_27 = arith.constant 0 : index
      %c0_28 = arith.constant 0 : index
      %57 = vector.load %arg11[%c0_26, %c0_27, %c0_28] : memref<4x16x1xf32, #tpu.memory_space<vmem>>, vector<1x16x1xf32>
      %58 = vector.shape_cast %57 : vector<1x16x1xf32> to vector<16x1xf32>
      %cst_29 = arith.constant dense<0xFF800000> : vector<16xf32>
      %59 = vector.multi_reduction <maximumf>, %56, %cst_29 [1] : vector<16x16xf32> to vector<16xf32>
      %60 = vector.shape_cast %59 : vector<16xf32> to vector<16x1xf32>
      %61 = arith.maximumf %58, %60 : vector<16x1xf32>
      %62 = arith.subf %58, %61 : vector<16x1xf32>
      %63 = math.exp %62 : vector<16x1xf32>
      %64 = vector.broadcast %61 : vector<16x1xf32> to vector<16x16xf32>
      %65 = arith.subf %56, %64 : vector<16x16xf32>
      %66 = math.exp %65 : vector<16x16xf32>
      %c0_30 = arith.constant 0 : index
      %c0_31 = arith.constant 0 : index
      %c0_32 = arith.constant 0 : index
      %67 = vector.load %arg12[%c0_30, %c0_31, %c0_32] : memref<4x16x1xf32, #tpu.memory_space<vmem>>, vector<1x16x1xf32>
      %68 = vector.shape_cast %67 : vector<1x16x1xf32> to vector<16x1xf32>
      %69 = arith.mulf %63, %68 : vector<16x1xf32>
      %cst_33 = arith.constant dense<0.000000e+00> : vector<16xf32>
      %70 = vector.multi_reduction <add>, %66, %cst_33 [1] : vector<16x16xf32> to vector<16xf32>
      %71 = vector.shape_cast %70 : vector<16xf32> to vector<16x1xf32>
      %72 = arith.addf %69, %71 : vector<16x1xf32>
      %c0_34 = arith.constant 0 : index
      %c0_35 = arith.constant 0 : index
      %c0_36 = arith.constant 0 : index
      %73 = vector.load %arg12[%c0_34, %c0_35, %c0_36] : memref<4x16x1xf32, #tpu.memory_space<vmem>>, vector<1x16x1xf32>
      %74 = vector.shape_cast %73 : vector<1x16x1xf32> to vector<16x1xf32>
      %75 = vector.shape_cast %72 : vector<16x1xf32> to vector<1x16x1xf32>
      tpu.vector_store %arg12[%c0_34, %c0_35, %c0_36], %75 {strides = array<i32>} : memref<4x16x1xf32, #tpu.memory_space<vmem>>, vector<1x16x1xf32>,
      %c0_37 = arith.constant 0 : index
      %c0_38 = arith.constant 0 : index
      %c0_39 = arith.constant 0 : index
      %76 = vector.load %arg13[%c0_37, %c0_38, %c0_39] : memref<4x16x32xf32, #tpu.memory_space<vmem>>, vector<1x16x32xf32>
      %77 = vector.shape_cast %76 : vector<1x16x32xf32> to vector<16x32xf32>
      %78 = vector.broadcast %63 : vector<16x1xf32> to vector<16x32xf32>
      %79 = arith.mulf %78, %77 : vector<16x32xf32>
      %cst_40 = arith.constant dense<0.000000e+00> : vector<16x32xf32>
      %80 = tpu.matmul %66, %33, %cst_40 {dimension_numbers = #tpu.dot_dimension_numbers<[1], [0], [0], [1], [0, 0, 1, 1], [], []>} : vector<16x16xf32>, vector<16x32xf32>, vector<16x32xf32> -> vector<16x32xf32>
      %81 = arith.addf %79, %80 : vector<16x32xf32>
      %c0_41 = arith.constant 0 : index
      %c0_42 = arith.constant 0 : index
      %c0_43 = arith.constant 0 : index
      %82 = vector.load %arg13[%c0_41, %c0_42, %c0_43] : memref<4x16x32xf32, #tpu.memory_space<vmem>>, vector<1x16x32xf32>
      %83 = vector.shape_cast %82 : vector<1x16x32xf32> to vector<16x32xf32>
      %84 = vector.shape_cast %81 : vector<16x32xf32> to vector<1x16x32xf32>
      tpu.vector_store %arg13[%c0_41, %c0_42, %c0_43], %84 {strides = array<i32>} : memref<4x16x32xf32, #tpu.memory_space<vmem>>, vector<1x16x32xf32>,
      %c0_44 = arith.constant 0 : index
      %c0_45 = arith.constant 0 : index
      %c0_46 = arith.constant 0 : index
      %85 = vector.load %arg11[%c0_44, %c0_45, %c0_46] : memref<4x16x1xf32, #tpu.memory_space<vmem>>, vector<1x16x1xf32>
      %86 = vector.shape_cast %85 : vector<1x16x1xf32> to vector<16x1xf32>
      %87 = vector.shape_cast %61 : vector<16x1xf32> to vector<1x16x1xf32>
      tpu.vector_store %arg11[%c0_44, %c0_45, %c0_46], %87 {strides = array<i32>} : memref<4x16x1xf32, #tpu.memory_space<vmem>>, vector<1x16x1xf32>,
      %88 = vector.extract_strided_slice %13 {offsets = [0, 32], sizes = [16, 32], strides = [1, 1]} : vector<16x128xf32> to vector<16x32xf32>
      %89 = vector.extract_strided_slice %15 {offsets = [0, 32], sizes = [16, 32], strides = [1, 1]} : vector<16x128xf32> to vector<16x32xf32>
      %90 = vector.extract_strided_slice %17 {offsets = [0, 32], sizes = [16, 32], strides = [1, 1]} : vector<16x128xf32> to vector<16x32xf32>
      %91 = vector.extract_strided_slice %88 {offsets = [0, 0], sizes = [16, 16], strides = [1, 1]} : vector<16x32xf32> to vector<16x16xf32>
      %92 = vector.extract_strided_slice %88 {offsets = [0, 16], sizes = [16, 16], strides = [1, 1]} : vector<16x32xf32> to vector<16x16xf32>
      %93 = vector.extract_strided_slice %89 {offsets = [0, 0], sizes = [16, 16], strides = [1, 1]} : vector<16x32xf32> to vector<16x16xf32>
      %94 = vector.extract_strided_slice %89 {offsets = [0, 16], sizes = [16, 16], strides = [1, 1]} : vector<16x32xf32> to vector<16x16xf32>
      %95 = arith.mulf %91, %18 : vector<16x16xf32>
      %96 = arith.mulf %92, %19 : vector<16x16xf32>
      %97 = arith.subf %95, %96 : vector<16x16xf32>
      %98 = arith.mulf %91, %19 : vector<16x16xf32>
      %99 = arith.mulf %92, %18 : vector<16x16xf32>
      %100 = arith.addf %98, %99 : vector<16x16xf32>
      %101 = arith.mulf %93, %20 : vector<16x16xf32>
      %102 = arith.mulf %94, %21 : vector<16x16xf32>
      %103 = arith.subf %101, %102 : vector<16x16xf32>
      %104 = arith.mulf %93, %21 : vector<16x16xf32>
      %105 = arith.mulf %94, %20 : vector<16x16xf32>
      %106 = arith.addf %104, %105 : vector<16x16xf32>
      %cst_47 = arith.constant dense<0.000000e+00> : vector<16x16xf32>
      %107 = tpu.matmul %97, %103, %cst_47 {dimension_numbers = #tpu.dot_dimension_numbers<[1], [1], [0], [0], [0, 0, 1, 0], [], []>} : vector<16x16xf32>, vector<16x16xf32>, vector<16x16xf32> -> vector<16x16xf32>
      %cst_48 = arith.constant dense<0.000000e+00> : vector<16x16xf32>
      %108 = tpu.matmul %100, %106, %cst_48 {dimension_numbers = #tpu.dot_dimension_numbers<[1], [1], [0], [0], [0, 0, 1, 0], [], []>} : vector<16x16xf32>, vector<16x16xf32>, vector<16x16xf32> -> vector<16x16xf32>
      %109 = arith.addf %107, %108 : vector<16x16xf32>
      %cst_49 = arith.constant 0.176776692 : f32
      %110 = vector.broadcast %cst_49 : f32 to vector<16x16xf32>
      %111 = arith.mulf %109, %110 : vector<16x16xf32>
      %cst_50 = arith.constant -1.000000e+30 : f32
      %112 = vector.broadcast %cst_50 : f32 to vector<16x16xf32>
      %113 = arith.select %30, %111, %112 : vector<16x16xi1>, vector<16x16xf32>
      %c1 = arith.constant 1 : index
      %c0_51 = arith.constant 0 : index
      %c0_52 = arith.constant 0 : index
      %114 = vector.load %arg11[%c1, %c0_51, %c0_52] : memref<4x16x1xf32, #tpu.memory_space<vmem>>, vector<1x16x1xf32>
      %115 = vector.shape_cast %114 : vector<1x16x1xf32> to vector<16x1xf32>
      %cst_53 = arith.constant dense<0xFF800000> : vector<16xf32>
      %116 = vector.multi_reduction <maximumf>, %113, %cst_53 [1] : vector<16x16xf32> to vector<16xf32>
      %117 = vector.shape_cast %116 : vector<16xf32> to vector<16x1xf32>
      %118 = arith.maximumf %115, %117 : vector<16x1xf32>
      %119 = arith.subf %115, %118 : vector<16x1xf32>
      %120 = math.exp %119 : vector<16x1xf32>
      %121 = vector.broadcast %118 : vector<16x1xf32> to vector<16x16xf32>
      %122 = arith.subf %113, %121 : vector<16x16xf32>
      %123 = math.exp %122 : vector<16x16xf32>
      %c1_54 = arith.constant 1 : index
      %c0_55 = arith.constant 0 : index
      %c0_56 = arith.constant 0 : index
      %124 = vector.load %arg12[%c1_54, %c0_55, %c0_56] : memref<4x16x1xf32, #tpu.memory_space<vmem>>, vector<1x16x1xf32>
      %125 = vector.shape_cast %124 : vector<1x16x1xf32> to vector<16x1xf32>
      %126 = arith.mulf %120, %125 : vector<16x1xf32>
      %cst_57 = arith.constant dense<0.000000e+00> : vector<16xf32>
      %127 = vector.multi_reduction <add>, %123, %cst_57 [1] : vector<16x16xf32> to vector<16xf32>
      %128 = vector.shape_cast %127 : vector<16xf32> to vector<16x1xf32>
      %129 = arith.addf %126, %128 : vector<16x1xf32>
      %c1_58 = arith.constant 1 : index
      %c0_59 = arith.constant 0 : index
      %c0_60 = arith.constant 0 : index
      %130 = vector.load %arg12[%c1_58, %c0_59, %c0_60] : memref<4x16x1xf32, #tpu.memory_space<vmem>>, vector<1x16x1xf32>
      %131 = vector.shape_cast %130 : vector<1x16x1xf32> to vector<16x1xf32>
      %132 = vector.shape_cast %129 : vector<16x1xf32> to vector<1x16x1xf32>
      tpu.vector_store %arg12[%c1_58, %c0_59, %c0_60], %132 {strides = array<i32>} : memref<4x16x1xf32, #tpu.memory_space<vmem>>, vector<1x16x1xf32>,
      %c1_61 = arith.constant 1 : index
      %c0_62 = arith.constant 0 : index
      %c0_63 = arith.constant 0 : index
      %133 = vector.load %arg13[%c1_61, %c0_62, %c0_63] : memref<4x16x32xf32, #tpu.memory_space<vmem>>, vector<1x16x32xf32>
      %134 = vector.shape_cast %133 : vector<1x16x32xf32> to vector<16x32xf32>
      %135 = vector.broadcast %120 : vector<16x1xf32> to vector<16x32xf32>
      %136 = arith.mulf %135, %134 : vector<16x32xf32>
      %cst_64 = arith.constant dense<0.000000e+00> : vector<16x32xf32>
      %137 = tpu.matmul %123, %90, %cst_64 {dimension_numbers = #tpu.dot_dimension_numbers<[1], [0], [0], [1], [0, 0, 1, 1], [], []>} : vector<16x16xf32>, vector<16x32xf32>, vector<16x32xf32> -> vector<16x32xf32>
      %138 = arith.addf %136, %137 : vector<16x32xf32>
      %c1_65 = arith.constant 1 : index
      %c0_66 = arith.constant 0 : index
      %c0_67 = arith.constant 0 : index
      %139 = vector.load %arg13[%c1_65, %c0_66, %c0_67] : memref<4x16x32xf32, #tpu.memory_space<vmem>>, vector<1x16x32xf32>
      %140 = vector.shape_cast %139 : vector<1x16x32xf32> to vector<16x32xf32>
      %141 = vector.shape_cast %138 : vector<16x32xf32> to vector<1x16x32xf32>
      tpu.vector_store %arg13[%c1_65, %c0_66, %c0_67], %141 {strides = array<i32>} : memref<4x16x32xf32, #tpu.memory_space<vmem>>, vector<1x16x32xf32>,
      %c1_68 = arith.constant 1 : index
      %c0_69 = arith.constant 0 : index
      %c0_70 = arith.constant 0 : index
      %142 = vector.load %arg11[%c1_68, %c0_69, %c0_70] : memref<4x16x1xf32, #tpu.memory_space<vmem>>, vector<1x16x1xf32>
      %143 = vector.shape_cast %142 : vector<1x16x1xf32> to vector<16x1xf32>
      %144 = vector.shape_cast %118 : vector<16x1xf32> to vector<1x16x1xf32>
      tpu.vector_store %arg11[%c1_68, %c0_69, %c0_70], %144 {strides = array<i32>} : memref<4x16x1xf32, #tpu.memory_space<vmem>>, vector<1x16x1xf32>,
      %145 = vector.extract_strided_slice %13 {offsets = [0, 64], sizes = [16, 32], strides = [1, 1]} : vector<16x128xf32> to vector<16x32xf32>
      %146 = vector.extract_strided_slice %15 {offsets = [0, 64], sizes = [16, 32], strides = [1, 1]} : vector<16x128xf32> to vector<16x32xf32>
      %147 = vector.extract_strided_slice %17 {offsets = [0, 64], sizes = [16, 32], strides = [1, 1]} : vector<16x128xf32> to vector<16x32xf32>
      %148 = vector.extract_strided_slice %145 {offsets = [0, 0], sizes = [16, 16], strides = [1, 1]} : vector<16x32xf32> to vector<16x16xf32>
      %149 = vector.extract_strided_slice %145 {offsets = [0, 16], sizes = [16, 16], strides = [1, 1]} : vector<16x32xf32> to vector<16x16xf32>
      %150 = vector.extract_strided_slice %146 {offsets = [0, 0], sizes = [16, 16], strides = [1, 1]} : vector<16x32xf32> to vector<16x16xf32>
      %151 = vector.extract_strided_slice %146 {offsets = [0, 16], sizes = [16, 16], strides = [1, 1]} : vector<16x32xf32> to vector<16x16xf32>
      %152 = arith.mulf %148, %18 : vector<16x16xf32>
      %153 = arith.mulf %149, %19 : vector<16x16xf32>
      %154 = arith.subf %152, %153 : vector<16x16xf32>
      %155 = arith.mulf %148, %19 : vector<16x16xf32>
      %156 = arith.mulf %149, %18 : vector<16x16xf32>
      %157 = arith.addf %155, %156 : vector<16x16xf32>
      %158 = arith.mulf %150, %20 : vector<16x16xf32>
      %159 = arith.mulf %151, %21 : vector<16x16xf32>
      %160 = arith.subf %158, %159 : vector<16x16xf32>
      %161 = arith.mulf %150, %21 : vector<16x16xf32>
      %162 = arith.mulf %151, %20 : vector<16x16xf32>
      %163 = arith.addf %161, %162 : vector<16x16xf32>
      %cst_71 = arith.constant dense<0.000000e+00> : vector<16x16xf32>
      %164 = tpu.matmul %154, %160, %cst_71 {dimension_numbers = #tpu.dot_dimension_numbers<[1], [1], [0], [0], [0, 0, 1, 0], [], []>} : vector<16x16xf32>, vector<16x16xf32>, vector<16x16xf32> -> vector<16x16xf32>
      %cst_72 = arith.constant dense<0.000000e+00> : vector<16x16xf32>
      %165 = tpu.matmul %157, %163, %cst_72 {dimension_numbers = #tpu.dot_dimension_numbers<[1], [1], [0], [0], [0, 0, 1, 0], [], []>} : vector<16x16xf32>, vector<16x16xf32>, vector<16x16xf32> -> vector<16x16xf32>
      %166 = arith.addf %164, %165 : vector<16x16xf32>
      %cst_73 = arith.constant 0.176776692 : f32
      %167 = vector.broadcast %cst_73 : f32 to vector<16x16xf32>
      %168 = arith.mulf %166, %167 : vector<16x16xf32>
      %cst_74 = arith.constant -1.000000e+30 : f32
      %169 = vector.broadcast %cst_74 : f32 to vector<16x16xf32>
      %170 = arith.select %30, %168, %169 : vector<16x16xi1>, vector<16x16xf32>
      %c2 = arith.constant 2 : index
      %c0_75 = arith.constant 0 : index
      %c0_76 = arith.constant 0 : index
      %171 = vector.load %arg11[%c2, %c0_75, %c0_76] : memref<4x16x1xf32, #tpu.memory_space<vmem>>, vector<1x16x1xf32>
      %172 = vector.shape_cast %171 : vector<1x16x1xf32> to vector<16x1xf32>
      %cst_77 = arith.constant dense<0xFF800000> : vector<16xf32>
      %173 = vector.multi_reduction <maximumf>, %170, %cst_77 [1] : vector<16x16xf32> to vector<16xf32>
      %174 = vector.shape_cast %173 : vector<16xf32> to vector<16x1xf32>
      %175 = arith.maximumf %172, %174 : vector<16x1xf32>
      %176 = arith.subf %172, %175 : vector<16x1xf32>
      %177 = math.exp %176 : vector<16x1xf32>
      %178 = vector.broadcast %175 : vector<16x1xf32> to vector<16x16xf32>
      %179 = arith.subf %170, %178 : vector<16x16xf32>
      %180 = math.exp %179 : vector<16x16xf32>
      %c2_78 = arith.constant 2 : index
      %c0_79 = arith.constant 0 : index
      %c0_80 = arith.constant 0 : index
      %181 = vector.load %arg12[%c2_78, %c0_79, %c0_80] : memref<4x16x1xf32, #tpu.memory_space<vmem>>, vector<1x16x1xf32>
      %182 = vector.shape_cast %181 : vector<1x16x1xf32> to vector<16x1xf32>
      %183 = arith.mulf %177, %182 : vector<16x1xf32>
      %cst_81 = arith.constant dense<0.000000e+00> : vector<16xf32>
      %184 = vector.multi_reduction <add>, %180, %cst_81 [1] : vector<16x16xf32> to vector<16xf32>
      %185 = vector.shape_cast %184 : vector<16xf32> to vector<16x1xf32>
      %186 = arith.addf %183, %185 : vector<16x1xf32>
      %c2_82 = arith.constant 2 : index
      %c0_83 = arith.constant 0 : index
      %c0_84 = arith.constant 0 : index
      %187 = vector.load %arg12[%c2_82, %c0_83, %c0_84] : memref<4x16x1xf32, #tpu.memory_space<vmem>>, vector<1x16x1xf32>
      %188 = vector.shape_cast %187 : vector<1x16x1xf32> to vector<16x1xf32>
      %189 = vector.shape_cast %186 : vector<16x1xf32> to vector<1x16x1xf32>
      tpu.vector_store %arg12[%c2_82, %c0_83, %c0_84], %189 {strides = array<i32>} : memref<4x16x1xf32, #tpu.memory_space<vmem>>, vector<1x16x1xf32>,
      %c2_85 = arith.constant 2 : index
      %c0_86 = arith.constant 0 : index
      %c0_87 = arith.constant 0 : index
      %190 = vector.load %arg13[%c2_85, %c0_86, %c0_87] : memref<4x16x32xf32, #tpu.memory_space<vmem>>, vector<1x16x32xf32>
      %191 = vector.shape_cast %190 : vector<1x16x32xf32> to vector<16x32xf32>
      %192 = vector.broadcast %177 : vector<16x1xf32> to vector<16x32xf32>
      %193 = arith.mulf %192, %191 : vector<16x32xf32>
      %cst_88 = arith.constant dense<0.000000e+00> : vector<16x32xf32>
      %194 = tpu.matmul %180, %147, %cst_88 {dimension_numbers = #tpu.dot_dimension_numbers<[1], [0], [0], [1], [0, 0, 1, 1], [], []>} : vector<16x16xf32>, vector<16x32xf32>, vector<16x32xf32> -> vector<16x32xf32>
      %195 = arith.addf %193, %194 : vector<16x32xf32>
      %c2_89 = arith.constant 2 : index
      %c0_90 = arith.constant 0 : index
      %c0_91 = arith.constant 0 : index
      %196 = vector.load %arg13[%c2_89, %c0_90, %c0_91] : memref<4x16x32xf32, #tpu.memory_space<vmem>>, vector<1x16x32xf32>
      %197 = vector.shape_cast %196 : vector<1x16x32xf32> to vector<16x32xf32>
      %198 = vector.shape_cast %195 : vector<16x32xf32> to vector<1x16x32xf32>
      tpu.vector_store %arg13[%c2_89, %c0_90, %c0_91], %198 {strides = array<i32>} : memref<4x16x32xf32, #tpu.memory_space<vmem>>, vector<1x16x32xf32>,
      %c2_92 = arith.constant 2 : index
      %c0_93 = arith.constant 0 : index
      %c0_94 = arith.constant 0 : index
      %199 = vector.load %arg11[%c2_92, %c0_93, %c0_94] : memref<4x16x1xf32, #tpu.memory_space<vmem>>, vector<1x16x1xf32>
      %200 = vector.shape_cast %199 : vector<1x16x1xf32> to vector<16x1xf32>
      %201 = vector.shape_cast %175 : vector<16x1xf32> to vector<1x16x1xf32>
      tpu.vector_store %arg11[%c2_92, %c0_93, %c0_94], %201 {strides = array<i32>} : memref<4x16x1xf32, #tpu.memory_space<vmem>>, vector<1x16x1xf32>,
      %202 = vector.extract_strided_slice %13 {offsets = [0, 96], sizes = [16, 32], strides = [1, 1]} : vector<16x128xf32> to vector<16x32xf32>
      %203 = vector.extract_strided_slice %15 {offsets = [0, 96], sizes = [16, 32], strides = [1, 1]} : vector<16x128xf32> to vector<16x32xf32>
      %204 = vector.extract_strided_slice %17 {offsets = [0, 96], sizes = [16, 32], strides = [1, 1]} : vector<16x128xf32> to vector<16x32xf32>
      %205 = vector.extract_strided_slice %202 {offsets = [0, 0], sizes = [16, 16], strides = [1, 1]} : vector<16x32xf32> to vector<16x16xf32>
      %206 = vector.extract_strided_slice %202 {offsets = [0, 16], sizes = [16, 16], strides = [1, 1]} : vector<16x32xf32> to vector<16x16xf32>
      %207 = vector.extract_strided_slice %203 {offsets = [0, 0], sizes = [16, 16], strides = [1, 1]} : vector<16x32xf32> to vector<16x16xf32>
      %208 = vector.extract_strided_slice %203 {offsets = [0, 16], sizes = [16, 16], strides = [1, 1]} : vector<16x32xf32> to vector<16x16xf32>
      %209 = arith.mulf %205, %18 : vector<16x16xf32>
      %210 = arith.mulf %206, %19 : vector<16x16xf32>
      %211 = arith.subf %209, %210 : vector<16x16xf32>
      %212 = arith.mulf %205, %19 : vector<16x16xf32>
      %213 = arith.mulf %206, %18 : vector<16x16xf32>
      %214 = arith.addf %212, %213 : vector<16x16xf32>
      %215 = arith.mulf %207, %20 : vector<16x16xf32>
      %216 = arith.mulf %208, %21 : vector<16x16xf32>
      %217 = arith.subf %215, %216 : vector<16x16xf32>
      %218 = arith.mulf %207, %21 : vector<16x16xf32>
      %219 = arith.mulf %208, %20 : vector<16x16xf32>
      %220 = arith.addf %218, %219 : vector<16x16xf32>
      %cst_95 = arith.constant dense<0.000000e+00> : vector<16x16xf32>
      %221 = tpu.matmul %211, %217, %cst_95 {dimension_numbers = #tpu.dot_dimension_numbers<[1], [1], [0], [0], [0, 0, 1, 0], [], []>} : vector<16x16xf32>, vector<16x16xf32>, vector<16x16xf32> -> vector<16x16xf32>
      %cst_96 = arith.constant dense<0.000000e+00> : vector<16x16xf32>
      %222 = tpu.matmul %214, %220, %cst_96 {dimension_numbers = #tpu.dot_dimension_numbers<[1], [1], [0], [0], [0, 0, 1, 0], [], []>} : vector<16x16xf32>, vector<16x16xf32>, vector<16x16xf32> -> vector<16x16xf32>
      %223 = arith.addf %221, %222 : vector<16x16xf32>
      %cst_97 = arith.constant 0.176776692 : f32
      %224 = vector.broadcast %cst_97 : f32 to vector<16x16xf32>
      %225 = arith.mulf %223, %224 : vector<16x16xf32>
      %cst_98 = arith.constant -1.000000e+30 : f32
      %226 = vector.broadcast %cst_98 : f32 to vector<16x16xf32>
      %227 = arith.select %30, %225, %226 : vector<16x16xi1>, vector<16x16xf32>
      %c3 = arith.constant 3 : index
      %c0_99 = arith.constant 0 : index
      %c0_100 = arith.constant 0 : index
      %228 = vector.load %arg11[%c3, %c0_99, %c0_100] : memref<4x16x1xf32, #tpu.memory_space<vmem>>, vector<1x16x1xf32>
      %229 = vector.shape_cast %228 : vector<1x16x1xf32> to vector<16x1xf32>
      %cst_101 = arith.constant dense<0xFF800000> : vector<16xf32>
      %230 = vector.multi_reduction <maximumf>, %227, %cst_101 [1] : vector<16x16xf32> to vector<16xf32>
      %231 = vector.shape_cast %230 : vector<16xf32> to vector<16x1xf32>
      %232 = arith.maximumf %229, %231 : vector<16x1xf32>
      %233 = arith.subf %229, %232 : vector<16x1xf32>
      %234 = math.exp %233 : vector<16x1xf32>
      %235 = vector.broadcast %232 : vector<16x1xf32> to vector<16x16xf32>
      %236 = arith.subf %227, %235 : vector<16x16xf32>
      %237 = math.exp %236 : vector<16x16xf32>
      %c3_102 = arith.constant 3 : index
      %c0_103 = arith.constant 0 : index
      %c0_104 = arith.constant 0 : index
      %238 = vector.load %arg12[%c3_102, %c0_103, %c0_104] : memref<4x16x1xf32, #tpu.memory_space<vmem>>, vector<1x16x1xf32>
      %239 = vector.shape_cast %238 : vector<1x16x1xf32> to vector<16x1xf32>
      %240 = arith.mulf %234, %239 : vector<16x1xf32>
      %cst_105 = arith.constant dense<0.000000e+00> : vector<16xf32>
      %241 = vector.multi_reduction <add>, %237, %cst_105 [1] : vector<16x16xf32> to vector<16xf32>
      %242 = vector.shape_cast %241 : vector<16xf32> to vector<16x1xf32>
      %243 = arith.addf %240, %242 : vector<16x1xf32>
      %c3_106 = arith.constant 3 : index
      %c0_107 = arith.constant 0 : index
      %c0_108 = arith.constant 0 : index
      %244 = vector.load %arg12[%c3_106, %c0_107, %c0_108] : memref<4x16x1xf32, #tpu.memory_space<vmem>>, vector<1x16x1xf32>
      %245 = vector.shape_cast %244 : vector<1x16x1xf32> to vector<16x1xf32>
      %246 = vector.shape_cast %243 : vector<16x1xf32> to vector<1x16x1xf32>
      tpu.vector_store %arg12[%c3_106, %c0_107, %c0_108], %246 {strides = array<i32>} : memref<4x16x1xf32, #tpu.memory_space<vmem>>, vector<1x16x1xf32>,
      %c3_109 = arith.constant 3 : index
      %c0_110 = arith.constant 0 : index
      %c0_111 = arith.constant 0 : index
      %247 = vector.load %arg13[%c3_109, %c0_110, %c0_111] : memref<4x16x32xf32, #tpu.memory_space<vmem>>, vector<1x16x32xf32>
      %248 = vector.shape_cast %247 : vector<1x16x32xf32> to vector<16x32xf32>
      %249 = vector.broadcast %234 : vector<16x1xf32> to vector<16x32xf32>
      %250 = arith.mulf %249, %248 : vector<16x32xf32>
      %cst_112 = arith.constant dense<0.000000e+00> : vector<16x32xf32>
      %251 = tpu.matmul %237, %204, %cst_112 {dimension_numbers = #tpu.dot_dimension_numbers<[1], [0], [0], [1], [0, 0, 1, 1], [], []>} : vector<16x16xf32>, vector<16x32xf32>, vector<16x32xf32> -> vector<16x32xf32>
      %252 = arith.addf %250, %251 : vector<16x32xf32>
      %c3_113 = arith.constant 3 : index
      %c0_114 = arith.constant 0 : index
      %c0_115 = arith.constant 0 : index
      %253 = vector.load %arg13[%c3_113, %c0_114, %c0_115] : memref<4x16x32xf32, #tpu.memory_space<vmem>>, vector<1x16x32xf32>
      %254 = vector.shape_cast %253 : vector<1x16x32xf32> to vector<16x32xf32>
      %255 = vector.shape_cast %252 : vector<16x32xf32> to vector<1x16x32xf32>
      tpu.vector_store %arg13[%c3_113, %c0_114, %c0_115], %255 {strides = array<i32>} : memref<4x16x32xf32, #tpu.memory_space<vmem>>, vector<1x16x32xf32>,
      %c3_116 = arith.constant 3 : index
      %c0_117 = arith.constant 0 : index
      %c0_118 = arith.constant 0 : index
      %256 = vector.load %arg11[%c3_116, %c0_117, %c0_118] : memref<4x16x1xf32, #tpu.memory_space<vmem>>, vector<1x16x1xf32>
      %257 = vector.shape_cast %256 : vector<1x16x1xf32> to vector<16x1xf32>
      %258 = vector.shape_cast %232 : vector<16x1xf32> to vector<1x16x1xf32>
      tpu.vector_store %arg11[%c3_116, %c0_117, %c0_118], %258 {strides = array<i32>} : memref<4x16x1xf32, #tpu.memory_space<vmem>>, vector<1x16x1xf32>,
    } else {
    }
    %c0_i32_3 = arith.constant 0 : i32
    %9 = arith.cmpi eq, %arg2, %c0_i32_3 : i32
    %10 = arith.extui %9 : i1 to i32
    %c0_i32_4 = arith.constant 0 : i32
    %11 = arith.cmpi ne, %10, %c0_i32_4 : i32
    scf.if %11 {
      %c0 = arith.constant 0 : index
      %c0_5 = arith.constant 0 : index
      %c0_6 = arith.constant 0 : index
      %12 = vector.load %arg13[%c0, %c0_5, %c0_6] : memref<4x16x32xf32, #tpu.memory_space<vmem>>, vector<1x16x32xf32>
      %13 = vector.shape_cast %12 : vector<1x16x32xf32> to vector<16x32xf32>
      %c0_7 = arith.constant 0 : index
      %c0_8 = arith.constant 0 : index
      %c0_9 = arith.constant 0 : index
      %14 = vector.load %arg12[%c0_7, %c0_8, %c0_9] : memref<4x16x1xf32, #tpu.memory_space<vmem>>, vector<1x16x1xf32>
      %15 = vector.shape_cast %14 : vector<1x16x1xf32> to vector<16x1xf32>
      %16 = tpu.reciprocal %15 {approx = true} : vector<16x1xf32> -> vector<16x1xf32>
      %17 = vector.broadcast %16 : vector<16x1xf32> to vector<16x32xf32>
      %18 = arith.mulf %13, %17 : vector<16x32xf32>
      %c0_10 = arith.constant 0 : index
      %c0_11 = arith.constant 0 : index
      %c0_12 = arith.constant 0 : index
      %19 = vector.load %arg10[%c0_10, %c0_11, %c0_12] : memref<1x16x128xf32, #tpu.memory_space<vmem>>, vector<1x16x32xf32>
      %20 = vector.shape_cast %19 : vector<1x16x32xf32> to vector<16x32xf32>
      %21 = vector.shape_cast %18 : vector<16x32xf32> to vector<1x16x32xf32>
      tpu.vector_store %arg10[%c0_10, %c0_11, %c0_12], %21 {strides = array<i32>} : memref<1x16x128xf32, #tpu.memory_space<vmem>>, vector<1x16x32xf32>,
      %c1 = arith.constant 1 : index
      %c0_13 = arith.constant 0 : index
      %c0_14 = arith.constant 0 : index
      %22 = vector.load %arg13[%c1, %c0_13, %c0_14] : memref<4x16x32xf32, #tpu.memory_space<vmem>>, vector<1x16x32xf32>
      %23 = vector.shape_cast %22 : vector<1x16x32xf32> to vector<16x32xf32>
      %c1_15 = arith.constant 1 : index
      %c0_16 = arith.constant 0 : index
      %c0_17 = arith.constant 0 : index
      %24 = vector.load %arg12[%c1_15, %c0_16, %c0_17] : memref<4x16x1xf32, #tpu.memory_space<vmem>>, vector<1x16x1xf32>
      %25 = vector.shape_cast %24 : vector<1x16x1xf32> to vector<16x1xf32>
      %26 = tpu.reciprocal %25 {approx = true} : vector<16x1xf32> -> vector<16x1xf32>
      %27 = vector.broadcast %26 : vector<16x1xf32> to vector<16x32xf32>
      %28 = arith.mulf %23, %27 : vector<16x32xf32>
      %c0_18 = arith.constant 0 : index
      %c0_19 = arith.constant 0 : index
      %c32 = arith.constant 32 : index
      %29 = vector.load %arg10[%c0_18, %c0_19, %c32] : memref<1x16x128xf32, #tpu.memory_space<vmem>>, vector<1x16x32xf32>
      %30 = vector.shape_cast %29 : vector<1x16x32xf32> to vector<16x32xf32>
      %31 = vector.shape_cast %28 : vector<16x32xf32> to vector<1x16x32xf32>
      tpu.vector_store %arg10[%c0_18, %c0_19, %c32], %31 {strides = array<i32>} : memref<1x16x128xf32, #tpu.memory_space<vmem>>, vector<1x16x32xf32>,
      %c2 = arith.constant 2 : index
      %c0_20 = arith.constant 0 : index
      %c0_21 = arith.constant 0 : index
      %32 = vector.load %arg13[%c2, %c0_20, %c0_21] : memref<4x16x32xf32, #tpu.memory_space<vmem>>, vector<1x16x32xf32>
      %33 = vector.shape_cast %32 : vector<1x16x32xf32> to vector<16x32xf32>
      %c2_22 = arith.constant 2 : index
      %c0_23 = arith.constant 0 : index
      %c0_24 = arith.constant 0 : index
      %34 = vector.load %arg12[%c2_22, %c0_23, %c0_24] : memref<4x16x1xf32, #tpu.memory_space<vmem>>, vector<1x16x1xf32>
      %35 = vector.shape_cast %34 : vector<1x16x1xf32> to vector<16x1xf32>
      %36 = tpu.reciprocal %35 {approx = true} : vector<16x1xf32> -> vector<16x1xf32>
      %37 = vector.broadcast %36 : vector<16x1xf32> to vector<16x32xf32>
      %38 = arith.mulf %33, %37 : vector<16x32xf32>
      %c0_25 = arith.constant 0 : index
      %c0_26 = arith.constant 0 : index
      %c64 = arith.constant 64 : index
      %39 = vector.load %arg10[%c0_25, %c0_26, %c64] : memref<1x16x128xf32, #tpu.memory_space<vmem>>, vector<1x16x32xf32>
      %40 = vector.shape_cast %39 : vector<1x16x32xf32> to vector<16x32xf32>
      %41 = vector.shape_cast %38 : vector<16x32xf32> to vector<1x16x32xf32>
      tpu.vector_store %arg10[%c0_25, %c0_26, %c64], %41 {strides = array<i32>} : memref<1x16x128xf32, #tpu.memory_space<vmem>>, vector<1x16x32xf32>,
      %c3 = arith.constant 3 : index
      %c0_27 = arith.constant 0 : index
      %c0_28 = arith.constant 0 : index
      %42 = vector.load %arg13[%c3, %c0_27, %c0_28] : memref<4x16x32xf32, #tpu.memory_space<vmem>>, vector<1x16x32xf32>
      %43 = vector.shape_cast %42 : vector<1x16x32xf32> to vector<16x32xf32>
      %c3_29 = arith.constant 3 : index
      %c0_30 = arith.constant 0 : index
      %c0_31 = arith.constant 0 : index
      %44 = vector.load %arg12[%c3_29, %c0_30, %c0_31] : memref<4x16x1xf32, #tpu.memory_space<vmem>>, vector<1x16x1xf32>
      %45 = vector.shape_cast %44 : vector<1x16x1xf32> to vector<16x1xf32>
      %46 = tpu.reciprocal %45 {approx = true} : vector<16x1xf32> -> vector<16x1xf32>
      %47 = vector.broadcast %46 : vector<16x1xf32> to vector<16x32xf32>
      %48 = arith.mulf %43, %47 : vector<16x32xf32>
      %c0_32 = arith.constant 0 : index
      %c0_33 = arith.constant 0 : index
      %c96 = arith.constant 96 : index
      %49 = vector.load %arg10[%c0_32, %c0_33, %c96] : memref<1x16x128xf32, #tpu.memory_space<vmem>>, vector<1x16x32xf32>
      %50 = vector.shape_cast %49 : vector<1x16x32xf32> to vector<16x32xf32>
      %51 = vector.shape_cast %48 : vector<16x32xf32> to vector<1x16x32xf32>
      tpu.vector_store %arg10[%c0_32, %c0_33, %c96], %51 {strides = array<i32>} : memref<1x16x128xf32, #tpu.memory_space<vmem>>, vector<1x16x32xf32>,
    } else {
    }
    return
  }
  func.func @transform_0(%arg0: i32, %arg1: i32, %arg2: i32) -> (i32, i32, i32) {
    %c0_i32 = arith.constant 0 : i32
    %c0_i32_0 = arith.constant 0 : i32
    return %arg0, %arg1, %c0_i32 : i32, i32, i32
  }
  func.func @transform_1(%arg0: i32, %arg1: i32, %arg2: i32) -> (i32, i32, i32) {
    %c1_i32 = arith.constant 1 : i32
    %c0_i32 = arith.constant 0 : i32
    return %arg0, %arg2, %c1_i32 : i32, i32, i32
  }
  func.func @transform_2(%arg0: i32, %arg1: i32, %arg2: i32) -> (i32, i32, i32) {
    %c2_i32 = arith.constant 2 : i32
    %c0_i32 = arith.constant 0 : i32
    return %arg0, %arg2, %c2_i32 : i32, i32, i32
  }
  func.func @transform_3(%arg0: i32, %arg1: i32, %arg2: i32) -> (i32, i32) {
    %c0_i32 = arith.constant 0 : i32
    %c0_i32_0 = arith.constant 0 : i32
    return %arg1, %c0_i32 : i32, i32
  }
  func.func @transform_4(%arg0: i32, %arg1: i32, %arg2: i32) -> (i32, i32) {
    %c0_i32 = arith.constant 0 : i32
    %c0_i32_0 = arith.constant 0 : i32
    return %arg1, %c0_i32 : i32, i32
  }
  func.func @transform_5(%arg0: i32, %arg1: i32, %arg2: i32) -> (i32, i32) {
    %c0_i32 = arith.constant 0 : i32
    %c0_i32_0 = arith.constant 0 : i32
    return %arg2, %c0_i32 : i32, i32
  }
  func.func @transform_6(%arg0: i32, %arg1: i32, %arg2: i32) -> (i32, i32) {
    %c0_i32 = arith.constant 0 : i32
    %c0_i32_0 = arith.constant 0 : i32
    return %arg2, %c0_i32 : i32, i32
  }
  func.func @transform_7(%arg0: i32, %arg1: i32, %arg2: i32) -> (i32, i32, i32) {
    %c0_i32 = arith.constant 0 : i32
    %c0_i32_0 = arith.constant 0 : i32
    return %arg0, %arg1, %c0_i32 : i32, i32, i32
  }
}

module attributes {stable_mosaic.version = 11 : i64} {
  func.func @_bitlinear_mm_kernel(%arg0: i32, %arg1: i32, %arg2: i32, %arg3: memref<32x128xbf16, #tpu.memory_space<vmem>>, %arg4: memref<128x128xbf16, #tpu.memory_space<vmem>>, %arg5: memref<32x1xf32, #tpu.memory_space<vmem>>, %arg6: memref<1x128xf32, #tpu.memory_space<vmem>>, %arg7: memref<32x128xf32, #tpu.memory_space<vmem>>, %arg8: memref<32x128xf32, #tpu.memory_space<vmem>>) attributes {dimension_semantics = [#tpu.dimension_semantics<parallel>, #tpu.dimension_semantics<parallel>, #tpu.dimension_semantics<arbitrary>], iteration_bounds = array<i64: 1, 1, 1>, scalar_prefetch = 0 : i64, scratch_operands = 1 : i64, tpu.core_type = #tpu.core_type<tc>, window_params = [{transform_indices = @transform_0, window_bounds = array<i64: 32, 128>}, {transform_indices = @transform_1, window_bounds = array<i64: 128, 128>}, {transform_indices = @transform_2, window_bounds = array<i64: 32, 1>}, {transform_indices = @transform_3, window_bounds = array<i64: 1, 128>}, {transform_indices = @transform_4, window_bounds = array<i64: 32, 128>}]} {
    %c0_i32 = arith.constant 0 : i32
    %0 = arith.cmpi eq, %arg2, %c0_i32 : i32
    %1 = arith.extui %0 : i1 to i32
    %c0_i32_0 = arith.constant 0 : i32
    %2 = arith.cmpi ne, %1, %c0_i32_0 : i32
    scf.if %2 {
      %cst_10 = arith.constant 0.000000e+00 : f32
      %12 = vector.broadcast %cst_10 : f32 to vector<32x128xf32>
      %c0_11 = arith.constant 0 : index
      %c0_12 = arith.constant 0 : index
      %13 = vector.load %arg8[%c0_11, %c0_12] : memref<32x128xf32, #tpu.memory_space<vmem>>, vector<32x128xf32>
      tpu.vector_store %arg8[%c0_11, %c0_12], %12 {strides = array<i32>} : memref<32x128xf32, #tpu.memory_space<vmem>>, vector<32x128xf32>,
    } else {
    }
    %c0 = arith.constant 0 : index
    %c0_1 = arith.constant 0 : index
    %3 = vector.load %arg8[%c0, %c0_1] : memref<32x128xf32, #tpu.memory_space<vmem>>, vector<32x128xf32>
    %c0_2 = arith.constant 0 : index
    %c0_3 = arith.constant 0 : index
    %4 = vector.load %arg3[%c0_2, %c0_3] : memref<32x128xbf16, #tpu.memory_space<vmem>>, vector<32x128xbf16>
    %c0_4 = arith.constant 0 : index
    %c0_5 = arith.constant 0 : index
    %5 = vector.load %arg4[%c0_4, %c0_5] : memref<128x128xbf16, #tpu.memory_space<vmem>>, vector<128x128xbf16>
    %cst = arith.constant dense<0.000000e+00> : vector<32x128xf32>
    %6 = tpu.matmul %4, %5, %cst {dimension_numbers = #tpu.dot_dimension_numbers<[1], [0], [0], [1], [0, 0, 1, 1], [], []>} : vector<32x128xbf16>, vector<128x128xbf16>, vector<32x128xf32> -> vector<32x128xf32>
    %7 = arith.addf %3, %6 : vector<32x128xf32>
    %c0_6 = arith.constant 0 : index
    %c0_7 = arith.constant 0 : index
    %8 = vector.load %arg8[%c0_6, %c0_7] : memref<32x128xf32, #tpu.memory_space<vmem>>, vector<32x128xf32>
    tpu.vector_store %arg8[%c0_6, %c0_7], %7 {strides = array<i32>} : memref<32x128xf32, #tpu.memory_space<vmem>>, vector<32x128xf32>,
    %c0_i32_8 = arith.constant 0 : i32
    %9 = arith.cmpi eq, %arg2, %c0_i32_8 : i32
    %10 = arith.extui %9 : i1 to i32
    %c0_i32_9 = arith.constant 0 : i32
    %11 = arith.cmpi ne, %10, %c0_i32_9 : i32
    scf.if %11 {
      %c0_10 = arith.constant 0 : index
      %c0_11 = arith.constant 0 : index
      %12 = vector.load %arg8[%c0_10, %c0_11] : memref<32x128xf32, #tpu.memory_space<vmem>>, vector<32x128xf32>
      %c0_12 = arith.constant 0 : index
      %c0_13 = arith.constant 0 : index
      %13 = vector.load %arg5[%c0_12, %c0_13] : memref<32x1xf32, #tpu.memory_space<vmem>>, vector<32x1xf32>
      %14 = vector.broadcast %13 : vector<32x1xf32> to vector<32x128xf32>
      %15 = arith.mulf %12, %14 : vector<32x128xf32>
      %c0_14 = arith.constant 0 : index
      %c0_15 = arith.constant 0 : index
      %16 = vector.load %arg6[%c0_14, %c0_15] : memref<1x128xf32, #tpu.memory_space<vmem>>, vector<1x128xf32>
      %17 = vector.broadcast %16 : vector<1x128xf32> to vector<32x128xf32>
      %18 = arith.mulf %15, %17 : vector<32x128xf32>
      %c0_16 = arith.constant 0 : index
      %c0_17 = arith.constant 0 : index
      %19 = vector.load %arg7[%c0_16, %c0_17] : memref<32x128xf32, #tpu.memory_space<vmem>>, vector<32x128xf32>
      tpu.vector_store %arg7[%c0_16, %c0_17], %18 {strides = array<i32>} : memref<32x128xf32, #tpu.memory_space<vmem>>, vector<32x128xf32>,
    } else {
    }
    return
  }
  func.func @transform_0(%arg0: i32, %arg1: i32, %arg2: i32) -> (i32, i32) {
    %c0_i32 = arith.constant 0 : i32
    return %arg0, %arg2 : i32, i32
  }
  func.func @transform_1(%arg0: i32, %arg1: i32, %arg2: i32) -> (i32, i32) {
    %c0_i32 = arith.constant 0 : i32
    return %arg2, %arg1 : i32, i32
  }
  func.func @transform_2(%arg0: i32, %arg1: i32, %arg2: i32) -> (i32, i32) {
    %c0_i32 = arith.constant 0 : i32
    %c0_i32_0 = arith.constant 0 : i32
    return %arg0, %c0_i32 : i32, i32
  }
  func.func @transform_3(%arg0: i32, %arg1: i32, %arg2: i32) -> (i32, i32) {
    %c0_i32 = arith.constant 0 : i32
    %c0_i32_0 = arith.constant 0 : i32
    return %c0_i32, %arg1 : i32, i32
  }
  func.func @transform_4(%arg0: i32, %arg1: i32, %arg2: i32) -> (i32, i32) {
    %c0_i32 = arith.constant 0 : i32
    return %arg0, %arg1 : i32, i32
  }
}

module attributes {stable_mosaic.version = 11 : i64} {
  func.func @_bitlinear_mm_kernel(%arg0: i32, %arg1: i32, %arg2: i32, %arg3: memref<32x128xbf16, #tpu.memory_space<vmem>>, %arg4: memref<128x512xbf16, #tpu.memory_space<vmem>>, %arg5: memref<32x1xf32, #tpu.memory_space<vmem>>, %arg6: memref<1x512xf32, #tpu.memory_space<vmem>>, %arg7: memref<32x512xf32, #tpu.memory_space<vmem>>, %arg8: memref<32x512xf32, #tpu.memory_space<vmem>>) attributes {dimension_semantics = [#tpu.dimension_semantics<parallel>, #tpu.dimension_semantics<parallel>, #tpu.dimension_semantics<arbitrary>], iteration_bounds = array<i64: 1, 2, 1>, scalar_prefetch = 0 : i64, scratch_operands = 1 : i64, tpu.core_type = #tpu.core_type<tc>, window_params = [{transform_indices = @transform_0, window_bounds = array<i64: 32, 128>}, {transform_indices = @transform_1, window_bounds = array<i64: 128, 512>}, {transform_indices = @transform_2, window_bounds = array<i64: 32, 1>}, {transform_indices = @transform_3, window_bounds = array<i64: 1, 512>}, {transform_indices = @transform_4, window_bounds = array<i64: 32, 512>}]} {
    %c0_i32 = arith.constant 0 : i32
    %0 = arith.cmpi eq, %arg2, %c0_i32 : i32
    %1 = arith.extui %0 : i1 to i32
    %c0_i32_0 = arith.constant 0 : i32
    %2 = arith.cmpi ne, %1, %c0_i32_0 : i32
    scf.if %2 {
      %cst_10 = arith.constant 0.000000e+00 : f32
      %12 = vector.broadcast %cst_10 : f32 to vector<32x512xf32>
      %c0_11 = arith.constant 0 : index
      %c0_12 = arith.constant 0 : index
      %13 = vector.load %arg8[%c0_11, %c0_12] : memref<32x512xf32, #tpu.memory_space<vmem>>, vector<32x512xf32>
      tpu.vector_store %arg8[%c0_11, %c0_12], %12 {strides = array<i32>} : memref<32x512xf32, #tpu.memory_space<vmem>>, vector<32x512xf32>,
    } else {
    }
    %c0 = arith.constant 0 : index
    %c0_1 = arith.constant 0 : index
    %3 = vector.load %arg8[%c0, %c0_1] : memref<32x512xf32, #tpu.memory_space<vmem>>, vector<32x512xf32>
    %c0_2 = arith.constant 0 : index
    %c0_3 = arith.constant 0 : index
    %4 = vector.load %arg3[%c0_2, %c0_3] : memref<32x128xbf16, #tpu.memory_space<vmem>>, vector<32x128xbf16>
    %c0_4 = arith.constant 0 : index
    %c0_5 = arith.constant 0 : index
    %5 = vector.load %arg4[%c0_4, %c0_5] : memref<128x512xbf16, #tpu.memory_space<vmem>>, vector<128x512xbf16>
    %cst = arith.constant dense<0.000000e+00> : vector<32x512xf32>
    %6 = tpu.matmul %4, %5, %cst {dimension_numbers = #tpu.dot_dimension_numbers<[1], [0], [0], [1], [0, 0, 1, 1], [], []>} : vector<32x128xbf16>, vector<128x512xbf16>, vector<32x512xf32> -> vector<32x512xf32>
    %7 = arith.addf %3, %6 : vector<32x512xf32>
    %c0_6 = arith.constant 0 : index
    %c0_7 = arith.constant 0 : index
    %8 = vector.load %arg8[%c0_6, %c0_7] : memref<32x512xf32, #tpu.memory_space<vmem>>, vector<32x512xf32>
    tpu.vector_store %arg8[%c0_6, %c0_7], %7 {strides = array<i32>} : memref<32x512xf32, #tpu.memory_space<vmem>>, vector<32x512xf32>,
    %c0_i32_8 = arith.constant 0 : i32
    %9 = arith.cmpi eq, %arg2, %c0_i32_8 : i32
    %10 = arith.extui %9 : i1 to i32
    %c0_i32_9 = arith.constant 0 : i32
    %11 = arith.cmpi ne, %10, %c0_i32_9 : i32
    scf.if %11 {
      %c0_10 = arith.constant 0 : index
      %c0_11 = arith.constant 0 : index
      %12 = vector.load %arg8[%c0_10, %c0_11] : memref<32x512xf32, #tpu.memory_space<vmem>>, vector<32x512xf32>
      %c0_12 = arith.constant 0 : index
      %c0_13 = arith.constant 0 : index
      %13 = vector.load %arg5[%c0_12, %c0_13] : memref<32x1xf32, #tpu.memory_space<vmem>>, vector<32x1xf32>
      %14 = vector.broadcast %13 : vector<32x1xf32> to vector<32x512xf32>
      %15 = arith.mulf %12, %14 : vector<32x512xf32>
      %c0_14 = arith.constant 0 : index
      %c0_15 = arith.constant 0 : index
      %16 = vector.load %arg6[%c0_14, %c0_15] : memref<1x512xf32, #tpu.memory_space<vmem>>, vector<1x512xf32>
      %17 = vector.broadcast %16 : vector<1x512xf32> to vector<32x512xf32>
      %18 = arith.mulf %15, %17 : vector<32x512xf32>
      %c0_16 = arith.constant 0 : index
      %c0_17 = arith.constant 0 : index
      %19 = vector.load %arg7[%c0_16, %c0_17] : memref<32x512xf32, #tpu.memory_space<vmem>>, vector<32x512xf32>
      tpu.vector_store %arg7[%c0_16, %c0_17], %18 {strides = array<i32>} : memref<32x512xf32, #tpu.memory_space<vmem>>, vector<32x512xf32>,
    } else {
    }
    return
  }
  func.func @transform_0(%arg0: i32, %arg1: i32, %arg2: i32) -> (i32, i32) {
    %c0_i32 = arith.constant 0 : i32
    return %arg0, %arg2 : i32, i32
  }
  func.func @transform_1(%arg0: i32, %arg1: i32, %arg2: i32) -> (i32, i32) {
    %c0_i32 = arith.constant 0 : i32
    return %arg2, %arg1 : i32, i32
  }
  func.func @transform_2(%arg0: i32, %arg1: i32, %arg2: i32) -> (i32, i32) {
    %c0_i32 = arith.constant 0 : i32
    %c0_i32_0 = arith.constant 0 : i32
    return %arg0, %c0_i32 : i32, i32
  }
  func.func @transform_3(%arg0: i32, %arg1: i32, %arg2: i32) -> (i32, i32) {
    %c0_i32 = arith.constant 0 : i32
    %c0_i32_0 = arith.constant 0 : i32
    return %c0_i32, %arg1 : i32, i32
  }
  func.func @transform_4(%arg0: i32, %arg1: i32, %arg2: i32) -> (i32, i32) {
    %c0_i32 = arith.constant 0 : i32
    return %arg0, %arg1 : i32, i32
  }
}

module attributes {stable_mosaic.version = 11 : i64} {
  func.func @_silu_gate_quant_kernel(%arg0: i32, %arg1: memref<32x512xf32, #tpu.memory_space<vmem>>, %arg2: memref<32x512xf32, #tpu.memory_space<vmem>>, %arg3: memref<32x512xbf16, #tpu.memory_space<vmem>>, %arg4: memref<32x1xf32, #tpu.memory_space<vmem>>) attributes {dimension_semantics = [#tpu.dimension_semantics<parallel>], iteration_bounds = array<i64: 1>, scalar_prefetch = 0 : i64, scratch_operands = 0 : i64, tpu.core_type = #tpu.core_type<tc>, window_params = [{transform_indices = @transform_0, window_bounds = array<i64: 32, 512>}, {transform_indices = @transform_1, window_bounds = array<i64: 32, 512>}, {transform_indices = @transform_2, window_bounds = array<i64: 32, 512>}, {transform_indices = @transform_3, window_bounds = array<i64: 32, 1>}]} {
    %c0 = arith.constant 0 : index
    %c0_0 = arith.constant 0 : index
    %0 = vector.load %arg1[%c0, %c0_0] : memref<32x512xf32, #tpu.memory_space<vmem>>, vector<32x512xf32>
    %1 = arith.negf %0 : vector<32x512xf32>
    %2 = math.exp %1 : vector<32x512xf32>
    %cst = arith.constant 1.000000e+00 : f32
    %3 = vector.broadcast %cst : f32 to vector<32x512xf32>
    %4 = arith.addf %3, %2 : vector<32x512xf32>
    %5 = arith.divf %3, %4 : vector<32x512xf32>
    %6 = arith.mulf %0, %5 : vector<32x512xf32>
    %c0_1 = arith.constant 0 : index
    %c0_2 = arith.constant 0 : index
    %7 = vector.load %arg2[%c0_1, %c0_2] : memref<32x512xf32, #tpu.memory_space<vmem>>, vector<32x512xf32>
    %8 = arith.mulf %6, %7 : vector<32x512xf32>
    %9 = arith.mulf %8, %8 : vector<32x512xf32>
    %cst_3 = arith.constant dense<0.000000e+00> : vector<32xf32>
    %10 = vector.multi_reduction <add>, %9, %cst_3 [1] : vector<32x512xf32> to vector<32xf32>
    %11 = vector.shape_cast %10 : vector<32xf32> to vector<32x1xf32>
    %cst_4 = arith.constant 5.120000e+02 : f32
    %12 = vector.broadcast %cst_4 : f32 to vector<32x1xf32>
    %13 = arith.divf %11, %12 : vector<32x1xf32>
    %cst_5 = arith.constant 9.99999997E-7 : f32
    %14 = vector.broadcast %cst_5 : f32 to vector<32x1xf32>
    %15 = arith.addf %13, %14 : vector<32x1xf32>
    %16 = math.rsqrt %15 : vector<32x1xf32>
    %17 = vector.broadcast %16 : vector<32x1xf32> to vector<32x512xf32>
    %18 = arith.mulf %8, %17 : vector<32x512xf32>
    %19 = math.absf %18 : vector<32x512xf32>
    %cst_6 = arith.constant dense<0xFF800000> : vector<32xf32>
    %20 = vector.multi_reduction <maximumf>, %19, %cst_6 [1] : vector<32x512xf32> to vector<32xf32>
    %21 = vector.shape_cast %20 : vector<32xf32> to vector<32x1xf32>
    %cst_7 = arith.constant 9.99999974E-6 : f32
    %22 = vector.broadcast %cst_7 : f32 to vector<32x1xf32>
    %23 = arith.maximumf %21, %22 : vector<32x1xf32>
    %cst_8 = arith.constant 1.270000e+02 : f32
    %24 = vector.broadcast %cst_8 : f32 to vector<32x1xf32>
    %25 = arith.divf %24, %23 : vector<32x1xf32>
    %26 = vector.broadcast %25 : vector<32x1xf32> to vector<32x512xf32>
    %27 = arith.mulf %18, %26 : vector<32x512xf32>
    %28 = math.roundeven %27 : vector<32x512xf32>
    %cst_9 = arith.constant -1.280000e+02 : f32
    %cst_10 = arith.constant 1.270000e+02 : f32
    %29 = vector.broadcast %cst_9 : f32 to vector<32x512xf32>
    %30 = arith.maximumf %29, %28 : vector<32x512xf32>
    %31 = vector.broadcast %cst_10 : f32 to vector<32x512xf32>
    %32 = arith.minimumf %31, %30 : vector<32x512xf32>
    %33 = arith.truncf %32 : vector<32x512xf32> to vector<32x512xbf16>
    %c0_11 = arith.constant 0 : index
    %c0_12 = arith.constant 0 : index
    %34 = vector.load %arg3[%c0_11, %c0_12] : memref<32x512xbf16, #tpu.memory_space<vmem>>, vector<32x512xbf16>
    tpu.vector_store %arg3[%c0_11, %c0_12], %33 {strides = array<i32>} : memref<32x512xbf16, #tpu.memory_space<vmem>>, vector<32x512xbf16>,
    %cst_13 = arith.constant 0.00787401571 : f32
    %35 = vector.broadcast %cst_13 : f32 to vector<32x1xf32>
    %36 = arith.mulf %23, %35 : vector<32x1xf32>
    %c0_14 = arith.constant 0 : index
    %c0_15 = arith.constant 0 : index
    %37 = vector.load %arg4[%c0_14, %c0_15] : memref<32x1xf32, #tpu.memory_space<vmem>>, vector<32x1xf32>
    tpu.vector_store %arg4[%c0_14, %c0_15], %36 {strides = array<i32>} : memref<32x1xf32, #tpu.memory_space<vmem>>, vector<32x1xf32>,
    return
  }
  func.func @transform_0(%arg0: i32) -> (i32, i32) {
    %c0_i32 = arith.constant 0 : i32
    %c0_i32_0 = arith.constant 0 : i32
    return %arg0, %c0_i32 : i32, i32
  }
  func.func @transform_1(%arg0: i32) -> (i32, i32) {
    %c1_i32 = arith.constant 1 : i32
    %c0_i32 = arith.constant 0 : i32
    return %arg0, %c1_i32 : i32, i32
  }
  func.func @transform_2(%arg0: i32) -> (i32, i32) {
    %c0_i32 = arith.constant 0 : i32
    %c0_i32_0 = arith.constant 0 : i32
    return %arg0, %c0_i32 : i32, i32
  }
  func.func @transform_3(%arg0: i32) -> (i32, i32) {
    %c0_i32 = arith.constant 0 : i32
    %c0_i32_0 = arith.constant 0 : i32
    return %arg0, %c0_i32 : i32, i32
  }
}

module attributes {stable_mosaic.version = 11 : i64} {
  func.func @_bitlinear_mm_kernel(%arg0: i32, %arg1: i32, %arg2: i32, %arg3: memref<32x512xbf16, #tpu.memory_space<vmem>>, %arg4: memref<512x128xbf16, #tpu.memory_space<vmem>>, %arg5: memref<32x1xf32, #tpu.memory_space<vmem>>, %arg6: memref<1x128xf32, #tpu.memory_space<vmem>>, %arg7: memref<32x128xf32, #tpu.memory_space<vmem>>, %arg8: memref<32x128xf32, #tpu.memory_space<vmem>>) attributes {dimension_semantics = [#tpu.dimension_semantics<parallel>, #tpu.dimension_semantics<parallel>, #tpu.dimension_semantics<arbitrary>], iteration_bounds = array<i64: 1, 1, 1>, scalar_prefetch = 0 : i64, scratch_operands = 1 : i64, tpu.core_type = #tpu.core_type<tc>, window_params = [{transform_indices = @transform_0, window_bounds = array<i64: 32, 512>}, {transform_indices = @transform_1, window_bounds = array<i64: 512, 128>}, {transform_indices = @transform_2, window_bounds = array<i64: 32, 1>}, {transform_indices = @transform_3, window_bounds = array<i64: 1, 128>}, {transform_indices = @transform_4, window_bounds = array<i64: 32, 128>}]} {
    %c0_i32 = arith.constant 0 : i32
    %0 = arith.cmpi eq, %arg2, %c0_i32 : i32
    %1 = arith.extui %0 : i1 to i32
    %c0_i32_0 = arith.constant 0 : i32
    %2 = arith.cmpi ne, %1, %c0_i32_0 : i32
    scf.if %2 {
      %cst_10 = arith.constant 0.000000e+00 : f32
      %12 = vector.broadcast %cst_10 : f32 to vector<32x128xf32>
      %c0_11 = arith.constant 0 : index
      %c0_12 = arith.constant 0 : index
      %13 = vector.load %arg8[%c0_11, %c0_12] : memref<32x128xf32, #tpu.memory_space<vmem>>, vector<32x128xf32>
      tpu.vector_store %arg8[%c0_11, %c0_12], %12 {strides = array<i32>} : memref<32x128xf32, #tpu.memory_space<vmem>>, vector<32x128xf32>,
    } else {
    }
    %c0 = arith.constant 0 : index
    %c0_1 = arith.constant 0 : index
    %3 = vector.load %arg8[%c0, %c0_1] : memref<32x128xf32, #tpu.memory_space<vmem>>, vector<32x128xf32>
    %c0_2 = arith.constant 0 : index
    %c0_3 = arith.constant 0 : index
    %4 = vector.load %arg3[%c0_2, %c0_3] : memref<32x512xbf16, #tpu.memory_space<vmem>>, vector<32x512xbf16>
    %c0_4 = arith.constant 0 : index
    %c0_5 = arith.constant 0 : index
    %5 = vector.load %arg4[%c0_4, %c0_5] : memref<512x128xbf16, #tpu.memory_space<vmem>>, vector<512x128xbf16>
    %cst = arith.constant dense<0.000000e+00> : vector<32x128xf32>
    %6 = tpu.matmul %4, %5, %cst {dimension_numbers = #tpu.dot_dimension_numbers<[1], [0], [0], [1], [0, 0, 1, 1], [], []>} : vector<32x512xbf16>, vector<512x128xbf16>, vector<32x128xf32> -> vector<32x128xf32>
    %7 = arith.addf %3, %6 : vector<32x128xf32>
    %c0_6 = arith.constant 0 : index
    %c0_7 = arith.constant 0 : index
    %8 = vector.load %arg8[%c0_6, %c0_7] : memref<32x128xf32, #tpu.memory_space<vmem>>, vector<32x128xf32>
    tpu.vector_store %arg8[%c0_6, %c0_7], %7 {strides = array<i32>} : memref<32x128xf32, #tpu.memory_space<vmem>>, vector<32x128xf32>,
    %c0_i32_8 = arith.constant 0 : i32
    %9 = arith.cmpi eq, %arg2, %c0_i32_8 : i32
    %10 = arith.extui %9 : i1 to i32
    %c0_i32_9 = arith.constant 0 : i32
    %11 = arith.cmpi ne, %10, %c0_i32_9 : i32
    scf.if %11 {
      %c0_10 = arith.constant 0 : index
      %c0_11 = arith.constant 0 : index
      %12 = vector.load %arg8[%c0_10, %c0_11] : memref<32x128xf32, #tpu.memory_space<vmem>>, vector<32x128xf32>
      %c0_12 = arith.constant 0 : index
      %c0_13 = arith.constant 0 : index
      %13 = vector.load %arg5[%c0_12, %c0_13] : memref<32x1xf32, #tpu.memory_space<vmem>>, vector<32x1xf32>
      %14 = vector.broadcast %13 : vector<32x1xf32> to vector<32x128xf32>
      %15 = arith.mulf %12, %14 : vector<32x128xf32>
      %c0_14 = arith.constant 0 : index
      %c0_15 = arith.constant 0 : index
      %16 = vector.load %arg6[%c0_14, %c0_15] : memref<1x128xf32, #tpu.memory_space<vmem>>, vector<1x128xf32>
      %17 = vector.broadcast %16 : vector<1x128xf32> to vector<32x128xf32>
      %18 = arith.mulf %15, %17 : vector<32x128xf32>
      %c0_16 = arith.constant 0 : index
      %c0_17 = arith.constant 0 : index
      %19 = vector.load %arg7[%c0_16, %c0_17] : memref<32x128xf32, #tpu.memory_space<vmem>>, vector<32x128xf32>
      tpu.vector_store %arg7[%c0_16, %c0_17], %18 {strides = array<i32>} : memref<32x128xf32, #tpu.memory_space<vmem>>, vector<32x128xf32>,
    } else {
    }
    return
  }
  func.func @transform_0(%arg0: i32, %arg1: i32, %arg2: i32) -> (i32, i32) {
    %c0_i32 = arith.constant 0 : i32
    return %arg0, %arg2 : i32, i32
  }
  func.func @transform_1(%arg0: i32, %arg1: i32, %arg2: i32) -> (i32, i32) {
    %c0_i32 = arith.constant 0 : i32
    return %arg2, %arg1 : i32, i32
  }
  func.func @transform_2(%arg0: i32, %arg1: i32, %arg2: i32) -> (i32, i32) {
    %c0_i32 = arith.constant 0 : i32
    %c0_i32_0 = arith.constant 0 : i32
    return %arg0, %c0_i32 : i32, i32
  }
  func.func @transform_3(%arg0: i32, %arg1: i32, %arg2: i32) -> (i32, i32) {
    %c0_i32 = arith.constant 0 : i32
    %c0_i32_0 = arith.constant 0 : i32
    return %c0_i32, %arg1 : i32, i32
  }
  func.func @transform_4(%arg0: i32, %arg1: i32, %arg2: i32) -> (i32, i32) {
    %c0_i32 = arith.constant 0 : i32
    return %arg0, %arg1 : i32, i32
  }
}

</mosaic_0001>

<llo_original>
// kernel: transformer_block.9
$region0: #{transformer_block.9}
  #allocation0 [shape = 'u32[]', space=smem, size = 0x4, offset = 0x4, fixed_abs, tag = 'smem constant byte address 0x4 - core index']
  #allocation1 [shape = 'u32[72,128]{1,0:T(1,128)}', space=vmem, size = 0x9000, scoped, tag = 'internal scratch']
  %s0 = inlined_call_operand.vmem [shape: f32[32,128], index: 0, kind: input, shape index: {}]
  %s1 = inlined_call_operand.vmem [shape: bf16[32,128], index: 1, kind: output, shape index: {0}]
  %s2 = inlined_call_operand.vmem [shape: f32[32,1], index: 2, kind: output, shape index: {1}]
  %3 = xla_tuple %s1, %s2
  %s4 = sld [smem:[#allocation0]]
  $region22: #{transformer_block.9} parent=0
    _
  %s6 = ssub.s32 1, %s4
  %s7 = scalar_select 0, %s6, %s4
  // Predicated region
  $region2: #{transformer_block.9} parent=0 // pred_check
    _
  $region3: #{transformer_block.9} parent=0 // pred_check_branch
    %9 = sbr.rel (0) target = $region5
  $region4: #{transformer_block.9} parent=0 // pred_region
    _
  $region5: #{transformer_block.9} parent=0 // pred_fallthru
    _
  %v10 = vld [vmem:[%s0] sm:$0xff]
  %v11 = vld [vmem:[%s0 + $0x8] sm:$0xff]
  %v12 = vld [vmem:[%s0 + $0x10] sm:$0xff]
  %v13 = vld [vmem:[%s0 + $0x18] sm:$0xff]
  %v14 = vmul.f32 %v10, %v10
  %v15 = vmul.f32 %v11, %v11
  %v16 = vmul.f32 %v12, %v12
  %v17 = vmul.f32 %v13, %v13
  %18 = vadd.xlane.f32.xlu0 %v14
  %v19 = vpop.xlane.xlu0 %18
  %20 = vadd.xlane.f32.xlu0 %v15
  %v21 = vpop.xlane.xlu0 %20
  %22 = vadd.xlane.f32.xlu0 %v16
  %v23 = vpop.xlane.xlu0 %22
  %24 = vadd.xlane.f32.xlu0 %v17
  %v25 = vpop.xlane.xlu0 %24
  %v26 = vrcp.pop 128.0
  %v27 = vmul.f32 128.0, %v26
  %v28 = vsub.f32 1.0, %v27
  %v29 = vmul.f32 %v26, %v28
  %v30 = vadd.f32 %v26, %v29
  %vm31 = vweird.f32 %v26
  %v32 = vsel %vm31, %v26, %v30
  %v33 = vmul.f32 %v19, %v32
  %v34 = vmul.f32 %v21, %v32
  %v35 = vmul.f32 %v23, %v32
  %v36 = vmul.f32 %v25, %v32
  %v37 = vadd.f32 %v33, 1e-06
  %v38 = vadd.f32 %v34, 1e-06
  %v39 = vadd.f32 %v35, 1e-06
  %v40 = vadd.f32 %v36, 1e-06
  %v41 = vrsqrt.pop %v37
  %v42 = vmul.f32 %v41, %v37
  %v43 = vmul.f32 %v42, %v41
  %v44 = vmul.f32 0.5, %v43
  %v45 = vsub.f32 1.5, %v44
  %v46 = vmul.f32 %v41, %v45
  %vm47 = vweird.f32 %v37
  %vm48 = vweird.f32 %v41
  %vm49 = vmor %vm47, %vm48
  %v50 = vsel %vm49, %v41, %v46
  %v51 = vrsqrt.pop %v38
  %v52 = vmul.f32 %v51, %v38
  %v53 = vmul.f32 %v52, %v51
  %v54 = vmul.f32 0.5, %v53
  %v55 = vsub.f32 1.5, %v54
  %v56 = vmul.f32 %v51, %v55
  %vm57 = vweird.f32 %v38
  %vm58 = vweird.f32 %v51
  %vm59 = vmor %vm57, %vm58
  %v60 = vsel %vm59, %v51, %v56
  %v61 = vrsqrt.pop %v39
  %v62 = vmul.f32 %v61, %v39
  %v63 = vmul.f32 %v62, %v61
  %v64 = vmul.f32 0.5, %v63
  %v65 = vsub.f32 1.5, %v64
  %v66 = vmul.f32 %v61, %v65
  %vm67 = vweird.f32 %v39
  %vm68 = vweird.f32 %v61
  %vm69 = vmor %vm67, %vm68
  %v70 = vsel %vm69, %v61, %v66
  %v71 = vrsqrt.pop %v40
  %v72 = vmul.f32 %v71, %v40
  %v73 = vmul.f32 %v72, %v71
  %v74 = vmul.f32 0.5, %v73
  %v75 = vsub.f32 1.5, %v74
  %v76 = vmul.f32 %v71, %v75
  %vm77 = vweird.f32 %v40
  %vm78 = vweird.f32 %v71
  %vm79 = vmor %vm77, %vm78
  %v80 = vsel %vm79, %v71, %v76
  %v81 = vmul.f32 %v10, %v50
  %v82 = vmul.f32 %v11, %v60
  %v83 = vmul.f32 %v12, %v70
  %v84 = vmul.f32 %v13, %v80
  %v85 = vand.u32 2147483647, %v81
  %v86 = vand.u32 2147483647, %v82
  %v87 = vand.u32 2147483647, %v83
  %v88 = vand.u32 2147483647, %v84
  %89 = vmax.xlane.f32.xlu0 %v85
  %v90 = vpop.xlane.xlu0 %89
  %91 = vmax.xlane.f32.xlu0 %v86
  %v92 = vpop.xlane.xlu0 %91
  %93 = vmax.xlane.f32.xlu0 %v87
  %v94 = vpop.xlane.xlu0 %93
  %95 = vmax.xlane.f32.xlu0 %v88
  %v96 = vpop.xlane.xlu0 %95
  %v97 = vmax.f32 %v90, 1e-05
  %v98 = vmax.f32 %v92, 1e-05
  %v99 = vmax.f32 %v94, 1e-05
  %v100 = vmax.f32 %v96, 1e-05
  %v101 = vrcp.pop %v97
  %v102 = vmul.f32 %v97, %v101
  %v103 = vsub.f32 1.0, %v102
  %v104 = vmul.f32 %v101, %v103
  %v105 = vadd.f32 %v101, %v104
  %vm106 = vweird.f32 %v97
  %vm107 = vweird.f32 %v101
  %vm108 = vmor %vm106, %vm107
  %v109 = vsel %vm108, %v101, %v105
  %v110 = vand.u32 2147483647, %v97
  %vm111 = vcmp.eq.f32.partialorder %v110, 8.507059e+37
  %v112 = vand.u32 %v97, 2147483648
  %v113 = vor.u32 1.1754944e-38, %v112
  %v114 = vsel %vm111, %v113, %v109
  %v115 = vmul.f32 127.0, %v114
  %v116 = vrcp.pop %v98
  %v117 = vmul.f32 %v98, %v116
  %v118 = vsub.f32 1.0, %v117
  %v119 = vmul.f32 %v116, %v118
  %v120 = vadd.f32 %v116, %v119
  %vm121 = vweird.f32 %v98
  %vm122 = vweird.f32 %v116
  %vm123 = vmor %vm121, %vm122
  %v124 = vsel %vm123, %v116, %v120
  %v125 = vand.u32 2147483647, %v98
  %vm126 = vcmp.eq.f32.partialorder %v125, 8.507059e+37
  %v127 = vand.u32 %v98, 2147483648
  %v128 = vor.u32 1.1754944e-38, %v127
  %v129 = vsel %vm126, %v128, %v124
  %v130 = vmul.f32 127.0, %v129
  %v131 = vrcp.pop %v99
  %v132 = vmul.f32 %v99, %v131
  %v133 = vsub.f32 1.0, %v132
  %v134 = vmul.f32 %v131, %v133
  %v135 = vadd.f32 %v131, %v134
  %vm136 = vweird.f32 %v99
  %vm137 = vweird.f32 %v131
  %vm138 = vmor %vm136, %vm137
  %v139 = vsel %vm138, %v131, %v135
  %v140 = vand.u32 2147483647, %v99
  %vm141 = vcmp.eq.f32.partialorder %v140, 8.507059e+37
  %v142 = vand.u32 %v99, 2147483648
  %v143 = vor.u32 1.1754944e-38, %v142
  %v144 = vsel %vm141, %v143, %v139
  %v145 = vmul.f32 127.0, %v144
  %v146 = vrcp.pop %v100
  %v147 = vmul.f32 %v100, %v146
  %v148 = vsub.f32 1.0, %v147
  %v149 = vmul.f32 %v146, %v148
  %v150 = vadd.f32 %v146, %v149
  %vm151 = vweird.f32 %v100
  %vm152 = vweird.f32 %v146
  %vm153 = vmor %vm151, %vm152
  %v154 = vsel %vm153, %v146, %v150
  %v155 = vand.u32 2147483647, %v100
  %vm156 = vcmp.eq.f32.partialorder %v155, 8.507059e+37
  %v157 = vand.u32 %v100, 2147483648
  %v158 = vor.u32 1.1754944e-38, %v157
  %v159 = vsel %vm156, %v158, %v154
  %v160 = vmul.f32 127.0, %v159
  %v161 = vmul.f32 %v81, %v115
  %v162 = vmul.f32 %v82, %v130
  %v163 = vmul.f32 %v83, %v145
  %v164 = vmul.f32 %v84, %v160
  %v165 = vround.ne.pseudo %v161
  %v166 = vround.ne.pseudo %v162
  %v167 = vround.ne.pseudo %v163
  %v168 = vround.ne.pseudo %v164
  %v169 = vmax.f32 %v165, -128.0
  %v170 = vmax.f32 %v166, -128.0
  %v171 = vmax.f32 %v167, -128.0
  %v172 = vmax.f32 %v168, -128.0
  %v173 = vmin.f32 %v169, 127.0
  %v174 = vmin.f32 %v170, 127.0
  %v175 = vmin.f32 %v171, 127.0
  %v176 = vmin.f32 %v172, 127.0
  %v177 = vpack.c.bf16 %v173, %v173
  %v178 = vpack.c.bf16 %v174, %v174
  %v179 = vpack.c.bf16 %v175, %v175
  %v180 = vpack.c.bf16 %v176, %v176
  %181 = vst [vmem:[%s1] sm:$0xf] %v177
  %182 = vst [vmem:[%s1 + $0x4] sm:$0xf] %v178
  %183 = vst [vmem:[%s1 + $0x8] sm:$0xf] %v179
  %184 = vst [vmem:[%s1 + $0xc] sm:$0xf] %v180
  %v185 = vmul.f32 %v97, 0.007874016
  %v186 = vmul.f32 %v98, 0.007874016
  %v187 = vmul.f32 %v99, 0.007874016
  %v188 = vmul.f32 %v100, 0.007874016
  %vm189 = vcmask 7168
  %190 = vst.msk [vmem:[%s2] sm:$0xff] %vm189, %v185
  %191 = vst.msk [vmem:[%s2 + $0x8] sm:$0xff] %vm189, %v186
  %192 = vst.msk [vmem:[%s2 + $0x10] sm:$0xff] %vm189, %v187
  %193 = vst.msk [vmem:[%s2 + $0x18] sm:$0xff] %vm189, %v188
  // Predicated region
  $region6: #{transformer_block.9} parent=0 // pred_check
    _
  $region7: #{transformer_block.9} parent=0 // pred_check_branch
    %195 = sbr.rel (0) target = $region9
  $region8: #{transformer_block.9} parent=0 // pred_region
    _
  $region9: #{transformer_block.9} parent=0 // pred_fallthru
    _
  // Predicated region
  $region10: #{transformer_block.9} parent=0 // pred_check
    _
  $region11: #{transformer_block.9} parent=0 // pred_check_branch
    %197 = sbr.rel (0) target = $region13
  $region12: #{transformer_block.9} parent=0 // pred_region
    _
  $region13: #{transformer_block.9} parent=0 // pred_fallthru
    _
  // Predicated region
  $region14: #{transformer_block.9} parent=0 // pred_check
    _
  $region15: #{transformer_block.9} parent=0 // pred_check_branch
    %199 = sbr.rel (0) target = $region17
  $region16: #{transformer_block.9} parent=0 // pred_region
    _
  $region17: #{transformer_block.9} parent=0 // pred_fallthru
    _
  // Predicated region
  $region18: #{transformer_block.9} parent=0 // pred_check
    _
  $region19: #{transformer_block.9} parent=0 // pred_check_branch
    %201 = sbr.rel (0) target = $region21
  $region20: #{transformer_block.9} parent=0 // pred_region
    _
  $region21: #{transformer_block.9} parent=0 // pred_fallthru
    _

// kernel: transformer_block.13
$region0: #{transformer_block.13}
  #allocation0 [shape = 'u32[]', space=smem, size = 0x4, offset = 0x4, fixed_abs, tag = 'smem constant byte address 0x4 - core index']
  #allocation1 [shape = 'u32[72,128]{1,0:T(1,128)}', space=vmem, size = 0x9000, scoped, tag = 'internal scratch']
  #allocation2 [shape = 'f32[32,128]{1,0:T(8,128)}', space=vmem, size = 0x4000, scoped, tag = 'scratch operand']
  %s0 = inlined_call_operand.vmem [shape: bf16[32,128], index: 0, kind: input, shape index: {}]
  %s1 = inlined_call_operand.vmem [shape: bf16[128,128], index: 1, kind: input, shape index: {}]
  %s2 = inlined_call_operand.vmem [shape: f32[32,1], index: 2, kind: input, shape index: {}]
  %s3 = inlined_call_operand.vmem [shape: f32[1,128], index: 3, kind: input, shape index: {}]
  %s4 = inlined_call_operand.vmem [shape: f32[32,128], index: 4, kind: output, shape index: {}]
  %s5 = sld [smem:[#allocation0]]
  $region34: #{transformer_block.13} parent=0
    _
  %s7 = ssub.s32 1, %s5
  %s8 = scalar_select 0, %s7, %s5
  // Predicated region
  $region2: #{transformer_block.13} parent=0 // pred_check
    _
  $region3: #{transformer_block.13} parent=0 // pred_check_branch
    %10 = sbr.rel (0) target = $region5
  $region4: #{transformer_block.13} parent=0 // pred_region
    _
  $region5: #{transformer_block.13} parent=0 // pred_fallthru
    _
  // Predicated region
  $region6: #{transformer_block.13} parent=0 // pred_check
    _
  $region7: #{transformer_block.13} parent=0 // pred_check_branch
    %12 = sbr.rel (0) target = $region9
  $region8: #{transformer_block.13} parent=0 // pred_region
    _
  $region9: #{transformer_block.13} parent=0 // pred_fallthru
    _
  // Predicated region
  $region10: #{transformer_block.13} parent=0 // pred_check
    _
  $region11: #{transformer_block.13} parent=0 // pred_check_branch
    %14 = sbr.rel (0) target = $region13
  $region12: #{transformer_block.13} parent=0 // pred_region
    _
  $region13: #{transformer_block.13} parent=0 // pred_fallthru
    _
  // Predicated region
  $region14: #{transformer_block.13} parent=0 // pred_check
    _
  $region15: #{transformer_block.13} parent=0 // pred_check_branch
    %16 = sbr.rel (0) target = $region17
  $region16: #{transformer_block.13} parent=0 // pred_region
    _
  $region17: #{transformer_block.13} parent=0 // pred_fallthru
    _
  %p17 = scmp.eq.s32.totalorder 0, 0
  // Predicated region
  $region18: #{transformer_block.13} parent=0 // pred_check
    %p18 = pneg %p17
  $region19: #{transformer_block.13} parent=0 // pred_check_branch
    %20 = sbr.rel (%p18) target = $region21
  $region20: #{transformer_block.13} parent=0 // pred_region
    %21 = vst [vmem:[#allocation2] sm:$0xff] 0.0
    %22 = vst [vmem:[#allocation2 + $0x8] sm:$0xff] 0.0
    %23 = vst [vmem:[#allocation2 + $0x10] sm:$0xff] 0.0
    %24 = vst [vmem:[#allocation2 + $0x18] sm:$0xff] 0.0
  $region21: #{transformer_block.13} parent=0 // pred_fallthru
    _
  %v25 = vld [vmem:[#allocation2] sm:$0xff]
  %v26 = vld [vmem:[#allocation2 + $0x8] sm:$0xff]
  %v27 = vld [vmem:[#allocation2 + $0x10] sm:$0xff]
  %v28 = vld [vmem:[#allocation2 + $0x18] sm:$0xff]
  %v29 = vld [vmem:[%s0] sm:$0xf]
  %v30 = vld [vmem:[%s0 + $0x4] sm:$0xf]
  %v31 = vld [vmem:[%s0 + $0x8] sm:$0xf]
  %v32 = vld [vmem:[%s0 + $0xc] sm:$0xf]
  %v33 = vld [vmem:[%s1] sm:$0xf]
  %v34 = vld [vmem:[%s1 + $0x4] sm:$0xf]
  %v35 = vld [vmem:[%s1 + $0x8] sm:$0xf]
  %v36 = vld [vmem:[%s1 + $0xc] sm:$0xf]
  %v37 = vld [vmem:[%s1 + $0x10] sm:$0xf]
  %v38 = vld [vmem:[%s1 + $0x14] sm:$0xf]
  %v39 = vld [vmem:[%s1 + $0x18] sm:$0xf]
  %v40 = vld [vmem:[%s1 + $0x1c] sm:$0xf]
  %v41 = vld [vmem:[%s1 + $0x20] sm:$0xf]
  %v42 = vld [vmem:[%s1 + $0x24] sm:$0xf]
  %v43 = vld [vmem:[%s1 + $0x28] sm:$0xf]
  %v44 = vld [vmem:[%s1 + $0x2c] sm:$0xf]
  %v45 = vld [vmem:[%s1 + $0x30] sm:$0xf]
  %v46 = vld [vmem:[%s1 + $0x34] sm:$0xf]
  %v47 = vld [vmem:[%s1 + $0x38] sm:$0xf]
  %v48 = vld [vmem:[%s1 + $0x3c] sm:$0xf]
  %v53 = vunpack.c.l.b16 %v29
  %v54 = vunpack.c.l.b16 %v30
  %v55 = vunpack.c.l.b16 %v31
  %v56 = vunpack.c.l.b16 %v32
  %v57 = vpack.c.b16 %v54, %v53
  %v58 = vpack.c.b16 %v56, %v55
  %v77 = vunpack.c.l.b16 %v33
  %v78 = vunpack.c.l.b16 %v34
  %v79 = vunpack.c.l.b16 %v35
  %v80 = vunpack.c.l.b16 %v36
  %v81 = vunpack.c.l.b16 %v37
  %v82 = vunpack.c.l.b16 %v38
  %v83 = vunpack.c.l.b16 %v39
  %v84 = vunpack.c.l.b16 %v40
  %v85 = vunpack.c.l.b16 %v41
  %v86 = vunpack.c.l.b16 %v42
  %v87 = vunpack.c.l.b16 %v43
  %v88 = vunpack.c.l.b16 %v44
  %v89 = vunpack.c.l.b16 %v45
  %v90 = vunpack.c.l.b16 %v46
  %v91 = vunpack.c.l.b16 %v47
  %v92 = vunpack.c.l.b16 %v48
  %v93 = vpack.c.b16 %v78, %v77
  %v94 = vpack.c.b16 %v80, %v79
  %v95 = vpack.c.b16 %v82, %v81
  %v96 = vpack.c.b16 %v84, %v83
  %v97 = vpack.c.b16 %v86, %v85
  %v98 = vpack.c.b16 %v88, %v87
  %v99 = vpack.c.b16 %v90, %v89
  %v100 = vpack.c.b16 %v92, %v91
  %109 = vmatpush.bf16.msra.mxu0 %v100
  %110 = vmatpush.bf16.msra.mxu0 %v99
  %111 = vmatpush.bf16.msra.mxu0 %v98
  %112 = vmatpush.bf16.msra.mxu0 %v97
  %113 = vmatpush.bf16.msra.mxu0 %v96
  %114 = vmatpush.bf16.msra.mxu0 %v95
  %115 = vmatpush.bf16.msra.mxu0 %v94
  %116 = vmatpush.bf16.msra.mxu0 %v93
  %117 = vmatmul.bf16.gmra.mxu0 %v57
  %v118 = vpop.f32.mrf.mxu0
  %v119 = vadd.f32 0.0, %v118
  %v120 = vpop.f32.mrf.mxu0
  %v121 = vadd.f32 0.0, %v120
  %122 = vmatmul.bf16.gmra.mxu0 %v58
  %v123 = vpop.f32.mrf.mxu0
  %v124 = vadd.f32 0.0, %v123
  %v125 = vpop.f32.mrf.mxu0
  %v126 = vadd.f32 0.0, %v125
  %127 = vdwg.mxu0
  %v128 = vadd.f32 %v25, %v119
  %v129 = vadd.f32 %v26, %v121
  %v130 = vadd.f32 %v27, %v124
  %v131 = vadd.f32 %v28, %v126
  %132 = vst [vmem:[#allocation2] sm:$0xff] %v128
  %133 = vst [vmem:[#allocation2 + $0x8] sm:$0xff] %v129
  %134 = vst [vmem:[#allocation2 + $0x10] sm:$0xff] %v130
  %135 = vst [vmem:[#allocation2 + $0x18] sm:$0xff] %v131
  // Predicated region
  $region22: #{transformer_block.13} parent=0 // pred_check
    %p136 = pneg %p17
  $region23: #{transformer_block.13} parent=0 // pred_check_branch
    %138 = sbr.rel (%p136) target = $region25
  $region24: #{transformer_block.13} parent=0 // pred_region
    %v139 = vld [vmem:[#allocation2] sm:$0xff]
    %v140 = vld [vmem:[#allocation2 + $0x8] sm:$0xff]
    %v141 = vld [vmem:[#allocation2 + $0x10] sm:$0xff]
    %v142 = vld [vmem:[#allocation2 + $0x18] sm:$0xff]
    %v143 = vld [vmem:[%s2] sm:$0xff]
    %v144 = vld [vmem:[%s2 + $0x8] sm:$0xff]
    %v145 = vld [vmem:[%s2 + $0x10] sm:$0xff]
    %v146 = vld [vmem:[%s2 + $0x18] sm:$0xff]
    %148 = vset.pattern.permute.xlu0 0
    %149 = vperm.xlu0 %148, %v143
    %v150 = vpop.permute.xlu0 %149
    %153 = vset.pattern.permute.xlu0 0
    %154 = vperm.xlu0 %153, %v144
    %v155 = vpop.permute.xlu0 %154
    %158 = vset.pattern.permute.xlu0 0
    %159 = vperm.xlu0 %158, %v145
    %v160 = vpop.permute.xlu0 %159
    %163 = vset.pattern.permute.xlu0 0
    %164 = vperm.xlu0 %163, %v146
    %v165 = vpop.permute.xlu0 %164
    %v167 = vmul.f32 %v139, %v150
    %v168 = vmul.f32 %v140, %v155
    %v169 = vmul.f32 %v141, %v160
    %v170 = vmul.f32 %v142, %v165
    %v171 = vld [vmem:[%s3] sm:$0x1]
    %v173 = vperm.slane %v171, 0
    %v175 = vmul.f32 %v167, %v173
    %v176 = vmul.f32 %v168, %v173
    %v177 = vmul.f32 %v169, %v173
    %v178 = vmul.f32 %v170, %v173
    %179 = vst [vmem:[%s4] sm:$0xff] %v175
    %180 = vst [vmem:[%s4 + $0x8] sm:$0xff] %v176
    %181 = vst [vmem:[%s4 + $0x10] sm:$0xff] %v177
    %182 = vst [vmem:[%s4 + $0x18] sm:$0xff] %v178
  $region25: #{transformer_block.13} parent=0 // pred_fallthru
    _
  // Predicated region
  $region26: #{transformer_block.13} parent=0 // pred_check
    _
  $region27: #{transformer_block.13} parent=0 // pred_check_branch
    %184 = sbr.rel (0) target = $region29
  $region28: #{transformer_block.13} parent=0 // pred_region
    _
  $region29: #{transformer_block.13} parent=0 // pred_fallthru
    _
  // Predicated region
  $region30: #{transformer_block.13} parent=0 // pred_check
    _
  $region31: #{transformer_block.13} parent=0 // pred_check_branch
    %186 = sbr.rel (0) target = $region33
  $region32: #{transformer_block.13} parent=0 // pred_region
    _
  $region33: #{transformer_block.13} parent=0 // pred_fallthru
    _

// kernel: transformer_block.10
$region0: #{transformer_block.10}
  #allocation0 [shape = 'u32[]', space=smem, size = 0x4, offset = 0x4, fixed_abs, tag = 'smem constant byte address 0x4 - core index']
  #allocation1 [shape = 'u32[72,128]{1,0:T(1,128)}', space=vmem, size = 0x9000, scoped, tag = 'internal scratch']
  #allocation2 [shape = 'f32[32,384]{1,0:T(8,128)}', space=vmem, size = 0xc000, scoped, tag = 'scratch operand']
  %s0 = inlined_call_operand.vmem [shape: bf16[32,128], index: 0, kind: input, shape index: {}]
  %s1 = inlined_call_operand.vmem [shape: bf16[128,384], index: 1, kind: input, shape index: {}]
  %s2 = inlined_call_operand.vmem [shape: f32[32,1], index: 2, kind: input, shape index: {}]
  %s3 = inlined_call_operand.vmem [shape: f32[1,384], index: 3, kind: input, shape index: {}]
  %s4 = inlined_call_operand.vmem [shape: f32[32,384], index: 4, kind: output, shape index: {}]
  %s5 = sld [smem:[#allocation0]]
  $region34: #{transformer_block.10} parent=0
    _
  %s7 = ssub.s32 1, %s5
  %s8 = scalar_select 0, %s7, %s5
  // Predicated region
  $region2: #{transformer_block.10} parent=0 // pred_check
    _
  $region3: #{transformer_block.10} parent=0 // pred_check_branch
    %10 = sbr.rel (0) target = $region5
  $region4: #{transformer_block.10} parent=0 // pred_region
    _
  $region5: #{transformer_block.10} parent=0 // pred_fallthru
    _
  // Predicated region
  $region6: #{transformer_block.10} parent=0 // pred_check
    _
  $region7: #{transformer_block.10} parent=0 // pred_check_branch
    %12 = sbr.rel (0) target = $region9
  $region8: #{transformer_block.10} parent=0 // pred_region
    _
  $region9: #{transformer_block.10} parent=0 // pred_fallthru
    _
  // Predicated region
  $region10: #{transformer_block.10} parent=0 // pred_check
    _
  $region11: #{transformer_block.10} parent=0 // pred_check_branch
    %14 = sbr.rel (0) target = $region13
  $region12: #{transformer_block.10} parent=0 // pred_region
    _
  $region13: #{transformer_block.10} parent=0 // pred_fallthru
    _
  // Predicated region
  $region14: #{transformer_block.10} parent=0 // pred_check
    _
  $region15: #{transformer_block.10} parent=0 // pred_check_branch
    %16 = sbr.rel (0) target = $region17
  $region16: #{transformer_block.10} parent=0 // pred_region
    _
  $region17: #{transformer_block.10} parent=0 // pred_fallthru
    _
  %p17 = scmp.eq.s32.totalorder 0, 0
  // Predicated region
  $region18: #{transformer_block.10} parent=0 // pred_check
    %p18 = pneg %p17
  $region19: #{transformer_block.10} parent=0 // pred_check_branch
    %20 = sbr.rel (%p18) target = $region21
  $region20: #{transformer_block.10} parent=0 // pred_region
    %21 = vst [vmem:[#allocation2] sm:$0xff] 0.0
    %22 = vst [vmem:[#allocation2 + $0x8] sm:$0xff] 0.0
    %23 = vst [vmem:[#allocation2 + $0x10] sm:$0xff] 0.0
    %24 = vst [vmem:[#allocation2 + $0x18] sm:$0xff] 0.0
    %25 = vst [vmem:[#allocation2 + $0x20] sm:$0xff] 0.0
    %26 = vst [vmem:[#allocation2 + $0x28] sm:$0xff] 0.0
    %27 = vst [vmem:[#allocation2 + $0x30] sm:$0xff] 0.0
    %28 = vst [vmem:[#allocation2 + $0x38] sm:$0xff] 0.0
    %29 = vst [vmem:[#allocation2 + $0x40] sm:$0xff] 0.0
    %30 = vst [vmem:[#allocation2 + $0x48] sm:$0xff] 0.0
    %31 = vst [vmem:[#allocation2 + $0x50] sm:$0xff] 0.0
    %32 = vst [vmem:[#allocation2 + $0x58] sm:$0xff] 0.0
  $region21: #{transformer_block.10} parent=0 // pred_fallthru
    _
  %v33 = vld [vmem:[#allocation2] sm:$0xff]
  %v34 = vld [vmem:[#allocation2 + $0x8] sm:$0xff]
  %v35 = vld [vmem:[#allocation2 + $0x10] sm:$0xff]
  %v36 = vld [vmem:[#allocation2 + $0x18] sm:$0xff]
  %v37 = vld [vmem:[#allocation2 + $0x20] sm:$0xff]
  %v38 = vld [vmem:[#allocation2 + $0x28] sm:$0xff]
  %v39 = vld [vmem:[#allocation2 + $0x30] sm:$0xff]
  %v40 = vld [vmem:[#allocation2 + $0x38] sm:$0xff]
  %v41 = vld [vmem:[#allocation2 + $0x40] sm:$0xff]
  %v42 = vld [vmem:[#allocation2 + $0x48] sm:$0xff]
  %v43 = vld [vmem:[#allocation2 + $0x50] sm:$0xff]
  %v44 = vld [vmem:[#allocation2 + $0x58] sm:$0xff]
  %v45 = vld [vmem:[%s0] sm:$0xf]
  %v46 = vld [vmem:[%s0 + $0x4] sm:$0xf]
  %v47 = vld [vmem:[%s0 + $0x8] sm:$0xf]
  %v48 = vld [vmem:[%s0 + $0xc] sm:$0xf]
  %v49 = vld [vmem:[%s1] sm:$0xff]
  %v50 = vld [vmem:[%s1 + $0x8] sm:$0xf]
  %v51 = vld [vmem:[%s1 + $0xc] sm:$0xff]
  %v52 = vld [vmem:[%s1 + $0x14] sm:$0xf]
  %v53 = vld [vmem:[%s1 + $0x18] sm:$0xff]
  %v54 = vld [vmem:[%s1 + $0x20] sm:$0xf]
  %v55 = vld [vmem:[%s1 + $0x24] sm:$0xff]
  %v56 = vld [vmem:[%s1 + $0x2c] sm:$0xf]
  %v57 = vld [vmem:[%s1 + $0x30] sm:$0xff]
  %v58 = vld [vmem:[%s1 + $0x38] sm:$0xf]
  %v59 = vld [vmem:[%s1 + $0x3c] sm:$0xff]
  %v60 = vld [vmem:[%s1 + $0x44] sm:$0xf]
  %v61 = vld [vmem:[%s1 + $0x48] sm:$0xff]
  %v62 = vld [vmem:[%s1 + $0x50] sm:$0xf]
  %v63 = vld [vmem:[%s1 + $0x54] sm:$0xff]
  %v64 = vld [vmem:[%s1 + $0x5c] sm:$0xf]
  %v65 = vld [vmem:[%s1 + $0x60] sm:$0xff]
  %v66 = vld [vmem:[%s1 + $0x68] sm:$0xf]
  %v67 = vld [vmem:[%s1 + $0x6c] sm:$0xff]
  %v68 = vld [vmem:[%s1 + $0x74] sm:$0xf]
  %v69 = vld [vmem:[%s1 + $0x78] sm:$0xff]
  %v70 = vld [vmem:[%s1 + $0x80] sm:$0xf]
  %v71 = vld [vmem:[%s1 + $0x84] sm:$0xff]
  %v72 = vld [vmem:[%s1 + $0x8c] sm:$0xf]
  %v73 = vld [vmem:[%s1 + $0x90] sm:$0xff]
  %v74 = vld [vmem:[%s1 + $0x98] sm:$0xf]
  %v75 = vld [vmem:[%s1 + $0x9c] sm:$0xff]
  %v76 = vld [vmem:[%s1 + $0xa4] sm:$0xf]
  %v77 = vld [vmem:[%s1 + $0xa8] sm:$0xff]
  %v78 = vld [vmem:[%s1 + $0xb0] sm:$0xf]
  %v79 = vld [vmem:[%s1 + $0xb4] sm:$0xff]
  %v80 = vld [vmem:[%s1 + $0xbc] sm:$0xf]
  %v85 = vunpack.c.l.b16 %v45
  %v86 = vunpack.c.l.b16 %v46
  %v87 = vunpack.c.l.b16 %v47
  %v88 = vunpack.c.l.b16 %v48
  %v89 = vpack.c.b16 %v86, %v85
  %v90 = vpack.c.b16 %v88, %v87
  %v125 = vunpack.c.l.b16 %v49
  %v126 = vunpack.c.h.b16 %v49
  %v127 = vunpack.c.l.b16 %v50
  %v128 = vunpack.c.l.b16 %v51
  %v129 = vunpack.c.h.b16 %v51
  %v130 = vunpack.c.l.b16 %v52
  %v131 = vunpack.c.l.b16 %v53
  %v132 = vunpack.c.h.b16 %v53
  %v133 = vunpack.c.l.b16 %v54
  %v134 = vunpack.c.l.b16 %v55
  %v135 = vunpack.c.h.b16 %v55
  %v136 = vunpack.c.l.b16 %v56
  %v137 = vunpack.c.l.b16 %v57
  %v138 = vunpack.c.h.b16 %v57
  %v139 = vunpack.c.l.b16 %v58
  %v140 = vunpack.c.l.b16 %v59
  %v141 = vunpack.c.h.b16 %v59
  %v142 = vunpack.c.l.b16 %v60
  %v143 = vunpack.c.l.b16 %v61
  %v144 = vunpack.c.h.b16 %v61
  %v145 = vunpack.c.l.b16 %v62
  %v146 = vunpack.c.l.b16 %v63
  %v147 = vunpack.c.h.b16 %v63
  %v148 = vunpack.c.l.b16 %v64
  %v149 = vunpack.c.l.b16 %v65
  %v150 = vunpack.c.h.b16 %v65
  %v151 = vunpack.c.l.b16 %v66
  %v152 = vunpack.c.l.b16 %v67
  %v153 = vunpack.c.h.b16 %v67
  %v154 = vunpack.c.l.b16 %v68
  %v155 = vunpack.c.l.b16 %v69
  %v156 = vunpack.c.h.b16 %v69
  %v157 = vunpack.c.l.b16 %v70
  %v158 = vunpack.c.l.b16 %v71
  %v159 = vunpack.c.h.b16 %v71
  %v160 = vunpack.c.l.b16 %v72
  %v161 = vunpack.c.l.b16 %v73
  %v162 = vunpack.c.h.b16 %v73
  %v163 = vunpack.c.l.b16 %v74
  %v164 = vunpack.c.l.b16 %v75
  %v165 = vunpack.c.h.b16 %v75
  %v166 = vunpack.c.l.b16 %v76
  %v167 = vunpack.c.l.b16 %v77
  %v168 = vunpack.c.h.b16 %v77
  %v169 = vunpack.c.l.b16 %v78
  %v170 = vunpack.c.l.b16 %v79
  %v171 = vunpack.c.h.b16 %v79
  %v172 = vunpack.c.l.b16 %v80
  %v173 = vpack.c.b16 %v128, %v125
  %v174 = vpack.c.b16 %v129, %v126
  %v175 = vpack.c.b16 %v130, %v127
  %v176 = vpack.c.b16 %v134, %v131
  %v177 = vpack.c.b16 %v135, %v132
  %v178 = vpack.c.b16 %v136, %v133
  %v179 = vpack.c.b16 %v140, %v137
  %v180 = vpack.c.b16 %v141, %v138
  %v181 = vpack.c.b16 %v142, %v139
  %v182 = vpack.c.b16 %v146, %v143
  %v183 = vpack.c.b16 %v147, %v144
  %v184 = vpack.c.b16 %v148, %v145
  %v185 = vpack.c.b16 %v152, %v149
  %v186 = vpack.c.b16 %v153, %v150
  %v187 = vpack.c.b16 %v154, %v151
  %v188 = vpack.c.b16 %v158, %v155
  %v189 = vpack.c.b16 %v159, %v156
  %v190 = vpack.c.b16 %v160, %v157
  %v191 = vpack.c.b16 %v164, %v161
  %v192 = vpack.c.b16 %v165, %v162
  %v193 = vpack.c.b16 %v166, %v163
  %v194 = vpack.c.b16 %v170, %v167
  %v195 = vpack.c.b16 %v171, %v168
  %v196 = vpack.c.b16 %v172, %v169
  %221 = vmatpush.bf16.msra.mxu0 %v194
  %222 = vmatpush.bf16.msra.mxu0 %v191
  %223 = vmatpush.bf16.msra.mxu0 %v188
  %224 = vmatpush.bf16.msra.mxu0 %v185
  %225 = vmatpush.bf16.msra.mxu0 %v182
  %226 = vmatpush.bf16.msra.mxu0 %v179
  %227 = vmatpush.bf16.msra.mxu0 %v176
  %228 = vmatpush.bf16.msra.mxu0 %v173
  %229 = vmatmul.bf16.gmra.mxu0 %v89
  %v230 = vpop.f32.mrf.mxu0
  %v231 = vadd.f32 0.0, %v230
  %v232 = vpop.f32.mrf.mxu0
  %v233 = vadd.f32 0.0, %v232
  %234 = vmatmul.bf16.gmra.mxu0 %v90
  %v235 = vpop.f32.mrf.mxu0
  %v236 = vadd.f32 0.0, %v235
  %v237 = vpop.f32.mrf.mxu0
  %v238 = vadd.f32 0.0, %v237
  %239 = vdwg.mxu0
  %240 = vmatpush.bf16.msra.mxu0 %v195
  %241 = vmatpush.bf16.msra.mxu0 %v192
  %242 = vmatpush.bf16.msra.mxu0 %v189
  %243 = vmatpush.bf16.msra.mxu0 %v186
  %244 = vmatpush.bf16.msra.mxu0 %v183
  %245 = vmatpush.bf16.msra.mxu0 %v180
  %246 = vmatpush.bf16.msra.mxu0 %v177
  %247 = vmatpush.bf16.msra.mxu0 %v174
  %248 = vmatmul.bf16.gmra.mxu0 %v89
  %v249 = vpop.f32.mrf.mxu0
  %v250 = vadd.f32 0.0, %v249
  %v251 = vpop.f32.mrf.mxu0
  %v252 = vadd.f32 0.0, %v251
  %253 = vmatmul.bf16.gmra.mxu0 %v90
  %v254 = vpop.f32.mrf.mxu0
  %v255 = vadd.f32 0.0, %v254
  %v256 = vpop.f32.mrf.mxu0
  %v257 = vadd.f32 0.0, %v256
  %258 = vdwg.mxu0
  %259 = vmatpush.bf16.msra.mxu0 %v196
  %260 = vmatpush.bf16.msra.mxu0 %v193
  %261 = vmatpush.bf16.msra.mxu0 %v190
  %262 = vmatpush.bf16.msra.mxu0 %v187
  %263 = vmatpush.bf16.msra.mxu0 %v184
  %264 = vmatpush.bf16.msra.mxu0 %v181
  %265 = vmatpush.bf16.msra.mxu0 %v178
  %266 = vmatpush.bf16.msra.mxu0 %v175
  %267 = vmatmul.bf16.gmra.mxu0 %v89
  %v268 = vpop.f32.mrf.mxu0
  %v269 = vadd.f32 0.0, %v268
  %v270 = vpop.f32.mrf.mxu0
  %v271 = vadd.f32 0.0, %v270
  %272 = vmatmul.bf16.gmra.mxu0 %v90
  %v273 = vpop.f32.mrf.mxu0
  %v274 = vadd.f32 0.0, %v273
  %v275 = vpop.f32.mrf.mxu0
  %v276 = vadd.f32 0.0, %v275
  %277 = vdwg.mxu0
  %v278 = vadd.f32 %v33, %v231
  %v279 = vadd.f32 %v34, %v250
  %v280 = vadd.f32 %v35, %v269
  %v281 = vadd.f32 %v36, %v233
  %v282 = vadd.f32 %v37, %v252
  %v283 = vadd.f32 %v38, %v271
  %v284 = vadd.f32 %v39, %v236
  %v285 = vadd.f32 %v40, %v255
  %v286 = vadd.f32 %v41, %v274
  %v287 = vadd.f32 %v42, %v238
  %v288 = vadd.f32 %v43, %v257
  %v289 = vadd.f32 %v44, %v276
  %290 = vst [vmem:[#allocation2] sm:$0xff] %v278
  %291 = vst [vmem:[#allocation2 + $0x8] sm:$0xff] %v279
  %292 = vst [vmem:[#allocation2 + $0x10] sm:$0xff] %v280
  %293 = vst [vmem:[#allocation2 + $0x18] sm:$0xff] %v281
  %294 = vst [vmem:[#allocation2 + $0x20] sm:$0xff] %v282
  %295 = vst [vmem:[#allocation2 + $0x28] sm:$0xff] %v283
  %296 = vst [vmem:[#allocation2 + $0x30] sm:$0xff] %v284
  %297 = vst [vmem:[#allocation2 + $0x38] sm:$0xff] %v285
  %298 = vst [vmem:[#allocation2 + $0x40] sm:$0xff] %v286
  %299 = vst [vmem:[#allocation2 + $0x48] sm:$0xff] %v287
  %300 = vst [vmem:[#allocation2 + $0x50] sm:$0xff] %v288
  %301 = vst [vmem:[#allocation2 + $0x58] sm:$0xff] %v289
  // Predicated region
  $region22: #{transformer_block.10} parent=0 // pred_check
    %p302 = pneg %p17
  $region23: #{transformer_block.10} parent=0 // pred_check_branch
    %304 = sbr.rel (%p302) target = $region25
  $region24: #{transformer_block.10} parent=0 // pred_region
    %v305 = vld [vmem:[#allocation2] sm:$0xff]
    %v306 = vld [vmem:[#allocation2 + $0x8] sm:$0xff]
    %v307 = vld [vmem:[#allocation2 + $0x10] sm:$0xff]
    %v308 = vld [vmem:[#allocation2 + $0x18] sm:$0xff]
    %v309 = vld [vmem:[#allocation2 + $0x20] sm:$0xff]
    %v310 = vld [vmem:[#allocation2 + $0x28] sm:$0xff]
    %v311 = vld [vmem:[#allocation2 + $0x30] sm:$0xff]
    %v312 = vld [vmem:[#allocation2 + $0x38] sm:$0xff]
    %v313 = vld [vmem:[#allocation2 + $0x40] sm:$0xff]
    %v314 = vld [vmem:[#allocation2 + $0x48] sm:$0xff]
    %v315 = vld [vmem:[#allocation2 + $0x50] sm:$0xff]
    %v316 = vld [vmem:[#allocation2 + $0x58] sm:$0xff]
    %v317 = vld [vmem:[%s2] sm:$0xff]
    %v318 = vld [vmem:[%s2 + $0x8] sm:$0xff]
    %v319 = vld [vmem:[%s2 + $0x10] sm:$0xff]
    %v320 = vld [vmem:[%s2 + $0x18] sm:$0xff]
    %322 = vset.pattern.permute.xlu0 0
    %323 = vperm.xlu0 %322, %v317
    %v324 = vpop.permute.xlu0 %323
    %327 = vset.pattern.permute.xlu0 0
    %328 = vperm.xlu0 %327, %v318
    %v329 = vpop.permute.xlu0 %328
    %332 = vset.pattern.permute.xlu0 0
    %333 = vperm.xlu0 %332, %v319
    %v334 = vpop.permute.xlu0 %333
    %337 = vset.pattern.permute.xlu0 0
    %338 = vperm.xlu0 %337, %v320
    %v339 = vpop.permute.xlu0 %338
    %v341 = vmul.f32 %v305, %v324
    %v342 = vmul.f32 %v306, %v324
    %v343 = vmul.f32 %v307, %v324
    %v344 = vmul.f32 %v308, %v329
    %v345 = vmul.f32 %v309, %v329
    %v346 = vmul.f32 %v310, %v329
    %v347 = vmul.f32 %v311, %v334
    %v348 = vmul.f32 %v312, %v334
    %v349 = vmul.f32 %v313, %v334
    %v350 = vmul.f32 %v314, %v339
    %v351 = vmul.f32 %v315, %v339
    %v352 = vmul.f32 %v316, %v339
    %v353 = vld [vmem:[%s3] sm:$0x7]
    %v355 = vperm.slane %v353, 0
    %v356 = vperm.slane %v353, 1
    %v357 = vperm.slane %v353, 2
    %v361 = vmul.f32 %v341, %v355
    %v362 = vmul.f32 %v342, %v356
    %v363 = vmul.f32 %v343, %v357
    %v364 = vmul.f32 %v344, %v355
    %v365 = vmul.f32 %v345, %v356
    %v366 = vmul.f32 %v346, %v357
    %v367 = vmul.f32 %v347, %v355
    %v368 = vmul.f32 %v348, %v356
    %v369 = vmul.f32 %v349, %v357
    %v370 = vmul.f32 %v350, %v355
    %v371 = vmul.f32 %v351, %v356
    %v372 = vmul.f32 %v352, %v357
    %373 = vst [vmem:[%s4] sm:$0xff] %v361
    %374 = vst [vmem:[%s4 + $0x8] sm:$0xff] %v362
    %375 = vst [vmem:[%s4 + $0x10] sm:$0xff] %v363
    %376 = vst [vmem:[%s4 + $0x18] sm:$0xff] %v364
    %377 = vst [vmem:[%s4 + $0x20] sm:$0xff] %v365
    %378 = vst [vmem:[%s4 + $0x28] sm:$0xff] %v366
    %379 = vst [vmem:[%s4 + $0x30] sm:$0xff] %v367
    %380 = vst [vmem:[%s4 + $0x38] sm:$0xff] %v368
    %381 = vst [vmem:[%s4 + $0x40] sm:$0xff] %v369
    %382 = vst [vmem:[%s4 + $0x48] sm:$0xff] %v370
    %383 = vst [vmem:[%s4 + $0x50] sm:$0xff] %v371
    %384 = vst [vmem:[%s4 + $0x58] sm:$0xff] %v372
  $region25: #{transformer_block.10} parent=0 // pred_fallthru
    _
  // Predicated region
  $region26: #{transformer_block.10} parent=0 // pred_check
    _
  $region27: #{transformer_block.10} parent=0 // pred_check_branch
    %386 = sbr.rel (0) target = $region29
  $region28: #{transformer_block.10} parent=0 // pred_region
    _
  $region29: #{transformer_block.10} parent=0 // pred_fallthru
    _
  // Predicated region
  $region30: #{transformer_block.10} parent=0 // pred_check
    _
  $region31: #{transformer_block.10} parent=0 // pred_check_branch
    %388 = sbr.rel (0) target = $region33
  $region32: #{transformer_block.10} parent=0 // pred_region
    _
  $region33: #{transformer_block.10} parent=0 // pred_fallthru
    _

// kernel: transformer_block.11
$region0: #{transformer_block.11}
  #allocation0 [shape = 'u32[]', space=smem, size = 0x4, offset = 0x4, fixed_abs, tag = 'smem constant byte address 0x4 - core index']
  #allocation1 [shape = 'u32[72,128]{1,0:T(1,128)}', space=vmem, size = 0x9000, scoped, tag = 'internal scratch']
  #allocation2 [shape = 'f32[4,16,1]{2,1,0:T(8,128)}', space=vmem, size = 0x8000, scoped, tag = 'scratch operand']
  #allocation3 [shape = 'f32[4,16,1]{2,1,0:T(8,128)}', space=vmem, size = 0x8000, scoped, tag = 'scratch operand']
  #allocation4 [shape = 'f32[4,16,32]{2,1,0:T(8,128)}', space=vmem, size = 0x8000, scoped, tag = 'scratch operand']
  %s0 = inlined_call_operand.vmem [shape: f32[2,16,384], index: 0, kind: input, shape index: {}, may-alias: {0,1,2}]
  %s1 = inlined_call_operand.vmem [shape: f32[2,16,384], index: 1, kind: input, shape index: {}, may-alias: {0,1,2}]
  %s2 = inlined_call_operand.vmem [shape: f32[2,16,384], index: 2, kind: input, shape index: {}, may-alias: {0,1,2}]
  %s3 = inlined_call_operand.vmem [shape: f32[16,16], index: 3, kind: input, shape index: {}, may-alias: {3,5}]
  %s4 = inlined_call_operand.vmem [shape: f32[16,16], index: 4, kind: input, shape index: {}, may-alias: {4,6}]
  %s5 = inlined_call_operand.vmem [shape: f32[16,16], index: 5, kind: input, shape index: {}, may-alias: {3,5}]
  %s6 = inlined_call_operand.vmem [shape: f32[16,16], index: 6, kind: input, shape index: {}, may-alias: {4,6}]
  %s7 = inlined_call_operand.vmem [shape: f32[2,16,128], index: 7, kind: output, shape index: {}]
  %s8 = sld [smem:[#allocation0]]
  $region187: #{transformer_block.11} parent=0
    _
  %s10 = ssub.s32 1, %s8
  %s11 = scalar_select 0, %s10, %s8
  $region1: #{transformer_block.11} parent=0
    #allocation5 [shape = 'u8[16384]{0}', space=vmem, size = 0x4000, scoped, tag = 'input window, operand 0']
    #allocation6 [shape = 'u8[16384]{0}', space=vmem, size = 0x4000, scoped, tag = 'input window, operand 1']
    #allocation7 [shape = 'u8[16384]{0}', space=vmem, size = 0x4000, scoped, tag = 'input window, operand 2']
    loop: start=0, step=1, limit=4
    $region2: #{transformer_block.11} parent=1 // loop_pre_header
      _
    $region3: #{transformer_block.11} parent=1 // loop_header
      %s13 = sphi 0, %s17
      %p14 = scmp.ge.s32.totalorder %s13, 4
      %s20 = sphi 0, %s39
      %s21 = sphi 0, %s35
      %s22 = sphi 0, %s31
      %s23 = sphi 0, %s20
      %s24 = sphi 0, %s21
      %s25 = sphi 0, %s22
      %s26 = sphi 0, %s23
      %s27 = sphi 0, %s24
      %s28 = sphi 0, %s25
      %s44 = sphi 0, %s46
      %s47 = sphi 0, %s44
      %s48 = sphi 0, %s47
      %s64 = sphi 0, %s48
      %s72 = sphi 0, %s74
      %s75 = sphi 0, %s72
      %s76 = sphi 0, %s75
      %s92 = sphi 0, %s76
      %s100 = sphi 0, %s102
      %s103 = sphi 0, %s100
      %s104 = sphi 0, %s103
      %s120 = sphi 0, %s104
      %s126 = sphi 0, %s128
      %s129 = sphi 0, %s126
      %s130 = sphi 0, %s129
      %s146 = sphi 0, %s130
      %s152 = sphi 0, %s154
      %s155 = sphi 0, %s152
      %s156 = sphi 0, %s155
      %s172 = sphi 0, %s156
      %s178 = sphi 0, %s180
      %s181 = sphi 0, %s178
      %s182 = sphi 0, %s181
      %s198 = sphi 0, %s182
      %s204 = sphi 0, %s206
      %s207 = sphi 0, %s204
      %s208 = sphi 0, %s207
      %s224 = sphi 0, %s208
      %s232 = sphi 0, %s234
      %s235 = sphi 0, %s232
      %s236 = sphi 0, %s235
      %s252 = sphi 0, %s236
    $region4: #{transformer_block.11} parent=1 // loop_header_branch
      %16 = sbr.rel (%p14) target = $region8
    $region5: #{transformer_block.11} parent=1 // loop_body
      %s18 = ssub.s32 %s13, 1
      %s19 = ssub.s32 %s13, 2
      %s29 = sadd.s32 1, %s22
      %p30 = scmp.ge.s32.totalorder %s29, 1
      %s31 = scalar_select %p30, 0, %s29
      %s32 = sadd.s32 1, %s21
      %s33 = scalar_select %p30, %s32, %s21
      %p34 = scmp.ge.s32.totalorder %s33, 1
      %s35 = scalar_select %p34, 0, %s33
      %s36 = sadd.s32 1, %s20
      %s37 = scalar_select %p34, %s36, %s20
      %p38 = scmp.ge.s32.totalorder %s37, 2
      %s39 = scalar_select %p38, 0, %s37
      %s40 = ssub.s32 %s20, %s39
      %s41 = ssub.s32 %s21, %s35
      %s42 = sor.u32 %s40, %s41
      %p43 = scmp.eq.s32.totalorder %s42, 0
      %s45 = sadd.s32 %s44, 1
      %s46 = scalar_select %p43, %s44, %s45
      %p49 = pneg %p43
      %p50 = scmp.eq.s32.totalorder %s13, 1
      %p51 = por %p49, %p50
      %p52 = scmp.ne.s32.totalorder %s44, %s47
      %p53 = scmp.eq.s32.totalorder %s13, 0
      %p54 = por %p52, %p53
      %p55 = scmp.ne.s32.totalorder %s44, %s47
      %p56 = scmp.eq.s32.totalorder %s18, 1
      %p57 = por %p55, %p56
      %p58 = scmp.ne.s32.totalorder %s47, %s48
      %p59 = scmp.eq.s32.totalorder %s18, 0
      %p60 = por %p58, %p59
      %p61 = scmp.ne.s32.totalorder %s47, %s48
      %p62 = scmp.eq.s32.totalorder %s19, 1
      %p63 = por %p61, %p62
      %p65 = scmp.ne.s32.totalorder %s48, %s64
      %p66 = scmp.eq.s32.totalorder %s19, 0
      %p67 = por %p65, %p66
      %s68 = ssub.s32 %s20, %s39
      %s69 = ssub.s32 %s22, %s31
      %s70 = sor.u32 %s68, %s69
      %p71 = scmp.eq.s32.totalorder %s70, 0
      %s73 = sadd.s32 %s72, 1
      %s74 = scalar_select %p71, %s72, %s73
      %p77 = pneg %p71
      %p78 = scmp.eq.s32.totalorder %s13, 1
      %p79 = por %p77, %p78
      %p80 = scmp.ne.s32.totalorder %s72, %s75
      %p81 = scmp.eq.s32.totalorder %s13, 0
      %p82 = por %p80, %p81
      %p83 = scmp.ne.s32.totalorder %s72, %s75
      %p84 = scmp.eq.s32.totalorder %s18, 1
      %p85 = por %p83, %p84
      %p86 = scmp.ne.s32.totalorder %s75, %s76
      %p87 = scmp.eq.s32.totalorder %s18, 0
      %p88 = por %p86, %p87
      %p89 = scmp.ne.s32.totalorder %s75, %s76
      %p90 = scmp.eq.s32.totalorder %s19, 1
      %p91 = por %p89, %p90
      %p93 = scmp.ne.s32.totalorder %s76, %s92
      %p94 = scmp.eq.s32.totalorder %s19, 0
      %p95 = por %p93, %p94
      %s96 = ssub.s32 %s20, %s39
      %s97 = ssub.s32 %s22, %s31
      %s98 = sor.u32 %s96, %s97
      %p99 = scmp.eq.s32.totalorder %s98, 0
      %s101 = sadd.s32 %s100, 1
      %s102 = scalar_select %p99, %s100, %s101
      %p105 = pneg %p99
      %p106 = scmp.eq.s32.totalorder %s13, 1
      %p107 = por %p105, %p106
      %p108 = scmp.ne.s32.totalorder %s100, %s103
      %p109 = scmp.eq.s32.totalorder %s13, 0
      %p110 = por %p108, %p109
      %p111 = scmp.ne.s32.totalorder %s100, %s103
      %p112 = scmp.eq.s32.totalorder %s18, 1
      %p113 = por %p111, %p112
      %p114 = scmp.ne.s32.totalorder %s103, %s104
      %p115 = scmp.eq.s32.totalorder %s18, 0
      %p116 = por %p114, %p115
      %p117 = scmp.ne.s32.totalorder %s103, %s104
      %p118 = scmp.eq.s32.totalorder %s19, 1
      %p119 = por %p117, %p118
      %p121 = scmp.ne.s32.totalorder %s104, %s120
      %p122 = scmp.eq.s32.totalorder %s19, 0
      %p123 = por %p121, %p122
      %s124 = ssub.s32 %s21, %s35
      %p125 = scmp.eq.s32.totalorder %s124, 0
      %s127 = sadd.s32 %s126, 1
      %s128 = scalar_select %p125, %s126, %s127
      %p131 = pneg %p125
      %p132 = scmp.eq.s32.totalorder %s13, 1
      %p133 = por %p131, %p132
      %p134 = scmp.ne.s32.totalorder %s126, %s129
      %p135 = scmp.eq.s32.totalorder %s13, 0
      %p136 = por %p134, %p135
      %p137 = scmp.ne.s32.totalorder %s126, %s129
      %p138 = scmp.eq.s32.totalorder %s18, 1
      %p139 = por %p137, %p138
      %p140 = scmp.ne.s32.totalorder %s129, %s130
      %p141 = scmp.eq.s32.totalorder %s18, 0
      %p142 = por %p140, %p141
      %p143 = scmp.ne.s32.totalorder %s129, %s130
      %p144 = scmp.eq.s32.totalorder %s19, 1
      %p145 = por %p143, %p144
      %p147 = scmp.ne.s32.totalorder %s130, %s146
      %p148 = scmp.eq.s32.totalorder %s19, 0
      %p149 = por %p147, %p148
      %s150 = ssub.s32 %s21, %s35
      %p151 = scmp.eq.s32.totalorder %s150, 0
      %s153 = sadd.s32 %s152, 1
      %s154 = scalar_select %p151, %s152, %s153
      %p157 = pneg %p151
      %p158 = scmp.eq.s32.totalorder %s13, 1
      %p159 = por %p157, %p158
      %p160 = scmp.ne.s32.totalorder %s152, %s155
      %p161 = scmp.eq.s32.totalorder %s13, 0
      %p162 = por %p160, %p161
      %p163 = scmp.ne.s32.totalorder %s152, %s155
      %p164 = scmp.eq.s32.totalorder %s18, 1
      %p165 = por %p163, %p164
      %p166 = scmp.ne.s32.totalorder %s155, %s156
      %p167 = scmp.eq.s32.totalorder %s18, 0
      %p168 = por %p166, %p167
      %p169 = scmp.ne.s32.totalorder %s155, %s156
      %p170 = scmp.eq.s32.totalorder %s19, 1
      %p171 = por %p169, %p170
      %p173 = scmp.ne.s32.totalorder %s156, %s172
      %p174 = scmp.eq.s32.totalorder %s19, 0
      %p175 = por %p173, %p174
      %s176 = ssub.s32 %s22, %s31
      %p177 = scmp.eq.s32.totalorder %s176, 0
      %s179 = sadd.s32 %s178, 1
      %s180 = scalar_select %p177, %s178, %s179
      %p183 = pneg %p177
      %p184 = scmp.eq.s32.totalorder %s13, 1
      %p185 = por %p183, %p184
      %p186 = scmp.ne.s32.totalorder %s178, %s181
      %p187 = scmp.eq.s32.totalorder %s13, 0
      %p188 = por %p186, %p187
      %p189 = scmp.ne.s32.totalorder %s178, %s181
      %p190 = scmp.eq.s32.totalorder %s18, 1
      %p191 = por %p189, %p190
      %p192 = scmp.ne.s32.totalorder %s181, %s182
      %p193 = scmp.eq.s32.totalorder %s18, 0
      %p194 = por %p192, %p193
      %p195 = scmp.ne.s32.totalorder %s181, %s182
      %p196 = scmp.eq.s32.totalorder %s19, 1
      %p197 = por %p195, %p196
      %p199 = scmp.ne.s32.totalorder %s182, %s198
      %p200 = scmp.eq.s32.totalorder %s19, 0
      %p201 = por %p199, %p200
      %s202 = ssub.s32 %s22, %s31
      %p203 = scmp.eq.s32.totalorder %s202, 0
      %s205 = sadd.s32 %s204, 1
      %s206 = scalar_select %p203, %s204, %s205
      %p209 = pneg %p203
      %p210 = scmp.eq.s32.totalorder %s13, 1
      %p211 = por %p209, %p210
      %p212 = scmp.ne.s32.totalorder %s204, %s207
      %p213 = scmp.eq.s32.totalorder %s13, 0
      %p214 = por %p212, %p213
      %p215 = scmp.ne.s32.totalorder %s204, %s207
      %p216 = scmp.eq.s32.totalorder %s18, 1
      %p217 = por %p215, %p216
      %p218 = scmp.ne.s32.totalorder %s207, %s208
      %p219 = scmp.eq.s32.totalorder %s18, 0
      %p220 = por %p218, %p219
      %p221 = scmp.ne.s32.totalorder %s207, %s208
      %p222 = scmp.eq.s32.totalorder %s19, 1
      %p223 = por %p221, %p222
      %p225 = scmp.ne.s32.totalorder %s208, %s224
      %p226 = scmp.eq.s32.totalorder %s19, 0
      %p227 = por %p225, %p226
      %s228 = ssub.s32 %s20, %s39
      %s229 = ssub.s32 %s21, %s35
      %s230 = sor.u32 %s228, %s229
      %p231 = scmp.eq.s32.totalorder %s230, 0
      %s233 = sadd.s32 %s232, 1
      %s234 = scalar_select %p231, %s232, %s233
      %p237 = pneg %p231
      %p238 = scmp.eq.s32.totalorder %s13, 1
      %p239 = por %p237, %p238
      %p240 = scmp.ne.s32.totalorder %s232, %s235
      %p241 = scmp.eq.s32.totalorder %s13, 0
      %p242 = por %p240, %p241
      %p243 = scmp.ne.s32.totalorder %s232, %s235
      %p244 = scmp.eq.s32.totalorder %s18, 1
      %p245 = por %p243, %p244
      %p246 = scmp.ne.s32.totalorder %s235, %s236
      %p247 = scmp.eq.s32.totalorder %s18, 0
      %p248 = por %p246, %p247
      %p249 = scmp.ne.s32.totalorder %s235, %s236
      %p250 = scmp.eq.s32.totalorder %s19, 1
      %p251 = por %p249, %p250
      %p253 = scmp.ne.s32.totalorder %s236, %s252
      %p254 = scmp.eq.s32.totalorder %s19, 0
      %p255 = por %p253, %p254
      %p256 = scmp.le.s32.totalorder 1, %s13
      %p257 = scmp.lt.s32.totalorder %s13, 3
      %p258 = pnand %p256, %p257
      %p259 = pneg %p258
      // Predicated region
      $region9: #{transformer_block.11} parent=5 // pred_check
        _
      $region10: #{transformer_block.11} parent=5 // pred_check_branch
        %261 = sbr.rel (%p258) target = $region12
      $region11: #{transformer_block.11} parent=5 // pred_region
        %s262 = ssub.s32 %s13, 1
        // Predicated region
        $region13: #{transformer_block.11} parent=11 // pred_check
          %p263 = pneg %p142
        $region14: #{transformer_block.11} parent=11 // pred_check_branch
          %265 = sbr.rel (%p263) target = $region16
        $region15: #{transformer_block.11} parent=11 // pred_region
          %s266 = smul.u32 2, %s24
          %p267 = scmp.lt.s32.totalorder %s266, 1
          %s268 = scalar_select %p267, %s266, 1
          %s269 = smul.addr %s268, 8
          %s270 = scalar_lea.vmem %s3, %s269
          %s271 = smul.u32 2, %s24
        $region16: #{transformer_block.11} parent=11 // pred_fallthru
          _
        // Predicated region
        $region17: #{transformer_block.11} parent=11 // pred_check
          %p272 = pneg %p168
        $region18: #{transformer_block.11} parent=11 // pred_check_branch
          %274 = sbr.rel (%p272) target = $region20
        $region19: #{transformer_block.11} parent=11 // pred_region
          %s275 = smul.u32 2, %s24
          %p276 = scmp.lt.s32.totalorder %s275, 1
          %s277 = scalar_select %p276, %s275, 1
          %s278 = smul.addr %s277, 8
          %s279 = scalar_lea.vmem %s4, %s278
          %s280 = smul.u32 2, %s24
        $region20: #{transformer_block.11} parent=11 // pred_fallthru
          _
        // Predicated region
        $region21: #{transformer_block.11} parent=11 // pred_check
          %p281 = pneg %p194
        $region22: #{transformer_block.11} parent=11 // pred_check_branch
          %283 = sbr.rel (%p281) target = $region24
        $region23: #{transformer_block.11} parent=11 // pred_region
          %s284 = smul.u32 2, %s25
          %p285 = scmp.lt.s32.totalorder %s284, 1
          %s286 = scalar_select %p285, %s284, 1
          %s287 = smul.addr %s286, 8
          %s288 = scalar_lea.vmem %s5, %s287
          %s289 = smul.u32 2, %s25
        $region24: #{transformer_block.11} parent=11 // pred_fallthru
          _
        // Predicated region
        $region25: #{transformer_block.11} parent=11 // pred_check
          %p290 = pneg %p220
        $region26: #{transformer_block.11} parent=11 // pred_check_branch
          %292 = sbr.rel (%p290) target = $region28
        $region27: #{transformer_block.11} parent=11 // pred_region
          %s293 = smul.u32 2, %s25
          %p294 = scmp.lt.s32.totalorder %s293, 1
          %s295 = scalar_select %p294, %s293, 1
          %s296 = smul.addr %s295, 8
          %s297 = scalar_lea.vmem %s6, %s296
          %s298 = smul.u32 2, %s25
        $region28: #{transformer_block.11} parent=11 // pred_fallthru
          _
      $region12: #{transformer_block.11} parent=5 // pred_fallthru
        _
      %p299 = scmp.lt.s32.totalorder %s13, 2
      // Predicated region
      $region29: #{transformer_block.11} parent=5 // pred_check
        %p300 = pneg %p299
      $region30: #{transformer_block.11} parent=5 // pred_check_branch
        %302 = sbr.rel (%p300) target = $region32
      $region31: #{transformer_block.11} parent=5 // pred_region
        // Predicated region
        $region33: #{transformer_block.11} parent=31 // pred_check
          %p303 = pneg %p54
        $region34: #{transformer_block.11} parent=31 // pred_check_branch
          %305 = sbr.rel (%p303) target = $region36
        $region35: #{transformer_block.11} parent=31 // pred_region
          %s306 = sand.u32 %s44, 1
          %s307 = sand.u32 %s44, 1
          %s308 = smul.addr %s307, 16
          %s309 = scalar_lea.vmem [#allocation5], %s308
          %s310 = smul.u32 2, %s21
          %s311 = smul.addr %s310, 3
          %s312 = smul.addr %s20, 6
          %s313 = sadd.s32 %s311, %s312
          %s314 = smul.addr %s313, 8
          %s315 = scalar_lea.vmem %s0, %s314
          // Predicated region
          $region37: #{transformer_block.11} parent=35 // pred_check
            _
          $region38: #{transformer_block.11} parent=35 // pred_check_branch
            %317 = sbr.rel (0) target = $region40
          $region39: #{transformer_block.11} parent=35 // pred_region
            // Predicated region
            $region41: #{transformer_block.11} parent=39 // pred_check
              _
            $region42: #{transformer_block.11} parent=39 // pred_check_branch
              %319 = sbr.rel (0) target = $region44
            $region43: #{transformer_block.11} parent=39 // pred_region
              // Predicated region
              $region56: #{transformer_block.11} parent=43 // pred_check
                _
              $region57: #{transformer_block.11} parent=43 // pred_check_branch
                %337 = sbr.rel (0) target = $region59
              $region58: #{transformer_block.11} parent=43 // pred_region
                loop: start=0, step=1, limit=1
                $region60: #{transformer_block.11} parent=58 // loop_pre_header
                  _
                $region61: #{transformer_block.11} parent=58 // loop_header
                  %s339 = sphi 0, %s343
                  %p340 = scmp.ge.s32.totalorder %s339, 1
                  %s344 = sphi %s315, %s315
                  %s345 = sphi %s309, %s309
                $region62: #{transformer_block.11} parent=58 // loop_header_branch
                  %342 = sbr.rel (%p340) target = $region66
                $region63: #{transformer_block.11} parent=58 // loop_body
                  %v346 = vld [vmem:[%s344] sm:$0xff]
                  %347 = vst [vmem:[%s345] sm:$0xff] %v346
                  %v348 = vld [vmem:[%s344 + $0x18] sm:$0xff]
                  %349 = vst [vmem:[%s345 + $0x8] sm:$0xff] %v348
                $region64: #{transformer_block.11} parent=58 // loop_footer
                  %s343 = sadd.s32 1, %s339
                $region65: #{transformer_block.11} parent=58 // loop_footer_branch
                  %338 = sbr.rel target = $region61
                $region66: #{transformer_block.11} parent=58 // loop_exit
                  _
              $region59: #{transformer_block.11} parent=43 // pred_fallthru
                _
              // Predicated region
              $region67: #{transformer_block.11} parent=43 // pred_check
                _
              $region68: #{transformer_block.11} parent=43 // pred_check_branch
                %351 = sbr.rel target = $region70
              $region69: #{transformer_block.11} parent=43 // pred_region
                _
              $region70: #{transformer_block.11} parent=43 // pred_fallthru
                _
            $region44: #{transformer_block.11} parent=39 // pred_fallthru
              _
            // Predicated region
            $region45: #{transformer_block.11} parent=39 // pred_check
              _
            $region46: #{transformer_block.11} parent=39 // pred_check_branch
              %321 = sbr.rel target = $region48
            $region47: #{transformer_block.11} parent=39 // pred_region
              %s323 = ssub.s32 256, 1
              loop: start=0, step=1, limit=1
              $region49: #{transformer_block.11} parent=47 // loop_pre_header
                _
              $region50: #{transformer_block.11} parent=47 // loop_header
                %s325 = sphi 0, %s329
                %p326 = scmp.ge.s32.totalorder %s325, 1
                %s330 = sphi %s315, %s315
                %s331 = sphi %s309, %s309
              $region51: #{transformer_block.11} parent=47 // loop_header_branch
                %328 = sbr.rel (%p326) target = $region55
              $region52: #{transformer_block.11} parent=47 // loop_body
                %v332 = vld [vmem:[%s330] sm:%s323]
                %333 = vst [vmem:[%s331] sm:%s323] %v332
                %v334 = vld [vmem:[%s330 + $0x18] sm:%s323]
                %335 = vst [vmem:[%s331 + $0x8] sm:%s323] %v334
              $region53: #{transformer_block.11} parent=47 // loop_footer
                %s329 = sadd.s32 1, %s325
              $region54: #{transformer_block.11} parent=47 // loop_footer_branch
                %324 = sbr.rel target = $region50
              $region55: #{transformer_block.11} parent=47 // loop_exit
                _
            $region48: #{transformer_block.11} parent=39 // pred_fallthru
              _
          $region40: #{transformer_block.11} parent=35 // pred_fallthru
            _
          %352 = vnop
        $region36: #{transformer_block.11} parent=31 // pred_fallthru
          _
        // Predicated region
        $region71: #{transformer_block.11} parent=31 // pred_check
          %p353 = pneg %p82
        $region72: #{transformer_block.11} parent=31 // pred_check_branch
          %355 = sbr.rel (%p353) target = $region74
        $region73: #{transformer_block.11} parent=31 // pred_region
          %s356 = sand.u32 %s72, 1
          %s357 = sand.u32 %s72, 1
          %s358 = smul.addr %s357, 16
          %s359 = scalar_lea.vmem [#allocation6], %s358
          %s360 = smul.u32 2, %s22
          %s361 = smul.addr %s360, 3
          %s362 = sadd.s32 1, %s361
          %s363 = smul.addr %s20, 6
          %s364 = sadd.s32 %s362, %s363
          %s365 = smul.addr %s364, 8
          %s366 = scalar_lea.vmem %s1, %s365
          // Predicated region
          $region75: #{transformer_block.11} parent=73 // pred_check
            _
          $region76: #{transformer_block.11} parent=73 // pred_check_branch
            %368 = sbr.rel (0) target = $region78
          $region77: #{transformer_block.11} parent=73 // pred_region
            // Predicated region
            $region79: #{transformer_block.11} parent=77 // pred_check
              _
            $region80: #{transformer_block.11} parent=77 // pred_check_branch
              %370 = sbr.rel (0) target = $region82
            $region81: #{transformer_block.11} parent=77 // pred_region
              // Predicated region
              $region94: #{transformer_block.11} parent=81 // pred_check
                _
              $region95: #{transformer_block.11} parent=81 // pred_check_branch
                %388 = sbr.rel (0) target = $region97
              $region96: #{transformer_block.11} parent=81 // pred_region
                loop: start=0, step=1, limit=1
                $region98: #{transformer_block.11} parent=96 // loop_pre_header
                  _
                $region99: #{transformer_block.11} parent=96 // loop_header
                  %s390 = sphi 0, %s394
                  %p391 = scmp.ge.s32.totalorder %s390, 1
                  %s395 = sphi %s366, %s366
                  %s396 = sphi %s359, %s359
                $region100: #{transformer_block.11} parent=96 // loop_header_branch
                  %393 = sbr.rel (%p391) target = $region104
                $region101: #{transformer_block.11} parent=96 // loop_body
                  %v397 = vld [vmem:[%s395] sm:$0xff]
                  %398 = vst [vmem:[%s396] sm:$0xff] %v397
                  %v399 = vld [vmem:[%s395 + $0x18] sm:$0xff]
                  %400 = vst [vmem:[%s396 + $0x8] sm:$0xff] %v399
                $region102: #{transformer_block.11} parent=96 // loop_footer
                  %s394 = sadd.s32 1, %s390
                $region103: #{transformer_block.11} parent=96 // loop_footer_branch
                  %389 = sbr.rel target = $region99
                $region104: #{transformer_block.11} parent=96 // loop_exit
                  _
              $region97: #{transformer_block.11} parent=81 // pred_fallthru
                _
              // Predicated region
              $region105: #{transformer_block.11} parent=81 // pred_check
                _
              $region106: #{transformer_block.11} parent=81 // pred_check_branch
                %402 = sbr.rel target = $region108
              $region107: #{transformer_block.11} parent=81 // pred_region
                _
              $region108: #{transformer_block.11} parent=81 // pred_fallthru
                _
            $region82: #{transformer_block.11} parent=77 // pred_fallthru
              _
            // Predicated region
            $region83: #{transformer_block.11} parent=77 // pred_check
              _
            $region84: #{transformer_block.11} parent=77 // pred_check_branch
              %372 = sbr.rel target = $region86
            $region85: #{transformer_block.11} parent=77 // pred_region
              %s374 = ssub.s32 256, 1
              loop: start=0, step=1, limit=1
              $region87: #{transformer_block.11} parent=85 // loop_pre_header
                _
              $region88: #{transformer_block.11} parent=85 // loop_header
                %s376 = sphi 0, %s380
                %p377 = scmp.ge.s32.totalorder %s376, 1
                %s381 = sphi %s366, %s366
                %s382 = sphi %s359, %s359
              $region89: #{transformer_block.11} parent=85 // loop_header_branch
                %379 = sbr.rel (%p377) target = $region93
              $region90: #{transformer_block.11} parent=85 // loop_body
                %v383 = vld [vmem:[%s381] sm:%s374]
                %384 = vst [vmem:[%s382] sm:%s374] %v383
                %v385 = vld [vmem:[%s381 + $0x18] sm:%s374]
                %386 = vst [vmem:[%s382 + $0x8] sm:%s374] %v385
              $region91: #{transformer_block.11} parent=85 // loop_footer
                %s380 = sadd.s32 1, %s376
              $region92: #{transformer_block.11} parent=85 // loop_footer_branch
                %375 = sbr.rel target = $region88
              $region93: #{transformer_block.11} parent=85 // loop_exit
                _
            $region86: #{transformer_block.11} parent=77 // pred_fallthru
              _
          $region78: #{transformer_block.11} parent=73 // pred_fallthru
            _
          %403 = vnop
        $region74: #{transformer_block.11} parent=31 // pred_fallthru
          _
        // Predicated region
        $region109: #{transformer_block.11} parent=31 // pred_check
          %p404 = pneg %p110
        $region110: #{transformer_block.11} parent=31 // pred_check_branch
          %406 = sbr.rel (%p404) target = $region112
        $region111: #{transformer_block.11} parent=31 // pred_region
          %s407 = sand.u32 %s100, 1
          %s408 = sand.u32 %s100, 1
          %s409 = smul.addr %s408, 16
          %s410 = scalar_lea.vmem [#allocation7], %s409
          %s411 = smul.u32 2, %s22
          %s412 = smul.addr %s411, 3
          %s413 = sadd.s32 2, %s412
          %s414 = smul.addr %s20, 6
          %s415 = sadd.s32 %s413, %s414
          %s416 = smul.addr %s415, 8
          %s417 = scalar_lea.vmem %s2, %s416
          // Predicated region
          $region113: #{transformer_block.11} parent=111 // pred_check
            _
          $region114: #{transformer_block.11} parent=111 // pred_check_branch
            %419 = sbr.rel (0) target = $region116
          $region115: #{transformer_block.11} parent=111 // pred_region
            // Predicated region
            $region117: #{transformer_block.11} parent=115 // pred_check
              _
            $region118: #{transformer_block.11} parent=115 // pred_check_branch
              %421 = sbr.rel (0) target = $region120
            $region119: #{transformer_block.11} parent=115 // pred_region
              // Predicated region
              $region132: #{transformer_block.11} parent=119 // pred_check
                _
              $region133: #{transformer_block.11} parent=119 // pred_check_branch
                %439 = sbr.rel (0) target = $region135
              $region134: #{transformer_block.11} parent=119 // pred_region
                loop: start=0, step=1, limit=1
                $region136: #{transformer_block.11} parent=134 // loop_pre_header
                  _
                $region137: #{transformer_block.11} parent=134 // loop_header
                  %s441 = sphi 0, %s445
                  %p442 = scmp.ge.s32.totalorder %s441, 1
                  %s446 = sphi %s417, %s417
                  %s447 = sphi %s410, %s410
                $region138: #{transformer_block.11} parent=134 // loop_header_branch
                  %444 = sbr.rel (%p442) target = $region142
                $region139: #{transformer_block.11} parent=134 // loop_body
                  %v448 = vld [vmem:[%s446] sm:$0xff]
                  %449 = vst [vmem:[%s447] sm:$0xff] %v448
                  %v450 = vld [vmem:[%s446 + $0x18] sm:$0xff]
                  %451 = vst [vmem:[%s447 + $0x8] sm:$0xff] %v450
                $region140: #{transformer_block.11} parent=134 // loop_footer
                  %s445 = sadd.s32 1, %s441
                $region141: #{transformer_block.11} parent=134 // loop_footer_branch
                  %440 = sbr.rel target = $region137
                $region142: #{transformer_block.11} parent=134 // loop_exit
                  _
              $region135: #{transformer_block.11} parent=119 // pred_fallthru
                _
              // Predicated region
              $region143: #{transformer_block.11} parent=119 // pred_check
                _
              $region144: #{transformer_block.11} parent=119 // pred_check_branch
                %453 = sbr.rel target = $region146
              $region145: #{transformer_block.11} parent=119 // pred_region
                _
              $region146: #{transformer_block.11} parent=119 // pred_fallthru
                _
            $region120: #{transformer_block.11} parent=115 // pred_fallthru
              _
            // Predicated region
            $region121: #{transformer_block.11} parent=115 // pred_check
              _
            $region122: #{transformer_block.11} parent=115 // pred_check_branch
              %423 = sbr.rel target = $region124
            $region123: #{transformer_block.11} parent=115 // pred_region
              %s425 = ssub.s32 256, 1
              loop: start=0, step=1, limit=1
              $region125: #{transformer_block.11} parent=123 // loop_pre_header
                _
              $region126: #{transformer_block.11} parent=123 // loop_header
                %s427 = sphi 0, %s431
                %p428 = scmp.ge.s32.totalorder %s427, 1
                %s432 = sphi %s417, %s417
                %s433 = sphi %s410, %s410
              $region127: #{transformer_block.11} parent=123 // loop_header_branch
                %430 = sbr.rel (%p428) target = $region131
              $region128: #{transformer_block.11} parent=123 // loop_body
                %v434 = vld [vmem:[%s432] sm:%s425]
                %435 = vst [vmem:[%s433] sm:%s425] %v434
                %v436 = vld [vmem:[%s432 + $0x18] sm:%s425]
                %437 = vst [vmem:[%s433 + $0x8] sm:%s425] %v436
              $region129: #{transformer_block.11} parent=123 // loop_footer
                %s431 = sadd.s32 1, %s427
              $region130: #{transformer_block.11} parent=123 // loop_footer_branch
                %426 = sbr.rel target = $region126
              $region131: #{transformer_block.11} parent=123 // loop_exit
                _
            $region124: #{transformer_block.11} parent=115 // pred_fallthru
              _
          $region116: #{transformer_block.11} parent=111 // pred_fallthru
            _
          %454 = vnop
        $region112: #{transformer_block.11} parent=31 // pred_fallthru
          _
      $region32: #{transformer_block.11} parent=5 // pred_fallthru
        _
      %p455 = scmp.le.s32.totalorder 1, %s13
      %p456 = scmp.lt.s32.totalorder %s13, 3
      %p457 = pnand %p455, %p456
      %p458 = pneg %p457
      // Predicated region
      $region147: #{transformer_block.11} parent=5 // pred_check
        _
      $region148: #{transformer_block.11} parent=5 // pred_check_branch
        %460 = sbr.rel (%p457) target = $region150
      $region149: #{transformer_block.11} parent=5 // pred_region
        %s461 = ssub.s32 %s13, 1
        %s462 = sand.u32 %s47, 1
        %s463 = sand.u32 %s47, 1
        %s464 = smul.addr %s463, 16
        %s465 = scalar_lea.vmem [#allocation5], %s464
        // Predicated region
        $region151: #{transformer_block.11} parent=149 // pred_check
          %p466 = pneg %p60
        $region152: #{transformer_block.11} parent=149 // pred_check_branch
          %468 = sbr.rel (%p466) target = $region154
        $region153: #{transformer_block.11} parent=149 // pred_region
          _
        $region154: #{transformer_block.11} parent=149 // pred_fallthru
          _
        %s469 = sand.u32 %s75, 1
        %s470 = sand.u32 %s75, 1
        %s471 = smul.addr %s470, 16
        %s472 = scalar_lea.vmem [#allocation6], %s471
        // Predicated region
        $region155: #{transformer_block.11} parent=149 // pred_check
          %p473 = pneg %p88
        $region156: #{transformer_block.11} parent=149 // pred_check_branch
          %475 = sbr.rel (%p473) target = $region158
        $region157: #{transformer_block.11} parent=149 // pred_region
          _
        $region158: #{transformer_block.11} parent=149 // pred_fallthru
          _
        %s476 = sand.u32 %s103, 1
        %s477 = sand.u32 %s103, 1
        %s478 = smul.addr %s477, 16
        %s479 = scalar_lea.vmem [#allocation7], %s478
        // Predicated region
        $region159: #{transformer_block.11} parent=149 // pred_check
          %p480 = pneg %p116
        $region160: #{transformer_block.11} parent=149 // pred_check_branch
          %482 = sbr.rel (%p480) target = $region162
        $region161: #{transformer_block.11} parent=149 // pred_region
          _
        $region162: #{transformer_block.11} parent=149 // pred_fallthru
          _
        %s483 = sand.u32 %s47, 1
        %s484 = sand.u32 %s47, 1
        %s485 = smul.addr %s484, 16
        %s486 = scalar_lea.vmem [#allocation5], %s485
        %p487 = pneg %p60
        %p488 = pneg %p57
        %s489 = sand.u32 %s75, 1
        %s490 = sand.u32 %s75, 1
        %s491 = smul.addr %s490, 16
        %s492 = scalar_lea.vmem [#allocation6], %s491
        %p493 = pneg %p88
        %p494 = pneg %p85
        %s495 = sand.u32 %s103, 1
        %s496 = sand.u32 %s103, 1
        %s497 = smul.addr %s496, 16
        %s498 = scalar_lea.vmem [#allocation7], %s497
        %p499 = pneg %p116
        %p500 = pneg %p113
        %s501 = smul.u32 2, %s24
        %p502 = scmp.lt.s32.totalorder %s501, 1
        %s503 = scalar_select %p502, %s501, 1
        %s504 = smul.addr %s503, 8
        %s505 = scalar_lea.vmem %s3, %s504
        %p506 = pneg %p142
        %p507 = pneg %p139
        %s508 = smul.u32 2, %s24
        %p509 = scmp.lt.s32.totalorder %s508, 1
        %s510 = scalar_select %p509, %s508, 1
        %s511 = smul.addr %s510, 8
        %s512 = scalar_lea.vmem %s4, %s511
        %p513 = pneg %p168
        %p514 = pneg %p165
        %s515 = smul.u32 2, %s25
        %p516 = scmp.lt.s32.totalorder %s515, 1
        %s517 = scalar_select %p516, %s515, 1
        %s518 = smul.addr %s517, 8
        %s519 = scalar_lea.vmem %s5, %s518
        %p520 = pneg %p194
        %p521 = pneg %p191
        %s522 = smul.u32 2, %s25
        %p523 = scmp.lt.s32.totalorder %s522, 1
        %s524 = scalar_select %p523, %s522, 1
        %s525 = smul.addr %s524, 8
        %s526 = scalar_lea.vmem %s6, %s525
        %p527 = pneg %p220
        %p528 = pneg %p217
        %p529 = pneg %p248
        %p530 = pneg %p245
        %s531 = smul.u32 2, %s24
        %p532 = scmp.lt.s32.totalorder %s23, 1
        %s533 = scalar_select %p532, %s23, 1
        %p534 = scmp.lt.s32.totalorder %s531, 1
        %s535 = scalar_select %p534, %s531, 1
        %s536 = smul.addr %s533, 2
        %s537 = sadd.s32 %s535, %s536
        %s538 = smul.addr %s537, 8
        %s539 = scalar_lea.vmem %s7, %s538
        %s540 = smul.u32 2, %s24
        %s541 = smul.u32 2, %s25
        %s542 = smul.u32 2, %s25
        %s543 = smul.u32 2, %s24
        %p544 = scmp.lt.s32.totalorder %s543, 1
        %s545 = scalar_select %p544, %s543, 1
        %s546 = smul.addr %s545, 8
        %s547 = scalar_lea.vmem %s3, %s546
        %s548 = smul.u32 2, %s24
        %s549 = smul.u32 2, %s24
        %p550 = scmp.lt.s32.totalorder %s549, 1
        %s551 = scalar_select %p550, %s549, 1
        %s552 = smul.addr %s551, 8
        %s553 = scalar_lea.vmem %s4, %s552
        %s554 = smul.u32 2, %s24
        %s555 = smul.u32 2, %s25
        %p556 = scmp.lt.s32.totalorder %s555, 1
        %s557 = scalar_select %p556, %s555, 1
        %s558 = smul.addr %s557, 8
        %s559 = scalar_lea.vmem %s5, %s558
        %s560 = smul.u32 2, %s25
        %s561 = smul.u32 2, %s25
        %p562 = scmp.lt.s32.totalorder %s561, 1
        %s563 = scalar_select %p562, %s561, 1
        %s564 = smul.addr %s563, 8
        %s565 = scalar_lea.vmem %s6, %s564
        %s566 = smul.u32 2, %s25
        %s567 = smul.u32 2, %s24
        %p568 = scmp.lt.s32.totalorder %s23, 1
        %s569 = scalar_select %p568, %s23, 1
        %p570 = scmp.lt.s32.totalorder %s567, 1
        %s571 = scalar_select %p570, %s567, 1
        %s572 = smul.addr %s569, 2
        %s573 = sadd.s32 %s571, %s572
        %s574 = smul.addr %s573, 8
        %s575 = scalar_lea.vmem %s7, %s574
        %s576 = smul.u32 2, %s24
        %p577 = scmp.eq.s32.totalorder %s25, 0
        // Predicated region
        $region163: #{transformer_block.11} parent=149 // pred_check
          %p578 = pneg %p577
        $region164: #{transformer_block.11} parent=149 // pred_check_branch
          %580 = sbr.rel (%p578) target = $region166
        $region165: #{transformer_block.11} parent=149 // pred_region
          %vm581 = vcmask 7168
          %582 = vst.msk [vmem:[#allocation2] sm:$0xff] %vm581, -1e+30
          %583 = vst.msk [vmem:[#allocation2 + $0x8] sm:$0xff] %vm581, -1e+30
          %584 = vst.msk [vmem:[#allocation2 + $0x10] sm:$0xff] %vm581, -1e+30
          %585 = vst.msk [vmem:[#allocation2 + $0x18] sm:$0xff] %vm581, -1e+30
          %586 = vst.msk [vmem:[#allocation2 + $0x20] sm:$0xff] %vm581, -1e+30
          %587 = vst.msk [vmem:[#allocation2 + $0x28] sm:$0xff] %vm581, -1e+30
          %588 = vst.msk [vmem:[#allocation2 + $0x30] sm:$0xff] %vm581, -1e+30
          %589 = vst.msk [vmem:[#allocation2 + $0x38] sm:$0xff] %vm581, -1e+30
          %590 = vst.msk [vmem:[#allocation3] sm:$0xff] %vm581, 0.0
          %591 = vst.msk [vmem:[#allocation3 + $0x8] sm:$0xff] %vm581, 0.0
          %592 = vst.msk [vmem:[#allocation3 + $0x10] sm:$0xff] %vm581, 0.0
          %593 = vst.msk [vmem:[#allocation3 + $0x18] sm:$0xff] %vm581, 0.0
          %594 = vst.msk [vmem:[#allocation3 + $0x20] sm:$0xff] %vm581, 0.0
          %595 = vst.msk [vmem:[#allocation3 + $0x28] sm:$0xff] %vm581, 0.0
          %596 = vst.msk [vmem:[#allocation3 + $0x30] sm:$0xff] %vm581, 0.0
          %597 = vst.msk [vmem:[#allocation3 + $0x38] sm:$0xff] %vm581, 0.0
          %vm598 = vcmask 261120
          %599 = vst.msk [vmem:[#allocation4] sm:$0xff] %vm598, 0.0
          %600 = vst.msk [vmem:[#allocation4 + $0x8] sm:$0xff] %vm598, 0.0
          %601 = vst.msk [vmem:[#allocation4 + $0x10] sm:$0xff] %vm598, 0.0
          %602 = vst.msk [vmem:[#allocation4 + $0x18] sm:$0xff] %vm598, 0.0
          %603 = vst.msk [vmem:[#allocation4 + $0x20] sm:$0xff] %vm598, 0.0
          %604 = vst.msk [vmem:[#allocation4 + $0x28] sm:$0xff] %vm598, 0.0
          %605 = vst.msk [vmem:[#allocation4 + $0x30] sm:$0xff] %vm598, 0.0
          %606 = vst.msk [vmem:[#allocation4 + $0x38] sm:$0xff] %vm598, 0.0
        $region166: #{transformer_block.11} parent=149 // pred_fallthru
          _
        %s607 = smul.u32 %s25, 16
        %s608 = smul.u32 %s24, 16
        %s609 = sadd.s32 %s608, 15
        %p610 = scmp.le.s32.totalorder %s607, %s609
        // Predicated region
        $region167: #{transformer_block.11} parent=149 // pred_check
          %p611 = pneg %p610
        $region168: #{transformer_block.11} parent=149 // pred_check_branch
          %613 = sbr.rel (%p611) target = $region170
        $region169: #{transformer_block.11} parent=149 // pred_region
          %v614 = vld [vmem:[%s465] sm:$0xff]
          %v615 = vld [vmem:[%s465 + $0x8] sm:$0xff]
          %v616 = vld [vmem:[%s472] sm:$0xff]
          %v617 = vld [vmem:[%s472 + $0x8] sm:$0xff]
          %v618 = vld [vmem:[%s479] sm:$0xff]
          %v619 = vld [vmem:[%s479 + $0x8] sm:$0xff]
          %v620 = vld [vmem:[%s547] sm:$0xff]
          %v621 = vld [vmem:[%s547 + $0x8] sm:$0xff]
          %v622 = vld [vmem:[%s553] sm:$0xff]
          %v623 = vld [vmem:[%s553 + $0x8] sm:$0xff]
          %v624 = vld [vmem:[%s559] sm:$0xff]
          %v625 = vld [vmem:[%s559 + $0x8] sm:$0xff]
          %v626 = vld [vmem:[%s565] sm:$0xff]
          %v627 = vld [vmem:[%s565 + $0x8] sm:$0xff]
          %v628 = vlaneseq
          %v629 = vshrl.u32 %v628, 7
          %v630 = vadd.s32 %v629, 8
          %v631 = vstv %s608
          %v632 = vadd.s32 %v631, %v629
          %v633 = vadd.s32 %v631, %v630
          %v634 = vlaneseq
          %v635 = vand.u32 %v634, 127
          %v636 = vstv %s607
          %v637 = vadd.s32 %v636, %v635
          %vm638 = vcmp.le.s32.totalorder %v637, %v632
          %vm639 = vcmp.le.s32.totalorder %v637, %v633
          %v640 = vmul.f32 %v614, %v620
          %v641 = vmul.f32 %v615, %v621
          %644 = vrot.lane.b32.xlu0 %v622, 16
          %v645 = vpop.permute.xlu0 %644
          %646 = vrot.lane.b32.xlu0 %v623, 16
          %v647 = vpop.permute.xlu0 %646
          %v650 = vmul.f32 %v614, %v645
          %v651 = vmul.f32 %v615, %v647
          %654 = vrot.lane.b32.xlu0 %v650, 112
          %v655 = vpop.permute.xlu0 %654
          %656 = vrot.lane.b32.xlu0 %v651, 112
          %v657 = vpop.permute.xlu0 %656
          %v660 = vsub.f32 %v640, %v655
          %v661 = vsub.f32 %v641, %v657
          %v662 = vmul.f32 %v614, %v622
          %v663 = vmul.f32 %v615, %v623
          %666 = vrot.lane.b32.xlu0 %v620, 16
          %v667 = vpop.permute.xlu0 %666
          %668 = vrot.lane.b32.xlu0 %v621, 16
          %v669 = vpop.permute.xlu0 %668
          %v672 = vmul.f32 %v614, %v667
          %v673 = vmul.f32 %v615, %v669
          %676 = vrot.lane.b32.xlu0 %v672, 112
          %v677 = vpop.permute.xlu0 %676
          %678 = vrot.lane.b32.xlu0 %v673, 112
          %v679 = vpop.permute.xlu0 %678
          %v682 = vadd.f32 %v662, %v677
          %v683 = vadd.f32 %v663, %v679
          %v684 = vmul.f32 %v616, %v624
          %v685 = vmul.f32 %v617, %v625
          %688 = vrot.lane.b32.xlu0 %v626, 16
          %v689 = vpop.permute.xlu0 %688
          %690 = vrot.lane.b32.xlu0 %v627, 16
          %v691 = vpop.permute.xlu0 %690
          %v694 = vmul.f32 %v616, %v689
          %v695 = vmul.f32 %v617, %v691
          %698 = vrot.lane.b32.xlu0 %v694, 112
          %v699 = vpop.permute.xlu0 %698
          %700 = vrot.lane.b32.xlu0 %v695, 112
          %v701 = vpop.permute.xlu0 %700
          %v704 = vsub.f32 %v684, %v699
          %v705 = vsub.f32 %v685, %v701
          %v706 = vmul.f32 %v616, %v626
          %v707 = vmul.f32 %v617, %v627
          %710 = vrot.lane.b32.xlu0 %v624, 16
          %v711 = vpop.permute.xlu0 %710
          %712 = vrot.lane.b32.xlu0 %v625, 16
          %v713 = vpop.permute.xlu0 %712
          %v716 = vmul.f32 %v616, %v711
          %v717 = vmul.f32 %v617, %v713
          %720 = vrot.lane.b32.xlu0 %v716, 112
          %v721 = vpop.permute.xlu0 %720
          %722 = vrot.lane.b32.xlu0 %v717, 112
          %v723 = vpop.permute.xlu0 %722
          %v726 = vadd.f32 %v706, %v721
          %v727 = vadd.f32 %v707, %v723
          %vm728 = vcmask 130048
          %v730 = vsel %vm728, %v682, 0
          %v733 = vsel %vm728, %v683, 0
          %v736 = vsel %vm728, %v726, 0
          %v739 = vsel %vm728, %v727, 0
          %741 = vmatpush.xpose.msra.mxu0 0.0
          %742 = vmatpush.xpose.msra.mxu0 0.0
          %743 = vmatpush.xpose.msra.mxu0 0.0
          %744 = vmatpush.xpose.msra.mxu0 0.0
          %745 = vmatpush.xpose.msra.mxu0 0.0
          %746 = vmatpush.xpose.msra.mxu0 0.0
          %747 = vmatpush.xpose.msra.mxu0 0.0
          %748 = vmatpush.xpose.msra.mxu0 0.0
          %749 = vmatpush.xpose.msra.mxu0 0.0
          %750 = vmatpush.xpose.msra.mxu0 0.0
          %751 = vmatpush.xpose.msra.mxu0 0.0
          %752 = vmatpush.xpose.msra.mxu0 0.0
          %753 = vmatpush.xpose.msra.mxu0 0.0
          %754 = vmatpush.xpose.msra.mxu0 0.0
          %755 = vmatpush.xpose.msra.mxu0 %v739
          %756 = vmatpush.xpose.msra.mxu0 %v736
          %757 = vmatmul.f32.gmra.mxu0 %v730
          %v758 = vpop.f32.mrf.mxu0
          %v759 = vadd.f32 0.0, %v758
          %760 = vmatmul.f32.gmra.mxu0 %v733
          %v761 = vpop.f32.mrf.mxu0
          %v762 = vadd.f32 0.0, %v761
          %763 = vdwg.mxu0
          %v765 = vsel %vm728, %v660, 0
          %v768 = vsel %vm728, %v661, 0
          %v771 = vsel %vm728, %v704, 0
          %v774 = vsel %vm728, %v705, 0
          %776 = vmatpush.xpose.msra.mxu0 0.0
          %777 = vmatpush.xpose.msra.mxu0 0.0
          %778 = vmatpush.xpose.msra.mxu0 0.0
          %779 = vmatpush.xpose.msra.mxu0 0.0
          %780 = vmatpush.xpose.msra.mxu0 0.0
          %781 = vmatpush.xpose.msra.mxu0 0.0
          %782 = vmatpush.xpose.msra.mxu0 0.0
          %783 = vmatpush.xpose.msra.mxu0 0.0
          %784 = vmatpush.xpose.msra.mxu0 0.0
          %785 = vmatpush.xpose.msra.mxu0 0.0
          %786 = vmatpush.xpose.msra.mxu0 0.0
          %787 = vmatpush.xpose.msra.mxu0 0.0
          %788 = vmatpush.xpose.msra.mxu0 0.0
          %789 = vmatpush.xpose.msra.mxu0 0.0
          %790 = vmatpush.xpose.msra.mxu0 %v774
          %791 = vmatpush.xpose.msra.mxu0 %v771
          %792 = vmatmul.f32.gmra.mxu0 %v765
          %v793 = vpop.f32.mrf.mxu0
          %v794 = vadd.f32 %v759, %v793
          %795 = vmatmul.f32.gmra.mxu0 %v768
          %v796 = vpop.f32.mrf.mxu0
          %v797 = vadd.f32 %v762, %v796
          %798 = vdwg.mxu0
          %v799 = vmul.f32 %v794, 0.17677669
          %v800 = vmul.f32 %v797, 0.17677669
          %v801 = vsel %vm638, %v799, -1e+30
          %v802 = vsel %vm639, %v800, -1e+30
          %v803 = vld [vmem:[#allocation2] sm:$0xff]
          %v804 = vld [vmem:[#allocation2 + $0x8] sm:$0xff]
          %v805 = vsel %vm728, %v801, -inf
          %806 = vmax.xlane.f32.xlu0 %v805
          %v807 = vpop.xlane.xlu0 %806
          %v808 = vsel %vm728, %v802, -inf
          %809 = vmax.xlane.f32.xlu0 %v808
          %v810 = vpop.xlane.xlu0 %809
          %v811 = vmax.f32 %v803, %v807
          %v812 = vmax.f32 %v804, %v810
          %v813 = vsub.f32 %v803, %v811
          %v814 = vsub.f32 %v804, %v812
          %v815 = vmul.f32 %v813, 1.442695
          %v816 = vpow.pop %v815
          %v817 = vmul.f32 %v814, 1.442695
          %v818 = vpow.pop %v817
          %820 = vset.pattern.permute.xlu0 0
          %821 = vperm.xlu0 %820, %v811
          %v822 = vpop.permute.xlu0 %821
          %825 = vset.pattern.permute.xlu0 0
          %826 = vperm.xlu0 %825, %v812
          %v827 = vpop.permute.xlu0 %826
          %v829 = vsub.f32 %v801, %v822
          %v830 = vsub.f32 %v802, %v827
          %v831 = vmul.f32 %v829, 1.442695
          %v832 = vpow.pop %v831
          %v833 = vmul.f32 %v830, 1.442695
          %v834 = vpow.pop %v833
          %v835 = vld [vmem:[#allocation3] sm:$0xff]
          %v836 = vld [vmem:[#allocation3 + $0x8] sm:$0xff]
          %v837 = vmul.f32 %v816, %v835
          %v838 = vmul.f32 %v818, %v836
          %v839 = vsel %vm728, %v832, 0.0
          %840 = vadd.xlane.f32.xlu0 %v839
          %v841 = vpop.xlane.xlu0 %840
          %v842 = vsel %vm728, %v834, 0.0
          %843 = vadd.xlane.f32.xlu0 %v842
          %v844 = vpop.xlane.xlu0 %843
          %v845 = vadd.f32 %v837, %v841
          %v846 = vadd.f32 %v838, %v844
          %vm847 = vcmask 7168
          %848 = vst.msk [vmem:[#allocation3] sm:$0xff] %vm847, %v845
          %849 = vst.msk [vmem:[#allocation3 + $0x8] sm:$0xff] %vm847, %v846
          %v850 = vld [vmem:[#allocation4] sm:$0xff]
          %v851 = vld [vmem:[#allocation4 + $0x8] sm:$0xff]
          %853 = vset.pattern.permute.xlu0 0
          %854 = vperm.xlu0 %853, %v816
          %v855 = vpop.permute.xlu0 %854
          %858 = vset.pattern.permute.xlu0 0
          %859 = vperm.xlu0 %858, %v818
          %v860 = vpop.permute.xlu0 %859
          %v862 = vmul.f32 %v855, %v850
          %v863 = vmul.f32 %v860, %v851
          %v865 = vsel %vm728, %v832, 0
          %v868 = vsel %vm728, %v834, 0
          %870 = vmatpush.msra.mxu0 0.0
          %871 = vmatpush.msra.mxu0 0.0
          %872 = vmatpush.msra.mxu0 0.0
          %873 = vmatpush.msra.mxu0 0.0
          %874 = vmatpush.msra.mxu0 0.0
          %875 = vmatpush.msra.mxu0 0.0
          %876 = vmatpush.msra.mxu0 0.0
          %877 = vmatpush.msra.mxu0 0.0
          %878 = vmatpush.msra.mxu0 0.0
          %879 = vmatpush.msra.mxu0 0.0
          %880 = vmatpush.msra.mxu0 0.0
          %881 = vmatpush.msra.mxu0 0.0
          %882 = vmatpush.msra.mxu0 0.0
          %883 = vmatpush.msra.mxu0 0.0
          %884 = vmatpush.msra.mxu0 %v619
          %885 = vmatpush.msra.mxu0 %v618
          %886 = vmatmul.f32.gmra.mxu0 %v865
          %v887 = vpop.f32.mrf.mxu0
          %v888 = vadd.f32 0.0, %v887
          %889 = vmatmul.f32.gmra.mxu0 %v868
          %v890 = vpop.f32.mrf.mxu0
          %v891 = vadd.f32 0.0, %v890
          %892 = vdwg.mxu0
          %v893 = vadd.f32 %v862, %v888
          %v894 = vadd.f32 %v863, %v891
          %vm895 = vcmask 261120
          %896 = vst.msk [vmem:[#allocation4] sm:$0xff] %vm895, %v893
          %897 = vst.msk [vmem:[#allocation4 + $0x8] sm:$0xff] %vm895, %v894
          %898 = vst.msk [vmem:[#allocation2] sm:$0xff] %vm847, %v811
          %899 = vst.msk [vmem:[#allocation2 + $0x8] sm:$0xff] %vm847, %v812
          %900 = vrot.lane.b32.xlu0 %v620, 32
          %v901 = vpop.permute.xlu0 %900
          %902 = vrot.lane.b32.xlu0 %v621, 32
          %v903 = vpop.permute.xlu0 %902
          %v906 = vmul.f32 %v614, %v901
          %v907 = vmul.f32 %v615, %v903
          %908 = vrot.lane.b32.xlu0 %v622, 48
          %v909 = vpop.permute.xlu0 %908
          %910 = vrot.lane.b32.xlu0 %v623, 48
          %v911 = vpop.permute.xlu0 %910
          %v914 = vmul.f32 %v614, %v909
          %v915 = vmul.f32 %v615, %v911
          %918 = vrot.lane.b32.xlu0 %v914, 112
          %v919 = vpop.permute.xlu0 %918
          %920 = vrot.lane.b32.xlu0 %v915, 112
          %v921 = vpop.permute.xlu0 %920
          %v924 = vsub.f32 %v906, %v919
          %v925 = vsub.f32 %v907, %v921
          %926 = vrot.lane.b32.xlu0 %v622, 32
          %v927 = vpop.permute.xlu0 %926
          %928 = vrot.lane.b32.xlu0 %v623, 32
          %v929 = vpop.permute.xlu0 %928
          %v932 = vmul.f32 %v614, %v927
          %v933 = vmul.f32 %v615, %v929
          %934 = vrot.lane.b32.xlu0 %v620, 48
          %v935 = vpop.permute.xlu0 %934
          %936 = vrot.lane.b32.xlu0 %v621, 48
          %v937 = vpop.permute.xlu0 %936
          %v940 = vmul.f32 %v614, %v935
          %v941 = vmul.f32 %v615, %v937
          %944 = vrot.lane.b32.xlu0 %v940, 112
          %v945 = vpop.permute.xlu0 %944
          %946 = vrot.lane.b32.xlu0 %v941, 112
          %v947 = vpop.permute.xlu0 %946
          %v950 = vadd.f32 %v932, %v945
          %v951 = vadd.f32 %v933, %v947
          %952 = vrot.lane.b32.xlu0 %v624, 32
          %v953 = vpop.permute.xlu0 %952
          %954 = vrot.lane.b32.xlu0 %v625, 32
          %v955 = vpop.permute.xlu0 %954
          %v958 = vmul.f32 %v616, %v953
          %v959 = vmul.f32 %v617, %v955
          %960 = vrot.lane.b32.xlu0 %v626, 48
          %v961 = vpop.permute.xlu0 %960
          %962 = vrot.lane.b32.xlu0 %v627, 48
          %v963 = vpop.permute.xlu0 %962
          %v966 = vmul.f32 %v616, %v961
          %v967 = vmul.f32 %v617, %v963
          %970 = vrot.lane.b32.xlu0 %v966, 112
          %v971 = vpop.permute.xlu0 %970
          %972 = vrot.lane.b32.xlu0 %v967, 112
          %v973 = vpop.permute.xlu0 %972
          %v976 = vsub.f32 %v958, %v971
          %v977 = vsub.f32 %v959, %v973
          %978 = vrot.lane.b32.xlu0 %v626, 32
          %v979 = vpop.permute.xlu0 %978
          %980 = vrot.lane.b32.xlu0 %v627, 32
          %v981 = vpop.permute.xlu0 %980
          %v984 = vmul.f32 %v616, %v979
          %v985 = vmul.f32 %v617, %v981
          %986 = vrot.lane.b32.xlu0 %v624, 48
          %v987 = vpop.permute.xlu0 %986
          %988 = vrot.lane.b32.xlu0 %v625, 48
          %v989 = vpop.permute.xlu0 %988
          %v992 = vmul.f32 %v616, %v987
          %v993 = vmul.f32 %v617, %v989
          %996 = vrot.lane.b32.xlu0 %v992, 112
          %v997 = vpop.permute.xlu0 %996
          %998 = vrot.lane.b32.xlu0 %v993, 112
          %v999 = vpop.permute.xlu0 %998
          %v1002 = vadd.f32 %v984, %v997
          %v1003 = vadd.f32 %v985, %v999
          %1006 = vrot.lane.b32.xlu0 %v950, 96
          %v1007 = vpop.permute.xlu0 %1006
          %1008 = vrot.lane.b32.xlu0 %v951, 96
          %v1009 = vpop.permute.xlu0 %1008
          %1012 = vrot.lane.b32.xlu0 %v1002, 96
          %v1013 = vpop.permute.xlu0 %1012
          %1014 = vrot.lane.b32.xlu0 %v1003, 96
          %v1015 = vpop.permute.xlu0 %1014
          %v1016 = vsel %vm728, %v1007, 0
          %v1018 = vsel %vm728, %v1009, 0
          %v1020 = vsel %vm728, %v1013, 0
          %v1022 = vsel %vm728, %v1015, 0
          %1024 = vmatpush.xpose.msra.mxu0 0.0
          %1025 = vmatpush.xpose.msra.mxu0 0.0
          %1026 = vmatpush.xpose.msra.mxu0 0.0
          %1027 = vmatpush.xpose.msra.mxu0 0.0
          %1028 = vmatpush.xpose.msra.mxu0 0.0
          %1029 = vmatpush.xpose.msra.mxu0 0.0
          %1030 = vmatpush.xpose.msra.mxu0 0.0
          %1031 = vmatpush.xpose.msra.mxu0 0.0
          %1032 = vmatpush.xpose.msra.mxu0 0.0
          %1033 = vmatpush.xpose.msra.mxu0 0.0
          %1034 = vmatpush.xpose.msra.mxu0 0.0
          %1035 = vmatpush.xpose.msra.mxu0 0.0
          %1036 = vmatpush.xpose.msra.mxu0 0.0
          %1037 = vmatpush.xpose.msra.mxu0 0.0
          %1038 = vmatpush.xpose.msra.mxu0 %v1022
          %1039 = vmatpush.xpose.msra.mxu0 %v1020
          %1040 = vmatmul.f32.gmra.mxu0 %v1016
          %v1041 = vpop.f32.mrf.mxu0
          %v1042 = vadd.f32 0.0, %v1041
          %1043 = vmatmul.f32.gmra.mxu0 %v1018
          %v1044 = vpop.f32.mrf.mxu0
          %v1045 = vadd.f32 0.0, %v1044
          %1046 = vdwg.mxu0
          %1049 = vrot.lane.b32.xlu0 %v924, 96
          %v1050 = vpop.permute.xlu0 %1049
          %1051 = vrot.lane.b32.xlu0 %v925, 96
          %v1052 = vpop.permute.xlu0 %1051
          %1055 = vrot.lane.b32.xlu0 %v976, 96
          %v1056 = vpop.permute.xlu0 %1055
          %1057 = vrot.lane.b32.xlu0 %v977, 96
          %v1058 = vpop.permute.xlu0 %1057
          %v1059 = vsel %vm728, %v1050, 0
          %v1061 = vsel %vm728, %v1052, 0
          %v1063 = vsel %vm728, %v1056, 0
          %v1065 = vsel %vm728, %v1058, 0
          %1067 = vmatpush.xpose.msra.mxu0 0.0
          %1068 = vmatpush.xpose.msra.mxu0 0.0
          %1069 = vmatpush.xpose.msra.mxu0 0.0
          %1070 = vmatpush.xpose.msra.mxu0 0.0
          %1071 = vmatpush.xpose.msra.mxu0 0.0
          %1072 = vmatpush.xpose.msra.mxu0 0.0
          %1073 = vmatpush.xpose.msra.mxu0 0.0
          %1074 = vmatpush.xpose.msra.mxu0 0.0
          %1075 = vmatpush.xpose.msra.mxu0 0.0
          %1076 = vmatpush.xpose.msra.mxu0 0.0
          %1077 = vmatpush.xpose.msra.mxu0 0.0
          %1078 = vmatpush.xpose.msra.mxu0 0.0
          %1079 = vmatpush.xpose.msra.mxu0 0.0
          %1080 = vmatpush.xpose.msra.mxu0 0.0
          %1081 = vmatpush.xpose.msra.mxu0 %v1065
          %1082 = vmatpush.xpose.msra.mxu0 %v1063
          %1083 = vmatmul.f32.gmra.mxu0 %v1059
          %v1084 = vpop.f32.mrf.mxu0
          %v1085 = vadd.f32 %v1042, %v1084
          %1086 = vmatmul.f32.gmra.mxu0 %v1061
          %v1087 = vpop.f32.mrf.mxu0
          %v1088 = vadd.f32 %v1045, %v1087
          %1089 = vdwg.mxu0
          %v1090 = vmul.f32 %v1085, 0.17677669
          %v1091 = vmul.f32 %v1088, 0.17677669
          %v1092 = vsel %vm638, %v1090, -1e+30
          %v1093 = vsel %vm639, %v1091, -1e+30
          %s1094 = scalar_lea.vmem [#allocation2], 16
          %v1095 = vld [vmem:[%s1094] sm:$0xff]
          %v1096 = vld [vmem:[%s1094 + $0x8] sm:$0xff]
          %v1097 = vsel %vm728, %v1092, -inf
          %1098 = vmax.xlane.f32.xlu0 %v1097
          %v1099 = vpop.xlane.xlu0 %1098
          %v1100 = vsel %vm728, %v1093, -inf
          %1101 = vmax.xlane.f32.xlu0 %v1100
          %v1102 = vpop.xlane.xlu0 %1101
          %v1103 = vmax.f32 %v1095, %v1099
          %v1104 = vmax.f32 %v1096, %v1102
          %v1105 = vsub.f32 %v1095, %v1103
          %v1106 = vsub.f32 %v1096, %v1104
          %v1107 = vmul.f32 %v1105, 1.442695
          %v1108 = vpow.pop %v1107
          %v1109 = vmul.f32 %v1106, 1.442695
          %v1110 = vpow.pop %v1109
          %1112 = vset.pattern.permute.xlu0 0
          %1113 = vperm.xlu0 %1112, %v1103
          %v1114 = vpop.permute.xlu0 %1113
          %1117 = vset.pattern.permute.xlu0 0
          %1118 = vperm.xlu0 %1117, %v1104
          %v1119 = vpop.permute.xlu0 %1118
          %v1121 = vsub.f32 %v1092, %v1114
          %v1122 = vsub.f32 %v1093, %v1119
          %v1123 = vmul.f32 %v1121, 1.442695
          %v1124 = vpow.pop %v1123
          %v1125 = vmul.f32 %v1122, 1.442695
          %v1126 = vpow.pop %v1125
          %s1127 = scalar_lea.vmem [#allocation3], 16
          %v1128 = vld [vmem:[%s1127] sm:$0xff]
          %v1129 = vld [vmem:[%s1127 + $0x8] sm:$0xff]
          %v1130 = vmul.f32 %v1108, %v1128
          %v1131 = vmul.f32 %v1110, %v1129
          %v1132 = vsel %vm728, %v1124, 0.0
          %1133 = vadd.xlane.f32.xlu0 %v1132
          %v1134 = vpop.xlane.xlu0 %1133
          %v1135 = vsel %vm728, %v1126, 0.0
          %1136 = vadd.xlane.f32.xlu0 %v1135
          %v1137 = vpop.xlane.xlu0 %1136
          %v1138 = vadd.f32 %v1130, %v1134
          %v1139 = vadd.f32 %v1131, %v1137
          %1140 = vst.msk [vmem:[%s1127] sm:$0xff] %vm847, %v1138
          %1141 = vst.msk [vmem:[%s1127 + $0x8] sm:$0xff] %vm847, %v1139
          %s1142 = scalar_lea.vmem [#allocation4], 16
          %v1143 = vld [vmem:[%s1142] sm:$0xff]
          %v1144 = vld [vmem:[%s1142 + $0x8] sm:$0xff]
          %1146 = vset.pattern.permute.xlu0 0
          %1147 = vperm.xlu0 %1146, %v1108
          %v1148 = vpop.permute.xlu0 %1147
          %1151 = vset.pattern.permute.xlu0 0
          %1152 = vperm.xlu0 %1151, %v1110
          %v1153 = vpop.permute.xlu0 %1152
          %v1155 = vmul.f32 %v1148, %v1143
          %v1156 = vmul.f32 %v1153, %v1144
          %1159 = vrot.lane.b32.xlu0 %v618, 96
          %v1160 = vpop.permute.xlu0 %1159
          %1161 = vrot.lane.b32.xlu0 %v619, 96
          %v1162 = vpop.permute.xlu0 %1161
          %v1166 = vsel %vm728, %v1124, 0
          %v1169 = vsel %vm728, %v1126, 0
          %1171 = vmatpush.msra.mxu0 0.0
          %1172 = vmatpush.msra.mxu0 0.0
          %1173 = vmatpush.msra.mxu0 0.0
          %1174 = vmatpush.msra.mxu0 0.0
          %1175 = vmatpush.msra.mxu0 0.0
          %1176 = vmatpush.msra.mxu0 0.0
          %1177 = vmatpush.msra.mxu0 0.0
          %1178 = vmatpush.msra.mxu0 0.0
          %1179 = vmatpush.msra.mxu0 0.0
          %1180 = vmatpush.msra.mxu0 0.0
          %1181 = vmatpush.msra.mxu0 0.0
          %1182 = vmatpush.msra.mxu0 0.0
          %1183 = vmatpush.msra.mxu0 0.0
          %1184 = vmatpush.msra.mxu0 0.0
          %1185 = vmatpush.msra.mxu0 %v1162
          %1186 = vmatpush.msra.mxu0 %v1160
          %1187 = vmatmul.f32.gmra.mxu0 %v1166
          %v1188 = vpop.f32.mrf.mxu0
          %v1189 = vadd.f32 0.0, %v1188
          %1190 = vmatmul.f32.gmra.mxu0 %v1169
          %v1191 = vpop.f32.mrf.mxu0
          %v1192 = vadd.f32 0.0, %v1191
          %1193 = vdwg.mxu0
          %v1194 = vadd.f32 %v1155, %v1189
          %v1195 = vadd.f32 %v1156, %v1192
          %1196 = vst.msk [vmem:[%s1142] sm:$0xff] %vm895, %v1194
          %1197 = vst.msk [vmem:[%s1142 + $0x8] sm:$0xff] %vm895, %v1195
          %1198 = vst.msk [vmem:[%s1094] sm:$0xff] %vm847, %v1103
          %1199 = vst.msk [vmem:[%s1094 + $0x8] sm:$0xff] %vm847, %v1104
          %1200 = vrot.lane.b32.xlu0 %v620, 64
          %v1201 = vpop.permute.xlu0 %1200
          %1202 = vrot.lane.b32.xlu0 %v621, 64
          %v1203 = vpop.permute.xlu0 %1202
          %v1206 = vmul.f32 %v614, %v1201
          %v1207 = vmul.f32 %v615, %v1203
          %1208 = vrot.lane.b32.xlu0 %v622, 80
          %v1209 = vpop.permute.xlu0 %1208
          %1210 = vrot.lane.b32.xlu0 %v623, 80
          %v1211 = vpop.permute.xlu0 %1210
          %v1214 = vmul.f32 %v614, %v1209
          %v1215 = vmul.f32 %v615, %v1211
          %1218 = vrot.lane.b32.xlu0 %v1214, 112
          %v1219 = vpop.permute.xlu0 %1218
          %1220 = vrot.lane.b32.xlu0 %v1215, 112
          %v1221 = vpop.permute.xlu0 %1220
          %v1224 = vsub.f32 %v1206, %v1219
          %v1225 = vsub.f32 %v1207, %v1221
          %1226 = vrot.lane.b32.xlu0 %v622, 64
          %v1227 = vpop.permute.xlu0 %1226
          %1228 = vrot.lane.b32.xlu0 %v623, 64
          %v1229 = vpop.permute.xlu0 %1228
          %v1232 = vmul.f32 %v614, %v1227
          %v1233 = vmul.f32 %v615, %v1229
          %1234 = vrot.lane.b32.xlu0 %v620, 80
          %v1235 = vpop.permute.xlu0 %1234
          %1236 = vrot.lane.b32.xlu0 %v621, 80
          %v1237 = vpop.permute.xlu0 %1236
          %v1240 = vmul.f32 %v614, %v1235
          %v1241 = vmul.f32 %v615, %v1237
          %1244 = vrot.lane.b32.xlu0 %v1240, 112
          %v1245 = vpop.permute.xlu0 %1244
          %1246 = vrot.lane.b32.xlu0 %v1241, 112
          %v1247 = vpop.permute.xlu0 %1246
          %v1250 = vadd.f32 %v1232, %v1245
          %v1251 = vadd.f32 %v1233, %v1247
          %1252 = vrot.lane.b32.xlu0 %v624, 64
          %v1253 = vpop.permute.xlu0 %1252
          %1254 = vrot.lane.b32.xlu0 %v625, 64
          %v1255 = vpop.permute.xlu0 %1254
          %v1258 = vmul.f32 %v616, %v1253
          %v1259 = vmul.f32 %v617, %v1255
          %1260 = vrot.lane.b32.xlu0 %v626, 80
          %v1261 = vpop.permute.xlu0 %1260
          %1262 = vrot.lane.b32.xlu0 %v627, 80
          %v1263 = vpop.permute.xlu0 %1262
          %v1266 = vmul.f32 %v616, %v1261
          %v1267 = vmul.f32 %v617, %v1263
          %1270 = vrot.lane.b32.xlu0 %v1266, 112
          %v1271 = vpop.permute.xlu0 %1270
          %1272 = vrot.lane.b32.xlu0 %v1267, 112
          %v1273 = vpop.permute.xlu0 %1272
          %v1276 = vsub.f32 %v1258, %v1271
          %v1277 = vsub.f32 %v1259, %v1273
          %1278 = vrot.lane.b32.xlu0 %v626, 64
          %v1279 = vpop.permute.xlu0 %1278
          %1280 = vrot.lane.b32.xlu0 %v627, 64
          %v1281 = vpop.permute.xlu0 %1280
          %v1284 = vmul.f32 %v616, %v1279
          %v1285 = vmul.f32 %v617, %v1281
          %1286 = vrot.lane.b32.xlu0 %v624, 80
          %v1287 = vpop.permute.xlu0 %1286
          %1288 = vrot.lane.b32.xlu0 %v625, 80
          %v1289 = vpop.permute.xlu0 %1288
          %v1292 = vmul.f32 %v616, %v1287
          %v1293 = vmul.f32 %v617, %v1289
          %1296 = vrot.lane.b32.xlu0 %v1292, 112
          %v1297 = vpop.permute.xlu0 %1296
          %1298 = vrot.lane.b32.xlu0 %v1293, 112
          %v1299 = vpop.permute.xlu0 %1298
          %v1302 = vadd.f32 %v1284, %v1297
          %v1303 = vadd.f32 %v1285, %v1299
          %1306 = vrot.lane.b32.xlu0 %v1250, 64
          %v1307 = vpop.permute.xlu0 %1306
          %1308 = vrot.lane.b32.xlu0 %v1251, 64
          %v1309 = vpop.permute.xlu0 %1308
          %1312 = vrot.lane.b32.xlu0 %v1302, 64
          %v1313 = vpop.permute.xlu0 %1312
          %1314 = vrot.lane.b32.xlu0 %v1303, 64
          %v1315 = vpop.permute.xlu0 %1314
          %v1316 = vsel %vm728, %v1307, 0
          %v1318 = vsel %vm728, %v1309, 0
          %v1320 = vsel %vm728, %v1313, 0
          %v1322 = vsel %vm728, %v1315, 0
          %1324 = vmatpush.xpose.msra.mxu0 0.0
          %1325 = vmatpush.xpose.msra.mxu0 0.0
          %1326 = vmatpush.xpose.msra.mxu0 0.0
          %1327 = vmatpush.xpose.msra.mxu0 0.0
          %1328 = vmatpush.xpose.msra.mxu0 0.0
          %1329 = vmatpush.xpose.msra.mxu0 0.0
          %1330 = vmatpush.xpose.msra.mxu0 0.0
          %1331 = vmatpush.xpose.msra.mxu0 0.0
          %1332 = vmatpush.xpose.msra.mxu0 0.0
          %1333 = vmatpush.xpose.msra.mxu0 0.0
          %1334 = vmatpush.xpose.msra.mxu0 0.0
          %1335 = vmatpush.xpose.msra.mxu0 0.0
          %1336 = vmatpush.xpose.msra.mxu0 0.0
          %1337 = vmatpush.xpose.msra.mxu0 0.0
          %1338 = vmatpush.xpose.msra.mxu0 %v1322
          %1339 = vmatpush.xpose.msra.mxu0 %v1320
          %1340 = vmatmul.f32.gmra.mxu0 %v1316
          %v1341 = vpop.f32.mrf.mxu0
          %v1342 = vadd.f32 0.0, %v1341
          %1343 = vmatmul.f32.gmra.mxu0 %v1318
          %v1344 = vpop.f32.mrf.mxu0
          %v1345 = vadd.f32 0.0, %v1344
          %1346 = vdwg.mxu0
          %1349 = vrot.lane.b32.xlu0 %v1224, 64
          %v1350 = vpop.permute.xlu0 %1349
          %1351 = vrot.lane.b32.xlu0 %v1225, 64
          %v1352 = vpop.permute.xlu0 %1351
          %1355 = vrot.lane.b32.xlu0 %v1276, 64
          %v1356 = vpop.permute.xlu0 %1355
          %1357 = vrot.lane.b32.xlu0 %v1277, 64
          %v1358 = vpop.permute.xlu0 %1357
          %v1359 = vsel %vm728, %v1350, 0
          %v1361 = vsel %vm728, %v1352, 0
          %v1363 = vsel %vm728, %v1356, 0
          %v1365 = vsel %vm728, %v1358, 0
          %1367 = vmatpush.xpose.msra.mxu0 0.0
          %1368 = vmatpush.xpose.msra.mxu0 0.0
          %1369 = vmatpush.xpose.msra.mxu0 0.0
          %1370 = vmatpush.xpose.msra.mxu0 0.0
          %1371 = vmatpush.xpose.msra.mxu0 0.0
          %1372 = vmatpush.xpose.msra.mxu0 0.0
          %1373 = vmatpush.xpose.msra.mxu0 0.0
          %1374 = vmatpush.xpose.msra.mxu0 0.0
          %1375 = vmatpush.xpose.msra.mxu0 0.0
          %1376 = vmatpush.xpose.msra.mxu0 0.0
          %1377 = vmatpush.xpose.msra.mxu0 0.0
          %1378 = vmatpush.xpose.msra.mxu0 0.0
          %1379 = vmatpush.xpose.msra.mxu0 0.0
          %1380 = vmatpush.xpose.msra.mxu0 0.0
          %1381 = vmatpush.xpose.msra.mxu0 %v1365
          %1382 = vmatpush.xpose.msra.mxu0 %v1363
          %1383 = vmatmul.f32.gmra.mxu0 %v1359
          %v1384 = vpop.f32.mrf.mxu0
          %v1385 = vadd.f32 %v1342, %v1384
          %1386 = vmatmul.f32.gmra.mxu0 %v1361
          %v1387 = vpop.f32.mrf.mxu0
          %v1388 = vadd.f32 %v1345, %v1387
          %1389 = vdwg.mxu0
          %v1390 = vmul.f32 %v1385, 0.17677669
          %v1391 = vmul.f32 %v1388, 0.17677669
          %v1392 = vsel %vm638, %v1390, -1e+30
          %v1393 = vsel %vm639, %v1391, -1e+30
          %s1394 = scalar_lea.vmem [#allocation2], 32
          %v1395 = vld [vmem:[%s1394] sm:$0xff]
          %v1396 = vld [vmem:[%s1394 + $0x8] sm:$0xff]
          %v1397 = vsel %vm728, %v1392, -inf
          %1398 = vmax.xlane.f32.xlu0 %v1397
          %v1399 = vpop.xlane.xlu0 %1398
          %v1400 = vsel %vm728, %v1393, -inf
          %1401 = vmax.xlane.f32.xlu0 %v1400
          %v1402 = vpop.xlane.xlu0 %1401
          %v1403 = vmax.f32 %v1395, %v1399
          %v1404 = vmax.f32 %v1396, %v1402
          %v1405 = vsub.f32 %v1395, %v1403
          %v1406 = vsub.f32 %v1396, %v1404
          %v1407 = vmul.f32 %v1405, 1.442695
          %v1408 = vpow.pop %v1407
          %v1409 = vmul.f32 %v1406, 1.442695
          %v1410 = vpow.pop %v1409
          %1412 = vset.pattern.permute.xlu0 0
          %1413 = vperm.xlu0 %1412, %v1403
          %v1414 = vpop.permute.xlu0 %1413
          %1417 = vset.pattern.permute.xlu0 0
          %1418 = vperm.xlu0 %1417, %v1404
          %v1419 = vpop.permute.xlu0 %1418
          %v1421 = vsub.f32 %v1392, %v1414
          %v1422 = vsub.f32 %v1393, %v1419
          %v1423 = vmul.f32 %v1421, 1.442695
          %v1424 = vpow.pop %v1423
          %v1425 = vmul.f32 %v1422, 1.442695
          %v1426 = vpow.pop %v1425
          %s1427 = scalar_lea.vmem [#allocation3], 32
          %v1428 = vld [vmem:[%s1427] sm:$0xff]
          %v1429 = vld [vmem:[%s1427 + $0x8] sm:$0xff]
          %v1430 = vmul.f32 %v1408, %v1428
          %v1431 = vmul.f32 %v1410, %v1429
          %v1432 = vsel %vm728, %v1424, 0.0
          %1433 = vadd.xlane.f32.xlu0 %v1432
          %v1434 = vpop.xlane.xlu0 %1433
          %v1435 = vsel %vm728, %v1426, 0.0
          %1436 = vadd.xlane.f32.xlu0 %v1435
          %v1437 = vpop.xlane.xlu0 %1436
          %v1438 = vadd.f32 %v1430, %v1434
          %v1439 = vadd.f32 %v1431, %v1437
          %1440 = vst.msk [vmem:[%s1427] sm:$0xff] %vm847, %v1438
          %1441 = vst.msk [vmem:[%s1427 + $0x8] sm:$0xff] %vm847, %v1439
          %s1442 = scalar_lea.vmem [#allocation4], 32
          %v1443 = vld [vmem:[%s1442] sm:$0xff]
          %v1444 = vld [vmem:[%s1442 + $0x8] sm:$0xff]
          %1446 = vset.pattern.permute.xlu0 0
          %1447 = vperm.xlu0 %1446, %v1408
          %v1448 = vpop.permute.xlu0 %1447
          %1451 = vset.pattern.permute.xlu0 0
          %1452 = vperm.xlu0 %1451, %v1410
          %v1453 = vpop.permute.xlu0 %1452
          %v1455 = vmul.f32 %v1448, %v1443
          %v1456 = vmul.f32 %v1453, %v1444
          %1457 = vrot.lane.b32.xlu0 %v618, 64
          %v1458 = vpop.permute.xlu0 %1457
          %1459 = vrot.lane.b32.xlu0 %v619, 64
          %v1460 = vpop.permute.xlu0 %1459
          %v1464 = vsel %vm728, %v1424, 0
          %v1467 = vsel %vm728, %v1426, 0
          %1469 = vmatpush.msra.mxu0 0.0
          %1470 = vmatpush.msra.mxu0 0.0
          %1471 = vmatpush.msra.mxu0 0.0
          %1472 = vmatpush.msra.mxu0 0.0
          %1473 = vmatpush.msra.mxu0 0.0
          %1474 = vmatpush.msra.mxu0 0.0
          %1475 = vmatpush.msra.mxu0 0.0
          %1476 = vmatpush.msra.mxu0 0.0
          %1477 = vmatpush.msra.mxu0 0.0
          %1478 = vmatpush.msra.mxu0 0.0
          %1479 = vmatpush.msra.mxu0 0.0
          %1480 = vmatpush.msra.mxu0 0.0
          %1481 = vmatpush.msra.mxu0 0.0
          %1482 = vmatpush.msra.mxu0 0.0
          %1483 = vmatpush.msra.mxu0 %v1460
          %1484 = vmatpush.msra.mxu0 %v1458
          %1485 = vmatmul.f32.gmra.mxu0 %v1464
          %v1486 = vpop.f32.mrf.mxu0
          %v1487 = vadd.f32 0.0, %v1486
          %1488 = vmatmul.f32.gmra.mxu0 %v1467
          %v1489 = vpop.f32.mrf.mxu0
          %v1490 = vadd.f32 0.0, %v1489
          %1491 = vdwg.mxu0
          %v1492 = vadd.f32 %v1455, %v1487
          %v1493 = vadd.f32 %v1456, %v1490
          %1494 = vst.msk [vmem:[%s1442] sm:$0xff] %vm895, %v1492
          %1495 = vst.msk [vmem:[%s1442 + $0x8] sm:$0xff] %vm895, %v1493
          %1496 = vst.msk [vmem:[%s1394] sm:$0xff] %vm847, %v1403
          %1497 = vst.msk [vmem:[%s1394 + $0x8] sm:$0xff] %vm847, %v1404
          %1498 = vrot.lane.b32.xlu0 %v620, 96
          %v1499 = vpop.permute.xlu0 %1498
          %1500 = vrot.lane.b32.xlu0 %v621, 96
          %v1501 = vpop.permute.xlu0 %1500
          %v1504 = vmul.f32 %v614, %v1499
          %v1505 = vmul.f32 %v615, %v1501
          %1506 = vrot.lane.b32.xlu0 %v622, 112
          %v1507 = vpop.permute.xlu0 %1506
          %1508 = vrot.lane.b32.xlu0 %v623, 112
          %v1509 = vpop.permute.xlu0 %1508
          %v1512 = vmul.f32 %v614, %v1507
          %v1513 = vmul.f32 %v615, %v1509
          %1516 = vrot.lane.b32.xlu0 %v1512, 112
          %v1517 = vpop.permute.xlu0 %1516
          %1518 = vrot.lane.b32.xlu0 %v1513, 112
          %v1519 = vpop.permute.xlu0 %1518
          %v1522 = vsub.f32 %v1504, %v1517
          %v1523 = vsub.f32 %v1505, %v1519
          %1524 = vrot.lane.b32.xlu0 %v622, 96
          %v1525 = vpop.permute.xlu0 %1524
          %1526 = vrot.lane.b32.xlu0 %v623, 96
          %v1527 = vpop.permute.xlu0 %1526
          %v1530 = vmul.f32 %v614, %v1525
          %v1531 = vmul.f32 %v615, %v1527
          %1532 = vrot.lane.b32.xlu0 %v620, 112
          %v1533 = vpop.permute.xlu0 %1532
          %1534 = vrot.lane.b32.xlu0 %v621, 112
          %v1535 = vpop.permute.xlu0 %1534
          %v1538 = vmul.f32 %v614, %v1533
          %v1539 = vmul.f32 %v615, %v1535
          %1542 = vrot.lane.b32.xlu0 %v1538, 112
          %v1543 = vpop.permute.xlu0 %1542
          %1544 = vrot.lane.b32.xlu0 %v1539, 112
          %v1545 = vpop.permute.xlu0 %1544
          %v1548 = vadd.f32 %v1530, %v1543
          %v1549 = vadd.f32 %v1531, %v1545
          %1550 = vrot.lane.b32.xlu0 %v624, 96
          %v1551 = vpop.permute.xlu0 %1550
          %1552 = vrot.lane.b32.xlu0 %v625, 96
          %v1553 = vpop.permute.xlu0 %1552
          %v1556 = vmul.f32 %v616, %v1551
          %v1557 = vmul.f32 %v617, %v1553
          %1558 = vrot.lane.b32.xlu0 %v626, 112
          %v1559 = vpop.permute.xlu0 %1558
          %1560 = vrot.lane.b32.xlu0 %v627, 112
          %v1561 = vpop.permute.xlu0 %1560
          %v1564 = vmul.f32 %v616, %v1559
          %v1565 = vmul.f32 %v617, %v1561
          %1568 = vrot.lane.b32.xlu0 %v1564, 112
          %v1569 = vpop.permute.xlu0 %1568
          %1570 = vrot.lane.b32.xlu0 %v1565, 112
          %v1571 = vpop.permute.xlu0 %1570
          %v1574 = vsub.f32 %v1556, %v1569
          %v1575 = vsub.f32 %v1557, %v1571
          %1576 = vrot.lane.b32.xlu0 %v626, 96
          %v1577 = vpop.permute.xlu0 %1576
          %1578 = vrot.lane.b32.xlu0 %v627, 96
          %v1579 = vpop.permute.xlu0 %1578
          %v1582 = vmul.f32 %v616, %v1577
          %v1583 = vmul.f32 %v617, %v1579
          %1584 = vrot.lane.b32.xlu0 %v624, 112
          %v1585 = vpop.permute.xlu0 %1584
          %1586 = vrot.lane.b32.xlu0 %v625, 112
          %v1587 = vpop.permute.xlu0 %1586
          %v1590 = vmul.f32 %v616, %v1585
          %v1591 = vmul.f32 %v617, %v1587
          %1594 = vrot.lane.b32.xlu0 %v1590, 112
          %v1595 = vpop.permute.xlu0 %1594
          %1596 = vrot.lane.b32.xlu0 %v1591, 112
          %v1597 = vpop.permute.xlu0 %1596
          %v1600 = vadd.f32 %v1582, %v1595
          %v1601 = vadd.f32 %v1583, %v1597
          %1604 = vrot.lane.b32.xlu0 %v1548, 32
          %v1605 = vpop.permute.xlu0 %1604
          %1606 = vrot.lane.b32.xlu0 %v1549, 32
          %v1607 = vpop.permute.xlu0 %1606
          %1610 = vrot.lane.b32.xlu0 %v1600, 32
          %v1611 = vpop.permute.xlu0 %1610
          %1612 = vrot.lane.b32.xlu0 %v1601, 32
          %v1613 = vpop.permute.xlu0 %1612
          %v1614 = vsel %vm728, %v1605, 0
          %v1616 = vsel %vm728, %v1607, 0
          %v1618 = vsel %vm728, %v1611, 0
          %v1620 = vsel %vm728, %v1613, 0
          %1622 = vmatpush.xpose.msra.mxu0 0.0
          %1623 = vmatpush.xpose.msra.mxu0 0.0
          %1624 = vmatpush.xpose.msra.mxu0 0.0
          %1625 = vmatpush.xpose.msra.mxu0 0.0
          %1626 = vmatpush.xpose.msra.mxu0 0.0
          %1627 = vmatpush.xpose.msra.mxu0 0.0
          %1628 = vmatpush.xpose.msra.mxu0 0.0
          %1629 = vmatpush.xpose.msra.mxu0 0.0
          %1630 = vmatpush.xpose.msra.mxu0 0.0
          %1631 = vmatpush.xpose.msra.mxu0 0.0
          %1632 = vmatpush.xpose.msra.mxu0 0.0
          %1633 = vmatpush.xpose.msra.mxu0 0.0
          %1634 = vmatpush.xpose.msra.mxu0 0.0
          %1635 = vmatpush.xpose.msra.mxu0 0.0
          %1636 = vmatpush.xpose.msra.mxu0 %v1620
          %1637 = vmatpush.xpose.msra.mxu0 %v1618
          %1638 = vmatmul.f32.gmra.mxu0 %v1614
          %v1639 = vpop.f32.mrf.mxu0
          %v1640 = vadd.f32 0.0, %v1639
          %1641 = vmatmul.f32.gmra.mxu0 %v1616
          %v1642 = vpop.f32.mrf.mxu0
          %v1643 = vadd.f32 0.0, %v1642
          %1644 = vdwg.mxu0
          %1647 = vrot.lane.b32.xlu0 %v1522, 32
          %v1648 = vpop.permute.xlu0 %1647
          %1649 = vrot.lane.b32.xlu0 %v1523, 32
          %v1650 = vpop.permute.xlu0 %1649
          %1653 = vrot.lane.b32.xlu0 %v1574, 32
          %v1654 = vpop.permute.xlu0 %1653
          %1655 = vrot.lane.b32.xlu0 %v1575, 32
          %v1656 = vpop.permute.xlu0 %1655
          %v1657 = vsel %vm728, %v1648, 0
          %v1659 = vsel %vm728, %v1650, 0
          %v1661 = vsel %vm728, %v1654, 0
          %v1663 = vsel %vm728, %v1656, 0
          %1665 = vmatpush.xpose.msra.mxu0 0.0
          %1666 = vmatpush.xpose.msra.mxu0 0.0
          %1667 = vmatpush.xpose.msra.mxu0 0.0
          %1668 = vmatpush.xpose.msra.mxu0 0.0
          %1669 = vmatpush.xpose.msra.mxu0 0.0
          %1670 = vmatpush.xpose.msra.mxu0 0.0
          %1671 = vmatpush.xpose.msra.mxu0 0.0
          %1672 = vmatpush.xpose.msra.mxu0 0.0
          %1673 = vmatpush.xpose.msra.mxu0 0.0
          %1674 = vmatpush.xpose.msra.mxu0 0.0
          %1675 = vmatpush.xpose.msra.mxu0 0.0
          %1676 = vmatpush.xpose.msra.mxu0 0.0
          %1677 = vmatpush.xpose.msra.mxu0 0.0
          %1678 = vmatpush.xpose.msra.mxu0 0.0
          %1679 = vmatpush.xpose.msra.mxu0 %v1663
          %1680 = vmatpush.xpose.msra.mxu0 %v1661
          %1681 = vmatmul.f32.gmra.mxu0 %v1657
          %v1682 = vpop.f32.mrf.mxu0
          %v1683 = vadd.f32 %v1640, %v1682
          %1684 = vmatmul.f32.gmra.mxu0 %v1659
          %v1685 = vpop.f32.mrf.mxu0
          %v1686 = vadd.f32 %v1643, %v1685
          %1687 = vdwg.mxu0
          %v1688 = vmul.f32 %v1683, 0.17677669
          %v1689 = vmul.f32 %v1686, 0.17677669
          %v1690 = vsel %vm638, %v1688, -1e+30
          %v1691 = vsel %vm639, %v1689, -1e+30
          %s1692 = scalar_lea.vmem [#allocation2], 48
          %v1693 = vld [vmem:[%s1692] sm:$0xff]
          %v1694 = vld [vmem:[%s1692 + $0x8] sm:$0xff]
          %v1695 = vsel %vm728, %v1690, -inf
          %1696 = vmax.xlane.f32.xlu0 %v1695
          %v1697 = vpop.xlane.xlu0 %1696
          %v1698 = vsel %vm728, %v1691, -inf
          %1699 = vmax.xlane.f32.xlu0 %v1698
          %v1700 = vpop.xlane.xlu0 %1699
          %v1701 = vmax.f32 %v1693, %v1697
          %v1702 = vmax.f32 %v1694, %v1700
          %v1703 = vsub.f32 %v1693, %v1701
          %v1704 = vsub.f32 %v1694, %v1702
          %v1705 = vmul.f32 %v1703, 1.442695
          %v1706 = vpow.pop %v1705
          %v1707 = vmul.f32 %v1704, 1.442695
          %v1708 = vpow.pop %v1707
          %1710 = vset.pattern.permute.xlu0 0
          %1711 = vperm.xlu0 %1710, %v1701
          %v1712 = vpop.permute.xlu0 %1711
          %1715 = vset.pattern.permute.xlu0 0
          %1716 = vperm.xlu0 %1715, %v1702
          %v1717 = vpop.permute.xlu0 %1716
          %v1719 = vsub.f32 %v1690, %v1712
          %v1720 = vsub.f32 %v1691, %v1717
          %v1721 = vmul.f32 %v1719, 1.442695
          %v1722 = vpow.pop %v1721
          %v1723 = vmul.f32 %v1720, 1.442695
          %v1724 = vpow.pop %v1723
          %s1725 = scalar_lea.vmem [#allocation3], 48
          %v1726 = vld [vmem:[%s1725] sm:$0xff]
          %v1727 = vld [vmem:[%s1725 + $0x8] sm:$0xff]
          %v1728 = vmul.f32 %v1706, %v1726
          %v1729 = vmul.f32 %v1708, %v1727
          %v1730 = vsel %vm728, %v1722, 0.0
          %1731 = vadd.xlane.f32.xlu0 %v1730
          %v1732 = vpop.xlane.xlu0 %1731
          %v1733 = vsel %vm728, %v1724, 0.0
          %1734 = vadd.xlane.f32.xlu0 %v1733
          %v1735 = vpop.xlane.xlu0 %1734
          %v1736 = vadd.f32 %v1728, %v1732
          %v1737 = vadd.f32 %v1729, %v1735
          %1738 = vst.msk [vmem:[%s1725] sm:$0xff] %vm847, %v1736
          %1739 = vst.msk [vmem:[%s1725 + $0x8] sm:$0xff] %vm847, %v1737
          %s1740 = scalar_lea.vmem [#allocation4], 48
          %v1741 = vld [vmem:[%s1740] sm:$0xff]
          %v1742 = vld [vmem:[%s1740 + $0x8] sm:$0xff]
          %1744 = vset.pattern.permute.xlu0 0
          %1745 = vperm.xlu0 %1744, %v1706
          %v1746 = vpop.permute.xlu0 %1745
          %1749 = vset.pattern.permute.xlu0 0
          %1750 = vperm.xlu0 %1749, %v1708
          %v1751 = vpop.permute.xlu0 %1750
          %v1753 = vmul.f32 %v1746, %v1741
          %v1754 = vmul.f32 %v1751, %v1742
          %1755 = vrot.lane.b32.xlu0 %v618, 32
          %v1756 = vpop.permute.xlu0 %1755
          %1757 = vrot.lane.b32.xlu0 %v619, 32
          %v1758 = vpop.permute.xlu0 %1757
          %v1762 = vsel %vm728, %v1722, 0
          %v1765 = vsel %vm728, %v1724, 0
          %1767 = vmatpush.msra.mxu0 0.0
          %1768 = vmatpush.msra.mxu0 0.0
          %1769 = vmatpush.msra.mxu0 0.0
          %1770 = vmatpush.msra.mxu0 0.0
          %1771 = vmatpush.msra.mxu0 0.0
          %1772 = vmatpush.msra.mxu0 0.0
          %1773 = vmatpush.msra.mxu0 0.0
          %1774 = vmatpush.msra.mxu0 0.0
          %1775 = vmatpush.msra.mxu0 0.0
          %1776 = vmatpush.msra.mxu0 0.0
          %1777 = vmatpush.msra.mxu0 0.0
          %1778 = vmatpush.msra.mxu0 0.0
          %1779 = vmatpush.msra.mxu0 0.0
          %1780 = vmatpush.msra.mxu0 0.0
          %1781 = vmatpush.msra.mxu0 %v1758
          %1782 = vmatpush.msra.mxu0 %v1756
          %1783 = vmatmul.f32.gmra.mxu0 %v1762
          %v1784 = vpop.f32.mrf.mxu0
          %v1785 = vadd.f32 0.0, %v1784
          %1786 = vmatmul.f32.gmra.mxu0 %v1765
          %v1787 = vpop.f32.mrf.mxu0
          %v1788 = vadd.f32 0.0, %v1787
          %1789 = vdwg.mxu0
          %v1790 = vadd.f32 %v1753, %v1785
          %v1791 = vadd.f32 %v1754, %v1788
          %1792 = vst.msk [vmem:[%s1740] sm:$0xff] %vm895, %v1790
          %1793 = vst.msk [vmem:[%s1740 + $0x8] sm:$0xff] %vm895, %v1791
          %1794 = vst.msk [vmem:[%s1692] sm:$0xff] %vm847, %v1701
          %1795 = vst.msk [vmem:[%s1692 + $0x8] sm:$0xff] %vm847, %v1702
        $region170: #{transformer_block.11} parent=149 // pred_fallthru
          _
        // Predicated region
        $region171: #{transformer_block.11} parent=149 // pred_check
          %p1796 = pneg %p577
        $region172: #{transformer_block.11} parent=149 // pred_check_branch
          %1798 = sbr.rel (%p1796) target = $region174
        $region173: #{transformer_block.11} parent=149 // pred_region
          %v1799 = vld [vmem:[#allocation4] sm:$0xff]
          %v1800 = vld [vmem:[#allocation4 + $0x8] sm:$0xff]
          %v1801 = vld [vmem:[#allocation3] sm:$0xff]
          %v1802 = vld [vmem:[#allocation3 + $0x8] sm:$0xff]
          %v1803 = vrcp.pop %v1801
          %v1804 = vrcp.pop %v1802
          %1806 = vset.pattern.permute.xlu0 0
          %1807 = vperm.xlu0 %1806, %v1803
          %v1808 = vpop.permute.xlu0 %1807
          %1811 = vset.pattern.permute.xlu0 0
          %1812 = vperm.xlu0 %1811, %v1804
          %v1813 = vpop.permute.xlu0 %1812
          %v1815 = vmul.f32 %v1799, %v1808
          %v1816 = vmul.f32 %v1800, %v1813
          %vm1817 = vcmask 261120
          %1818 = vst.msk [vmem:[%s575] sm:$0xff] %vm1817, %v1815
          %1819 = vst.msk [vmem:[%s575 + $0x8] sm:$0xff] %vm1817, %v1816
          %s1820 = scalar_lea.vmem [#allocation4], 16
          %v1821 = vld [vmem:[%s1820] sm:$0xff]
          %v1822 = vld [vmem:[%s1820 + $0x8] sm:$0xff]
          %s1823 = scalar_lea.vmem [#allocation3], 16
          %v1824 = vld [vmem:[%s1823] sm:$0xff]
          %v1825 = vld [vmem:[%s1823 + $0x8] sm:$0xff]
          %v1826 = vrcp.pop %v1824
          %v1827 = vrcp.pop %v1825
          %1829 = vset.pattern.permute.xlu0 0
          %1830 = vperm.xlu0 %1829, %v1826
          %v1831 = vpop.permute.xlu0 %1830
          %1834 = vset.pattern.permute.xlu0 0
          %1835 = vperm.xlu0 %1834, %v1827
          %v1836 = vpop.permute.xlu0 %1835
          %v1838 = vmul.f32 %v1821, %v1831
          %v1839 = vmul.f32 %v1822, %v1836
          %1842 = vrot.lane.b32.xlu0 %v1838, 32
          %v1843 = vpop.permute.xlu0 %1842
          %1844 = vrot.lane.b32.xlu0 %v1839, 32
          %v1845 = vpop.permute.xlu0 %1844
          %vm1848 = vcmask 523520
          %1849 = vst.msk [vmem:[%s575] sm:$0xff] %vm1848, %v1843
          %1850 = vst.msk [vmem:[%s575 + $0x8] sm:$0xff] %vm1848, %v1845
          %s1851 = scalar_lea.vmem [#allocation4], 32
          %v1852 = vld [vmem:[%s1851] sm:$0xff]
          %v1853 = vld [vmem:[%s1851 + $0x8] sm:$0xff]
          %s1854 = scalar_lea.vmem [#allocation3], 32
          %v1855 = vld [vmem:[%s1854] sm:$0xff]
          %v1856 = vld [vmem:[%s1854 + $0x8] sm:$0xff]
          %v1857 = vrcp.pop %v1855
          %v1858 = vrcp.pop %v1856
          %1860 = vset.pattern.permute.xlu0 0
          %1861 = vperm.xlu0 %1860, %v1857
          %v1862 = vpop.permute.xlu0 %1861
          %1865 = vset.pattern.permute.xlu0 0
          %1866 = vperm.xlu0 %1865, %v1858
          %v1867 = vpop.permute.xlu0 %1866
          %v1869 = vmul.f32 %v1852, %v1862
          %v1870 = vmul.f32 %v1853, %v1867
          %1873 = vrot.lane.b32.xlu0 %v1869, 64
          %v1874 = vpop.permute.xlu0 %1873
          %1875 = vrot.lane.b32.xlu0 %v1870, 64
          %v1876 = vpop.permute.xlu0 %1875
          %vm1879 = vcmask 785920
          %1880 = vst.msk [vmem:[%s575] sm:$0xff] %vm1879, %v1874
          %1881 = vst.msk [vmem:[%s575 + $0x8] sm:$0xff] %vm1879, %v1876
          %s1882 = scalar_lea.vmem [#allocation4], 48
          %v1883 = vld [vmem:[%s1882] sm:$0xff]
          %v1884 = vld [vmem:[%s1882 + $0x8] sm:$0xff]
          %s1885 = scalar_lea.vmem [#allocation3], 48
          %v1886 = vld [vmem:[%s1885] sm:$0xff]
          %v1887 = vld [vmem:[%s1885 + $0x8] sm:$0xff]
          %v1888 = vrcp.pop %v1886
          %v1889 = vrcp.pop %v1887
          %1891 = vset.pattern.permute.xlu0 0
          %1892 = vperm.xlu0 %1891, %v1888
          %v1893 = vpop.permute.xlu0 %1892
          %1896 = vset.pattern.permute.xlu0 0
          %1897 = vperm.xlu0 %1896, %v1889
          %v1898 = vpop.permute.xlu0 %1897
          %v1900 = vmul.f32 %v1883, %v1893
          %v1901 = vmul.f32 %v1884, %v1898
          %1904 = vrot.lane.b32.xlu0 %v1900, 96
          %v1905 = vpop.permute.xlu0 %1904
          %1906 = vrot.lane.b32.xlu0 %v1901, 96
          %v1907 = vpop.permute.xlu0 %1906
          %vm1910 = vcmask 1048320
          %1911 = vst.msk [vmem:[%s575] sm:$0xff] %vm1910, %v1905
          %1912 = vst.msk [vmem:[%s575 + $0x8] sm:$0xff] %vm1910, %v1907
        $region174: #{transformer_block.11} parent=149 // pred_fallthru
          _
        %s1913 = smul.u32 2, %s24
        %p1914 = scmp.lt.s32.totalorder %s23, 1
        %s1915 = scalar_select %p1914, %s23, 1
        %p1916 = scmp.lt.s32.totalorder %s1913, 1
        %s1917 = scalar_select %p1916, %s1913, 1
        %s1918 = smul.addr %s1915, 2
        %s1919 = sadd.s32 %s1917, %s1918
        %s1920 = smul.addr %s1919, 8
        %s1921 = scalar_lea.vmem %s7, %s1920
        // Predicated region
        $region175: #{transformer_block.11} parent=149 // pred_check
          %p1922 = pneg %p245
        $region176: #{transformer_block.11} parent=149 // pred_check_branch
          %1924 = sbr.rel (%p1922) target = $region178
        $region177: #{transformer_block.11} parent=149 // pred_region
          %s1925 = smul.u32 2, %s24
        $region178: #{transformer_block.11} parent=149 // pred_fallthru
          _
      $region150: #{transformer_block.11} parent=5 // pred_fallthru
        _
      %p1926 = scmp.le.s32.totalorder 2, %s13
      // Predicated region
      $region179: #{transformer_block.11} parent=5 // pred_check
        %p1927 = pneg %p1926
      $region180: #{transformer_block.11} parent=5 // pred_check_branch
        %1929 = sbr.rel (%p1927) target = $region182
      $region181: #{transformer_block.11} parent=5 // pred_region
        %s1930 = ssub.s32 %s13, 2
        // Predicated region
        $region183: #{transformer_block.11} parent=181 // pred_check
          %p1931 = pneg %p251
        $region184: #{transformer_block.11} parent=181 // pred_check_branch
          %1933 = sbr.rel (%p1931) target = $region186
        $region185: #{transformer_block.11} parent=181 // pred_region
          %s1934 = smul.u32 2, %s27
          %p1935 = scmp.lt.s32.totalorder %s26, 1
          %s1936 = scalar_select %p1935, %s26, 1
          %p1937 = scmp.lt.s32.totalorder %s1934, 1
          %s1938 = scalar_select %p1937, %s1934, 1
          %s1939 = smul.addr %s1936, 2
          %s1940 = sadd.s32 %s1938, %s1939
          %s1941 = smul.addr %s1940, 8
          %s1942 = scalar_lea.vmem %s7, %s1941
        $region186: #{transformer_block.11} parent=181 // pred_fallthru
          _
      $region182: #{transformer_block.11} parent=5 // pred_fallthru
        _
    $region6: #{transformer_block.11} parent=1 // loop_footer
      %s17 = sadd.s32 1, %s13
    $region7: #{transformer_block.11} parent=1 // loop_footer_branch
      %12 = sbr.rel target = $region3
    $region8: #{transformer_block.11} parent=1 // loop_exit
      _

// kernel: transformer_block.16
$region0: #{transformer_block.16}
  #allocation0 [shape = 'u32[]', space=smem, size = 0x4, offset = 0x4, fixed_abs, tag = 'smem constant byte address 0x4 - core index']
  #allocation1 [shape = 'u32[72,128]{1,0:T(1,128)}', space=vmem, size = 0x9000, scoped, tag = 'internal scratch']
  %s0 = inlined_call_operand.vmem [shape: f32[32,1024], index: 0, kind: input, shape index: {}, may-alias: {0,1}]
  %s1 = inlined_call_operand.vmem [shape: f32[32,1024], index: 1, kind: input, shape index: {}, may-alias: {0,1}]
  %s2 = inlined_call_operand.vmem [shape: bf16[32,512], index: 2, kind: output, shape index: {0}]
  %s3 = inlined_call_operand.vmem [shape: f32[32,1], index: 3, kind: output, shape index: {1}]
  %4 = xla_tuple %s2, %s3
  %s5 = sld [smem:[#allocation0]]
  $region72: #{transformer_block.16} parent=0
    _
  %s7 = ssub.s32 1, %s5
  %s8 = scalar_select 0, %s7, %s5
  $region1: #{transformer_block.16} parent=0
    #allocation2 [shape = 'u8[65536]{0}', space=vmem, size = 0x10000, scoped, tag = 'input window, operand 0, single buffered']
    #allocation3 [shape = 'u8[65536]{0}', space=vmem, size = 0x10000, scoped, tag = 'input window, operand 1, single buffered']
    // Predicated region
    $region2: #{transformer_block.16} parent=1 // pred_check
      _
    $region3: #{transformer_block.16} parent=1 // pred_check_branch
      %10 = sbr.rel (0) target = $region5
    $region4: #{transformer_block.16} parent=1 // pred_region
      // Predicated region
      $region6: #{transformer_block.16} parent=4 // pred_check
        _
      $region7: #{transformer_block.16} parent=4 // pred_check_branch
        %12 = sbr.rel (0) target = $region9
      $region8: #{transformer_block.16} parent=4 // pred_region
        // Predicated region
        $region10: #{transformer_block.16} parent=8 // pred_check
          _
        $region11: #{transformer_block.16} parent=8 // pred_check_branch
          %14 = sbr.rel (0) target = $region13
        $region12: #{transformer_block.16} parent=8 // pred_region
          loop: start=0, step=1, limit=1
          $region14: #{transformer_block.16} parent=12 // loop_pre_header
            _
          $region15: #{transformer_block.16} parent=12 // loop_header
            %s16 = sphi 0, %s20
            %p17 = scmp.ge.s32.totalorder %s16, 1
            %s21 = sphi %s0, %s0
            %s22 = sphi [#allocation2], [#allocation2]
          $region16: #{transformer_block.16} parent=12 // loop_header_branch
            %19 = sbr.rel (%p17) target = $region20
          $region17: #{transformer_block.16} parent=12 // loop_body
            %v23 = vld [vmem:[%s21] sm:$0xff]
            %24 = vst [vmem:[%s22] sm:$0xff] %v23
            %v25 = vld [vmem:[%s21 + $0x8] sm:$0xff]
            %26 = vst [vmem:[%s22 + $0x8] sm:$0xff] %v25
            %v27 = vld [vmem:[%s21 + $0x10] sm:$0xff]
            %28 = vst [vmem:[%s22 + $0x10] sm:$0xff] %v27
            %v29 = vld [vmem:[%s21 + $0x18] sm:$0xff]
            %30 = vst [vmem:[%s22 + $0x18] sm:$0xff] %v29
            %v31 = vld [vmem:[%s21 + $0x40] sm:$0xff]
            %32 = vst [vmem:[%s22 + $0x20] sm:$0xff] %v31
            %v33 = vld [vmem:[%s21 + $0x48] sm:$0xff]
            %34 = vst [vmem:[%s22 + $0x28] sm:$0xff] %v33
            %v35 = vld [vmem:[%s21 + $0x50] sm:$0xff]
            %36 = vst [vmem:[%s22 + $0x30] sm:$0xff] %v35
            %v37 = vld [vmem:[%s21 + $0x58] sm:$0xff]
            %38 = vst [vmem:[%s22 + $0x38] sm:$0xff] %v37
            %v39 = vld [vmem:[%s21 + $0x80] sm:$0xff]
            %40 = vst [vmem:[%s22 + $0x40] sm:$0xff] %v39
            %v41 = vld [vmem:[%s21 + $0x88] sm:$0xff]
            %42 = vst [vmem:[%s22 + $0x48] sm:$0xff] %v41
            %v43 = vld [vmem:[%s21 + $0x90] sm:$0xff]
            %44 = vst [vmem:[%s22 + $0x50] sm:$0xff] %v43
            %v45 = vld [vmem:[%s21 + $0x98] sm:$0xff]
            %46 = vst [vmem:[%s22 + $0x58] sm:$0xff] %v45
            %v47 = vld [vmem:[%s21 + $0xc0] sm:$0xff]
            %48 = vst [vmem:[%s22 + $0x60] sm:$0xff] %v47
            %v49 = vld [vmem:[%s21 + $0xc8] sm:$0xff]
            %50 = vst [vmem:[%s22 + $0x68] sm:$0xff] %v49
            %v51 = vld [vmem:[%s21 + $0xd0] sm:$0xff]
            %52 = vst [vmem:[%s22 + $0x70] sm:$0xff] %v51
            %v53 = vld [vmem:[%s21 + $0xd8] sm:$0xff]
            %54 = vst [vmem:[%s22 + $0x78] sm:$0xff] %v53
          $region18: #{transformer_block.16} parent=12 // loop_footer
            %s20 = sadd.s32 1, %s16
          $region19: #{transformer_block.16} parent=12 // loop_footer_branch
            %15 = sbr.rel target = $region15
          $region20: #{transformer_block.16} parent=12 // loop_exit
            _
        $region13: #{transformer_block.16} parent=8 // pred_fallthru
          _
        // Predicated region
        $region21: #{transformer_block.16} parent=8 // pred_check
          _
        $region22: #{transformer_block.16} parent=8 // pred_check_branch
          %56 = sbr.rel target = $region24
        $region23: #{transformer_block.16} parent=8 // pred_region
          _
        $region24: #{transformer_block.16} parent=8 // pred_fallthru
          _
      $region9: #{transformer_block.16} parent=4 // pred_fallthru
        _
      %57 = vnop
    $region5: #{transformer_block.16} parent=1 // pred_fallthru
      _
    // Predicated region
    $region25: #{transformer_block.16} parent=1 // pred_check
      _
    $region26: #{transformer_block.16} parent=1 // pred_check_branch
      %59 = sbr.rel (0) target = $region28
    $region27: #{transformer_block.16} parent=1 // pred_region
      %s60 = scalar_lea.vmem %s1, 32
      // Predicated region
      $region29: #{transformer_block.16} parent=27 // pred_check
        _
      $region30: #{transformer_block.16} parent=27 // pred_check_branch
        %62 = sbr.rel (0) target = $region32
      $region31: #{transformer_block.16} parent=27 // pred_region
        // Predicated region
        $region33: #{transformer_block.16} parent=31 // pred_check
          _
        $region34: #{transformer_block.16} parent=31 // pred_check_branch
          %64 = sbr.rel (0) target = $region36
        $region35: #{transformer_block.16} parent=31 // pred_region
          loop: start=0, step=1, limit=1
          $region37: #{transformer_block.16} parent=35 // loop_pre_header
            _
          $region38: #{transformer_block.16} parent=35 // loop_header
            %s66 = sphi 0, %s70
            %p67 = scmp.ge.s32.totalorder %s66, 1
            %s71 = sphi %s60, %s60
            %s72 = sphi [#allocation3], [#allocation3]
          $region39: #{transformer_block.16} parent=35 // loop_header_branch
            %69 = sbr.rel (%p67) target = $region43
          $region40: #{transformer_block.16} parent=35 // loop_body
            %v73 = vld [vmem:[%s71] sm:$0xff]
            %74 = vst [vmem:[%s72] sm:$0xff] %v73
            %v75 = vld [vmem:[%s71 + $0x8] sm:$0xff]
            %76 = vst [vmem:[%s72 + $0x8] sm:$0xff] %v75
            %v77 = vld [vmem:[%s71 + $0x10] sm:$0xff]
            %78 = vst [vmem:[%s72 + $0x10] sm:$0xff] %v77
            %v79 = vld [vmem:[%s71 + $0x18] sm:$0xff]
            %80 = vst [vmem:[%s72 + $0x18] sm:$0xff] %v79
            %v81 = vld [vmem:[%s71 + $0x40] sm:$0xff]
            %82 = vst [vmem:[%s72 + $0x20] sm:$0xff] %v81
            %v83 = vld [vmem:[%s71 + $0x48] sm:$0xff]
            %84 = vst [vmem:[%s72 + $0x28] sm:$0xff] %v83
            %v85 = vld [vmem:[%s71 + $0x50] sm:$0xff]
            %86 = vst [vmem:[%s72 + $0x30] sm:$0xff] %v85
            %v87 = vld [vmem:[%s71 + $0x58] sm:$0xff]
            %88 = vst [vmem:[%s72 + $0x38] sm:$0xff] %v87
            %v89 = vld [vmem:[%s71 + $0x80] sm:$0xff]
            %90 = vst [vmem:[%s72 + $0x40] sm:$0xff] %v89
            %v91 = vld [vmem:[%s71 + $0x88] sm:$0xff]
            %92 = vst [vmem:[%s72 + $0x48] sm:$0xff] %v91
            %v93 = vld [vmem:[%s71 + $0x90] sm:$0xff]
            %94 = vst [vmem:[%s72 + $0x50] sm:$0xff] %v93
            %v95 = vld [vmem:[%s71 + $0x98] sm:$0xff]
            %96 = vst [vmem:[%s72 + $0x58] sm:$0xff] %v95
            %v97 = vld [vmem:[%s71 + $0xc0] sm:$0xff]
            %98 = vst [vmem:[%s72 + $0x60] sm:$0xff] %v97
            %v99 = vld [vmem:[%s71 + $0xc8] sm:$0xff]
            %100 = vst [vmem:[%s72 + $0x68] sm:$0xff] %v99
            %v101 = vld [vmem:[%s71 + $0xd0] sm:$0xff]
            %102 = vst [vmem:[%s72 + $0x70] sm:$0xff] %v101
            %v103 = vld [vmem:[%s71 + $0xd8] sm:$0xff]
            %104 = vst [vmem:[%s72 + $0x78] sm:$0xff] %v103
          $region41: #{transformer_block.16} parent=35 // loop_footer
            %s70 = sadd.s32 1, %s66
          $region42: #{transformer_block.16} parent=35 // loop_footer_branch
            %65 = sbr.rel target = $region38
          $region43: #{transformer_block.16} parent=35 // loop_exit
            _
        $region36: #{transformer_block.16} parent=31 // pred_fallthru
          _
        // Predicated region
        $region44: #{transformer_block.16} parent=31 // pred_check
          _
        $region45: #{transformer_block.16} parent=31 // pred_check_branch
          %106 = sbr.rel target = $region47
        $region46: #{transformer_block.16} parent=31 // pred_region
          _
        $region47: #{transformer_block.16} parent=31 // pred_fallthru
          _
      $region32: #{transformer_block.16} parent=27 // pred_fallthru
        _
      %107 = vnop
    $region28: #{transformer_block.16} parent=1 // pred_fallthru
      _
    // Predicated region
    $region48: #{transformer_block.16} parent=1 // pred_check
      _
    $region49: #{transformer_block.16} parent=1 // pred_check_branch
      %109 = sbr.rel (0) target = $region51
    $region50: #{transformer_block.16} parent=1 // pred_region
      _
    $region51: #{transformer_block.16} parent=1 // pred_fallthru
      _
    // Predicated region
    $region52: #{transformer_block.16} parent=1 // pred_check
      _
    $region53: #{transformer_block.16} parent=1 // pred_check_branch
      %111 = sbr.rel (0) target = $region55
    $region54: #{transformer_block.16} parent=1 // pred_region
      _
    $region55: #{transformer_block.16} parent=1 // pred_fallthru
      _
    %v112 = vld [vmem:[#allocation2] sm:$0xff]
    %v113 = vld [vmem:[#allocation2 + $0x8] sm:$0xff]
    %v114 = vld [vmem:[#allocation2 + $0x10] sm:$0xff]
    %v115 = vld [vmem:[#allocation2 + $0x18] sm:$0xff]
    %v116 = vld [vmem:[#allocation2 + $0x20] sm:$0xff]
    %v117 = vld [vmem:[#allocation2 + $0x28] sm:$0xff]
    %v118 = vld [vmem:[#allocation2 + $0x30] sm:$0xff]
    %v119 = vld [vmem:[#allocation2 + $0x38] sm:$0xff]
    %v120 = vld [vmem:[#allocation2 + $0x40] sm:$0xff]
    %v121 = vld [vmem:[#allocation2 + $0x48] sm:$0xff]
    %v122 = vld [vmem:[#allocation2 + $0x50] sm:$0xff]
    %v123 = vld [vmem:[#allocation2 + $0x58] sm:$0xff]
    %v124 = vld [vmem:[#allocation2 + $0x60] sm:$0xff]
    %v125 = vld [vmem:[#allocation2 + $0x68] sm:$0xff]
    %v126 = vld [vmem:[#allocation2 + $0x70] sm:$0xff]
    %v127 = vld [vmem:[#allocation2 + $0x78] sm:$0xff]
    %v128 = vxor.u32 %v112, 2147483648
    %v129 = vxor.u32 %v113, 2147483648
    %v130 = vxor.u32 %v114, 2147483648
    %v131 = vxor.u32 %v115, 2147483648
    %v132 = vxor.u32 %v116, 2147483648
    %v133 = vxor.u32 %v117, 2147483648
    %v134 = vxor.u32 %v118, 2147483648
    %v135 = vxor.u32 %v119, 2147483648
    %v136 = vxor.u32 %v120, 2147483648
    %v137 = vxor.u32 %v121, 2147483648
    %v138 = vxor.u32 %v122, 2147483648
    %v139 = vxor.u32 %v123, 2147483648
    %v140 = vxor.u32 %v124, 2147483648
    %v141 = vxor.u32 %v125, 2147483648
    %v142 = vxor.u32 %v126, 2147483648
    %v143 = vxor.u32 %v127, 2147483648
    %v144 = vmul.f32 %v128, 1.442695
    %v145 = vpow.pop %v144
    %v146 = vmul.f32 %v129, 1.442695
    %v147 = vpow.pop %v146
    %v148 = vmul.f32 %v130, 1.442695
    %v149 = vpow.pop %v148
    %v150 = vmul.f32 %v131, 1.442695
    %v151 = vpow.pop %v150
    %v152 = vmul.f32 %v132, 1.442695
    %v153 = vpow.pop %v152
    %v154 = vmul.f32 %v133, 1.442695
    %v155 = vpow.pop %v154
    %v156 = vmul.f32 %v134, 1.442695
    %v157 = vpow.pop %v156
    %v158 = vmul.f32 %v135, 1.442695
    %v159 = vpow.pop %v158
    %v160 = vmul.f32 %v136, 1.442695
    %v161 = vpow.pop %v160
    %v162 = vmul.f32 %v137, 1.442695
    %v163 = vpow.pop %v162
    %v164 = vmul.f32 %v138, 1.442695
    %v165 = vpow.pop %v164
    %v166 = vmul.f32 %v139, 1.442695
    %v167 = vpow.pop %v166
    %v168 = vmul.f32 %v140, 1.442695
    %v169 = vpow.pop %v168
    %v170 = vmul.f32 %v141, 1.442695
    %v171 = vpow.pop %v170
    %v172 = vmul.f32 %v142, 1.442695
    %v173 = vpow.pop %v172
    %v174 = vmul.f32 %v143, 1.442695
    %v175 = vpow.pop %v174
    %v176 = vadd.f32 %v145, 1.0
    %v177 = vadd.f32 %v147, 1.0
    %v178 = vadd.f32 %v149, 1.0
    %v179 = vadd.f32 %v151, 1.0
    %v180 = vadd.f32 %v153, 1.0
    %v181 = vadd.f32 %v155, 1.0
    %v182 = vadd.f32 %v157, 1.0
    %v183 = vadd.f32 %v159, 1.0
    %v184 = vadd.f32 %v161, 1.0
    %v185 = vadd.f32 %v163, 1.0
    %v186 = vadd.f32 %v165, 1.0
    %v187 = vadd.f32 %v167, 1.0
    %v188 = vadd.f32 %v169, 1.0
    %v189 = vadd.f32 %v171, 1.0
    %v190 = vadd.f32 %v173, 1.0
    %v191 = vadd.f32 %v175, 1.0
    %v192 = vrcp.pop %v176
    %v193 = vmul.f32 %v176, %v192
    %v194 = vsub.f32 1.0, %v193
    %v195 = vmul.f32 %v192, %v194
    %v196 = vadd.f32 %v192, %v195
    %vm197 = vweird.f32 %v176
    %vm198 = vweird.f32 %v192
    %vm199 = vmor %vm197, %vm198
    %v200 = vsel %vm199, %v192, %v196
    %v201 = vand.u32 2147483647, %v176
    %vm202 = vcmp.eq.f32.partialorder %v201, 8.507059e+37
    %v203 = vand.u32 %v176, 2147483648
    %v204 = vor.u32 1.1754944e-38, %v203
    %v205 = vsel %vm202, %v204, %v200
    %v206 = vmul.f32 1.0, %v205
    %v207 = vrcp.pop %v177
    %v208 = vmul.f32 %v177, %v207
    %v209 = vsub.f32 1.0, %v208
    %v210 = vmul.f32 %v207, %v209
    %v211 = vadd.f32 %v207, %v210
    %vm212 = vweird.f32 %v177
    %vm213 = vweird.f32 %v207
    %vm214 = vmor %vm212, %vm213
    %v215 = vsel %vm214, %v207, %v211
    %v216 = vand.u32 2147483647, %v177
    %vm217 = vcmp.eq.f32.partialorder %v216, 8.507059e+37
    %v218 = vand.u32 %v177, 2147483648
    %v219 = vor.u32 1.1754944e-38, %v218
    %v220 = vsel %vm217, %v219, %v215
    %v221 = vmul.f32 1.0, %v220
    %v222 = vrcp.pop %v178
    %v223 = vmul.f32 %v178, %v222
    %v224 = vsub.f32 1.0, %v223
    %v225 = vmul.f32 %v222, %v224
    %v226 = vadd.f32 %v222, %v225
    %vm227 = vweird.f32 %v178
    %vm228 = vweird.f32 %v222
    %vm229 = vmor %vm227, %vm228
    %v230 = vsel %vm229, %v222, %v226
    %v231 = vand.u32 2147483647, %v178
    %vm232 = vcmp.eq.f32.partialorder %v231, 8.507059e+37
    %v233 = vand.u32 %v178, 2147483648
    %v234 = vor.u32 1.1754944e-38, %v233
    %v235 = vsel %vm232, %v234, %v230
    %v236 = vmul.f32 1.0, %v235
    %v237 = vrcp.pop %v179
    %v238 = vmul.f32 %v179, %v237
    %v239 = vsub.f32 1.0, %v238
    %v240 = vmul.f32 %v237, %v239
    %v241 = vadd.f32 %v237, %v240
    %vm242 = vweird.f32 %v179
    %vm243 = vweird.f32 %v237
    %vm244 = vmor %vm242, %vm243
    %v245 = vsel %vm244, %v237, %v241
    %v246 = vand.u32 2147483647, %v179
    %vm247 = vcmp.eq.f32.partialorder %v246, 8.507059e+37
    %v248 = vand.u32 %v179, 2147483648
    %v249 = vor.u32 1.1754944e-38, %v248
    %v250 = vsel %vm247, %v249, %v245
    %v251 = vmul.f32 1.0, %v250
    %v252 = vrcp.pop %v180
    %v253 = vmul.f32 %v180, %v252
    %v254 = vsub.f32 1.0, %v253
    %v255 = vmul.f32 %v252, %v254
    %v256 = vadd.f32 %v252, %v255
    %vm257 = vweird.f32 %v180
    %vm258 = vweird.f32 %v252
    %vm259 = vmor %vm257, %vm258
    %v260 = vsel %vm259, %v252, %v256
    %v261 = vand.u32 2147483647, %v180
    %vm262 = vcmp.eq.f32.partialorder %v261, 8.507059e+37
    %v263 = vand.u32 %v180, 2147483648
    %v264 = vor.u32 1.1754944e-38, %v263
    %v265 = vsel %vm262, %v264, %v260
    %v266 = vmul.f32 1.0, %v265
    %v267 = vrcp.pop %v181
    %v268 = vmul.f32 %v181, %v267
    %v269 = vsub.f32 1.0, %v268
    %v270 = vmul.f32 %v267, %v269
    %v271 = vadd.f32 %v267, %v270
    %vm272 = vweird.f32 %v181
    %vm273 = vweird.f32 %v267
    %vm274 = vmor %vm272, %vm273
    %v275 = vsel %vm274, %v267, %v271
    %v276 = vand.u32 2147483647, %v181
    %vm277 = vcmp.eq.f32.partialorder %v276, 8.507059e+37
    %v278 = vand.u32 %v181, 2147483648
    %v279 = vor.u32 1.1754944e-38, %v278
    %v280 = vsel %vm277, %v279, %v275
    %v281 = vmul.f32 1.0, %v280
    %v282 = vrcp.pop %v182
    %v283 = vmul.f32 %v182, %v282
    %v284 = vsub.f32 1.0, %v283
    %v285 = vmul.f32 %v282, %v284
    %v286 = vadd.f32 %v282, %v285
    %vm287 = vweird.f32 %v182
    %vm288 = vweird.f32 %v282
    %vm289 = vmor %vm287, %vm288
    %v290 = vsel %vm289, %v282, %v286
    %v291 = vand.u32 2147483647, %v182
    %vm292 = vcmp.eq.f32.partialorder %v291, 8.507059e+37
    %v293 = vand.u32 %v182, 2147483648
    %v294 = vor.u32 1.1754944e-38, %v293
    %v295 = vsel %vm292, %v294, %v290
    %v296 = vmul.f32 1.0, %v295
    %v297 = vrcp.pop %v183
    %v298 = vmul.f32 %v183, %v297
    %v299 = vsub.f32 1.0, %v298
    %v300 = vmul.f32 %v297, %v299
    %v301 = vadd.f32 %v297, %v300
    %vm302 = vweird.f32 %v183
    %vm303 = vweird.f32 %v297
    %vm304 = vmor %vm302, %vm303
    %v305 = vsel %vm304, %v297, %v301
    %v306 = vand.u32 2147483647, %v183
    %vm307 = vcmp.eq.f32.partialorder %v306, 8.507059e+37
    %v308 = vand.u32 %v183, 2147483648
    %v309 = vor.u32 1.1754944e-38, %v308
    %v310 = vsel %vm307, %v309, %v305
    %v311 = vmul.f32 1.0, %v310
    %v312 = vrcp.pop %v184
    %v313 = vmul.f32 %v184, %v312
    %v314 = vsub.f32 1.0, %v313
    %v315 = vmul.f32 %v312, %v314
    %v316 = vadd.f32 %v312, %v315
    %vm317 = vweird.f32 %v184
    %vm318 = vweird.f32 %v312
    %vm319 = vmor %vm317, %vm318
    %v320 = vsel %vm319, %v312, %v316
    %v321 = vand.u32 2147483647, %v184
    %vm322 = vcmp.eq.f32.partialorder %v321, 8.507059e+37
    %v323 = vand.u32 %v184, 2147483648
    %v324 = vor.u32 1.1754944e-38, %v323
    %v325 = vsel %vm322, %v324, %v320
    %v326 = vmul.f32 1.0, %v325
    %v327 = vrcp.pop %v185
    %v328 = vmul.f32 %v185, %v327
    %v329 = vsub.f32 1.0, %v328
    %v330 = vmul.f32 %v327, %v329
    %v331 = vadd.f32 %v327, %v330
    %vm332 = vweird.f32 %v185
    %vm333 = vweird.f32 %v327
    %vm334 = vmor %vm332, %vm333
    %v335 = vsel %vm334, %v327, %v331
    %v336 = vand.u32 2147483647, %v185
    %vm337 = vcmp.eq.f32.partialorder %v336, 8.507059e+37
    %v338 = vand.u32 %v185, 2147483648
    %v339 = vor.u32 1.1754944e-38, %v338
    %v340 = vsel %vm337, %v339, %v335
    %v341 = vmul.f32 1.0, %v340
    %v342 = vrcp.pop %v186
    %v343 = vmul.f32 %v186, %v342
    %v344 = vsub.f32 1.0, %v343
    %v345 = vmul.f32 %v342, %v344
    %v346 = vadd.f32 %v342, %v345
    %vm347 = vweird.f32 %v186
    %vm348 = vweird.f32 %v342
    %vm349 = vmor %vm347, %vm348
    %v350 = vsel %vm349, %v342, %v346
    %v351 = vand.u32 2147483647, %v186
    %vm352 = vcmp.eq.f32.partialorder %v351, 8.507059e+37
    %v353 = vand.u32 %v186, 2147483648
    %v354 = vor.u32 1.1754944e-38, %v353
    %v355 = vsel %vm352, %v354, %v350
    %v356 = vmul.f32 1.0, %v355
    %v357 = vrcp.pop %v187
    %v358 = vmul.f32 %v187, %v357
    %v359 = vsub.f32 1.0, %v358
    %v360 = vmul.f32 %v357, %v359
    %v361 = vadd.f32 %v357, %v360
    %vm362 = vweird.f32 %v187
    %vm363 = vweird.f32 %v357
    %vm364 = vmor %vm362, %vm363
    %v365 = vsel %vm364, %v357, %v361
    %v366 = vand.u32 2147483647, %v187
    %vm367 = vcmp.eq.f32.partialorder %v366, 8.507059e+37
    %v368 = vand.u32 %v187, 2147483648
    %v369 = vor.u32 1.1754944e-38, %v368
    %v370 = vsel %vm367, %v369, %v365
    %v371 = vmul.f32 1.0, %v370
    %v372 = vrcp.pop %v188
    %v373 = vmul.f32 %v188, %v372
    %v374 = vsub.f32 1.0, %v373
    %v375 = vmul.f32 %v372, %v374
    %v376 = vadd.f32 %v372, %v375
    %vm377 = vweird.f32 %v188
    %vm378 = vweird.f32 %v372
    %vm379 = vmor %vm377, %vm378
    %v380 = vsel %vm379, %v372, %v376
    %v381 = vand.u32 2147483647, %v188
    %vm382 = vcmp.eq.f32.partialorder %v381, 8.507059e+37
    %v383 = vand.u32 %v188, 2147483648
    %v384 = vor.u32 1.1754944e-38, %v383
    %v385 = vsel %vm382, %v384, %v380
    %v386 = vmul.f32 1.0, %v385
    %v387 = vrcp.pop %v189
    %v388 = vmul.f32 %v189, %v387
    %v389 = vsub.f32 1.0, %v388
    %v390 = vmul.f32 %v387, %v389
    %v391 = vadd.f32 %v387, %v390
    %vm392 = vweird.f32 %v189
    %vm393 = vweird.f32 %v387
    %vm394 = vmor %vm392, %vm393
    %v395 = vsel %vm394, %v387, %v391
    %v396 = vand.u32 2147483647, %v189
    %vm397 = vcmp.eq.f32.partialorder %v396, 8.507059e+37
    %v398 = vand.u32 %v189, 2147483648
    %v399 = vor.u32 1.1754944e-38, %v398
    %v400 = vsel %vm397, %v399, %v395
    %v401 = vmul.f32 1.0, %v400
    %v402 = vrcp.pop %v190
    %v403 = vmul.f32 %v190, %v402
    %v404 = vsub.f32 1.0, %v403
    %v405 = vmul.f32 %v402, %v404
    %v406 = vadd.f32 %v402, %v405
    %vm407 = vweird.f32 %v190
    %vm408 = vweird.f32 %v402
    %vm409 = vmor %vm407, %vm408
    %v410 = vsel %vm409, %v402, %v406
    %v411 = vand.u32 2147483647, %v190
    %vm412 = vcmp.eq.f32.partialorder %v411, 8.507059e+37
    %v413 = vand.u32 %v190, 2147483648
    %v414 = vor.u32 1.1754944e-38, %v413
    %v415 = vsel %vm412, %v414, %v410
    %v416 = vmul.f32 1.0, %v415
    %v417 = vrcp.pop %v191
    %v418 = vmul.f32 %v191, %v417
    %v419 = vsub.f32 1.0, %v418
    %v420 = vmul.f32 %v417, %v419
    %v421 = vadd.f32 %v417, %v420
    %vm422 = vweird.f32 %v191
    %vm423 = vweird.f32 %v417
    %vm424 = vmor %vm422, %vm423
    %v425 = vsel %vm424, %v417, %v421
    %v426 = vand.u32 2147483647, %v191
    %vm427 = vcmp.eq.f32.partialorder %v426, 8.507059e+37
    %v428 = vand.u32 %v191, 2147483648
    %v429 = vor.u32 1.1754944e-38, %v428
    %v430 = vsel %vm427, %v429, %v425
    %v431 = vmul.f32 1.0, %v430
    %v432 = vmul.f32 %v112, %v206
    %v433 = vmul.f32 %v113, %v221
    %v434 = vmul.f32 %v114, %v236
    %v435 = vmul.f32 %v115, %v251
    %v436 = vmul.f32 %v116, %v266
    %v437 = vmul.f32 %v117, %v281
    %v438 = vmul.f32 %v118, %v296
    %v439 = vmul.f32 %v119, %v311
    %v440 = vmul.f32 %v120, %v326
    %v441 = vmul.f32 %v121, %v341
    %v442 = vmul.f32 %v122, %v356
    %v443 = vmul.f32 %v123, %v371
    %v444 = vmul.f32 %v124, %v386
    %v445 = vmul.f32 %v125, %v401
    %v446 = vmul.f32 %v126, %v416
    %v447 = vmul.f32 %v127, %v431
    %v448 = vld [vmem:[#allocation3] sm:$0xff]
    %v449 = vld [vmem:[#allocation3 + $0x8] sm:$0xff]
    %v450 = vld [vmem:[#allocation3 + $0x10] sm:$0xff]
    %v451 = vld [vmem:[#allocation3 + $0x18] sm:$0xff]
    %v452 = vld [vmem:[#allocation3 + $0x20] sm:$0xff]
    %v453 = vld [vmem:[#allocation3 + $0x28] sm:$0xff]
    %v454 = vld [vmem:[#allocation3 + $0x30] sm:$0xff]
    %v455 = vld [vmem:[#allocation3 + $0x38] sm:$0xff]
    %v456 = vld [vmem:[#allocation3 + $0x40] sm:$0xff]
    %v457 = vld [vmem:[#allocation3 + $0x48] sm:$0xff]
    %v458 = vld [vmem:[#allocation3 + $0x50] sm:$0xff]
    %v459 = vld [vmem:[#allocation3 + $0x58] sm:$0xff]
    %v460 = vld [vmem:[#allocation3 + $0x60] sm:$0xff]
    %v461 = vld [vmem:[#allocation3 + $0x68] sm:$0xff]
    %v462 = vld [vmem:[#allocation3 + $0x70] sm:$0xff]
    %v463 = vld [vmem:[#allocation3 + $0x78] sm:$0xff]
    %v464 = vmul.f32 %v432, %v448
    %v465 = vmul.f32 %v433, %v449
    %v466 = vmul.f32 %v434, %v450
    %v467 = vmul.f32 %v435, %v451
    %v468 = vmul.f32 %v436, %v452
    %v469 = vmul.f32 %v437, %v453
    %v470 = vmul.f32 %v438, %v454
    %v471 = vmul.f32 %v439, %v455
    %v472 = vmul.f32 %v440, %v456
    %v473 = vmul.f32 %v441, %v457
    %v474 = vmul.f32 %v442, %v458
    %v475 = vmul.f32 %v443, %v459
    %v476 = vmul.f32 %v444, %v460
    %v477 = vmul.f32 %v445, %v461
    %v478 = vmul.f32 %v446, %v462
    %v479 = vmul.f32 %v447, %v463
    %v480 = vmul.f32 %v464, %v464
    %v481 = vmul.f32 %v465, %v465
    %v482 = vmul.f32 %v466, %v466
    %v483 = vmul.f32 %v467, %v467
    %v484 = vmul.f32 %v468, %v468
    %v485 = vmul.f32 %v469, %v469
    %v486 = vmul.f32 %v470, %v470
    %v487 = vmul.f32 %v471, %v471
    %v488 = vmul.f32 %v472, %v472
    %v489 = vmul.f32 %v473, %v473
    %v490 = vmul.f32 %v474, %v474
    %v491 = vmul.f32 %v475, %v475
    %v492 = vmul.f32 %v476, %v476
    %v493 = vmul.f32 %v477, %v477
    %v494 = vmul.f32 %v478, %v478
    %v495 = vmul.f32 %v479, %v479
    %v496 = vadd.f32 %v480, %v481
    %v497 = vadd.f32 %v496, %v482
    %v498 = vadd.f32 %v497, %v483
    %499 = vadd.xlane.f32.xlu0 %v498
    %v500 = vpop.xlane.xlu0 %499
    %v501 = vadd.f32 %v484, %v485
    %v502 = vadd.f32 %v501, %v486
    %v503 = vadd.f32 %v502, %v487
    %504 = vadd.xlane.f32.xlu0 %v503
    %v505 = vpop.xlane.xlu0 %504
    %v506 = vadd.f32 %v488, %v489
    %v507 = vadd.f32 %v506, %v490
    %v508 = vadd.f32 %v507, %v491
    %509 = vadd.xlane.f32.xlu0 %v508
    %v510 = vpop.xlane.xlu0 %509
    %v511 = vadd.f32 %v492, %v493
    %v512 = vadd.f32 %v511, %v494
    %v513 = vadd.f32 %v512, %v495
    %514 = vadd.xlane.f32.xlu0 %v513
    %v515 = vpop.xlane.xlu0 %514
    %v516 = vrcp.pop 512.0
    %v517 = vmul.f32 512.0, %v516
    %v518 = vsub.f32 1.0, %v517
    %v519 = vmul.f32 %v516, %v518
    %v520 = vadd.f32 %v516, %v519
    %vm521 = vweird.f32 %v516
    %v522 = vsel %vm521, %v516, %v520
    %v523 = vmul.f32 %v500, %v522
    %v524 = vmul.f32 %v505, %v522
    %v525 = vmul.f32 %v510, %v522
    %v526 = vmul.f32 %v515, %v522
    %v527 = vadd.f32 %v523, 1e-06
    %v528 = vadd.f32 %v524, 1e-06
    %v529 = vadd.f32 %v525, 1e-06
    %v530 = vadd.f32 %v526, 1e-06
    %v531 = vrsqrt.pop %v527
    %v532 = vmul.f32 %v531, %v527
    %v533 = vmul.f32 %v532, %v531
    %v534 = vmul.f32 0.5, %v533
    %v535 = vsub.f32 1.5, %v534
    %v536 = vmul.f32 %v531, %v535
    %vm537 = vweird.f32 %v527
    %vm538 = vweird.f32 %v531
    %vm539 = vmor %vm537, %vm538
    %v540 = vsel %vm539, %v531, %v536
    %v541 = vrsqrt.pop %v528
    %v542 = vmul.f32 %v541, %v528
    %v543 = vmul.f32 %v542, %v541
    %v544 = vmul.f32 0.5, %v543
    %v545 = vsub.f32 1.5, %v544
    %v546 = vmul.f32 %v541, %v545
    %vm547 = vweird.f32 %v528
    %vm548 = vweird.f32 %v541
    %vm549 = vmor %vm547, %vm548
    %v550 = vsel %vm549, %v541, %v546
    %v551 = vrsqrt.pop %v529
    %v552 = vmul.f32 %v551, %v529
    %v553 = vmul.f32 %v552, %v551
    %v554 = vmul.f32 0.5, %v553
    %v555 = vsub.f32 1.5, %v554
    %v556 = vmul.f32 %v551, %v555
    %vm557 = vweird.f32 %v529
    %vm558 = vweird.f32 %v551
    %vm559 = vmor %vm557, %vm558
    %v560 = vsel %vm559, %v551, %v556
    %v561 = vrsqrt.pop %v530
    %v562 = vmul.f32 %v561, %v530
    %v563 = vmul.f32 %v562, %v561
    %v564 = vmul.f32 0.5, %v563
    %v565 = vsub.f32 1.5, %v564
    %v566 = vmul.f32 %v561, %v565
    %vm567 = vweird.f32 %v530
    %vm568 = vweird.f32 %v561
    %vm569 = vmor %vm567, %vm568
    %v570 = vsel %vm569, %v561, %v566
    %v571 = vmul.f32 %v464, %v540
    %v572 = vmul.f32 %v465, %v540
    %v573 = vmul.f32 %v466, %v540
    %v574 = vmul.f32 %v467, %v540
    %v575 = vmul.f32 %v468, %v550
    %v576 = vmul.f32 %v469, %v550
    %v577 = vmul.f32 %v470, %v550
    %v578 = vmul.f32 %v471, %v550
    %v579 = vmul.f32 %v472, %v560
    %v580 = vmul.f32 %v473, %v560
    %v581 = vmul.f32 %v474, %v560
    %v582 = vmul.f32 %v475, %v560
    %v583 = vmul.f32 %v476, %v570
    %v584 = vmul.f32 %v477, %v570
    %v585 = vmul.f32 %v478, %v570
    %v586 = vmul.f32 %v479, %v570
    %v587 = vand.u32 2147483647, %v571
    %v588 = vand.u32 2147483647, %v572
    %v589 = vand.u32 2147483647, %v573
    %v590 = vand.u32 2147483647, %v574
    %v591 = vand.u32 2147483647, %v575
    %v592 = vand.u32 2147483647, %v576
    %v593 = vand.u32 2147483647, %v577
    %v594 = vand.u32 2147483647, %v578
    %v595 = vand.u32 2147483647, %v579
    %v596 = vand.u32 2147483647, %v580
    %v597 = vand.u32 2147483647, %v581
    %v598 = vand.u32 2147483647, %v582
    %v599 = vand.u32 2147483647, %v583
    %v600 = vand.u32 2147483647, %v584
    %v601 = vand.u32 2147483647, %v585
    %v602 = vand.u32 2147483647, %v586
    %v603 = vmax.f32 %v587, %v588
    %v604 = vmax.f32 %v603, %v589
    %v605 = vmax.f32 %v604, %v590
    %606 = vmax.xlane.f32.xlu0 %v605
    %v607 = vpop.xlane.xlu0 %606
    %v608 = vmax.f32 %v591, %v592
    %v609 = vmax.f32 %v608, %v593
    %v610 = vmax.f32 %v609, %v594
    %611 = vmax.xlane.f32.xlu0 %v610
    %v612 = vpop.xlane.xlu0 %611
    %v613 = vmax.f32 %v595, %v596
    %v614 = vmax.f32 %v613, %v597
    %v615 = vmax.f32 %v614, %v598
    %616 = vmax.xlane.f32.xlu0 %v615
    %v617 = vpop.xlane.xlu0 %616
    %v618 = vmax.f32 %v599, %v600
    %v619 = vmax.f32 %v618, %v601
    %v620 = vmax.f32 %v619, %v602
    %621 = vmax.xlane.f32.xlu0 %v620
    %v622 = vpop.xlane.xlu0 %621
    %v623 = vmax.f32 %v607, 1e-05
    %v624 = vmax.f32 %v612, 1e-05
    %v625 = vmax.f32 %v617, 1e-05
    %v626 = vmax.f32 %v622, 1e-05
    %v627 = vrcp.pop %v623
    %v628 = vmul.f32 %v623, %v627
    %v629 = vsub.f32 1.0, %v628
    %v630 = vmul.f32 %v627, %v629
    %v631 = vadd.f32 %v627, %v630
    %vm632 = vweird.f32 %v623
    %vm633 = vweird.f32 %v627
    %vm634 = vmor %vm632, %vm633
    %v635 = vsel %vm634, %v627, %v631
    %v636 = vand.u32 2147483647, %v623
    %vm637 = vcmp.eq.f32.partialorder %v636, 8.507059e+37
    %v638 = vand.u32 %v623, 2147483648
    %v639 = vor.u32 1.1754944e-38, %v638
    %v640 = vsel %vm637, %v639, %v635
    %v641 = vmul.f32 127.0, %v640
    %v642 = vrcp.pop %v624
    %v643 = vmul.f32 %v624, %v642
    %v644 = vsub.f32 1.0, %v643
    %v645 = vmul.f32 %v642, %v644
    %v646 = vadd.f32 %v642, %v645
    %vm647 = vweird.f32 %v624
    %vm648 = vweird.f32 %v642
    %vm649 = vmor %vm647, %vm648
    %v650 = vsel %vm649, %v642, %v646
    %v651 = vand.u32 2147483647, %v624
    %vm652 = vcmp.eq.f32.partialorder %v651, 8.507059e+37
    %v653 = vand.u32 %v624, 2147483648
    %v654 = vor.u32 1.1754944e-38, %v653
    %v655 = vsel %vm652, %v654, %v650
    %v656 = vmul.f32 127.0, %v655
    %v657 = vrcp.pop %v625
    %v658 = vmul.f32 %v625, %v657
    %v659 = vsub.f32 1.0, %v658
    %v660 = vmul.f32 %v657, %v659
    %v661 = vadd.f32 %v657, %v660
    %vm662 = vweird.f32 %v625
    %vm663 = vweird.f32 %v657
    %vm664 = vmor %vm662, %vm663
    %v665 = vsel %vm664, %v657, %v661
    %v666 = vand.u32 2147483647, %v625
    %vm667 = vcmp.eq.f32.partialorder %v666, 8.507059e+37
    %v668 = vand.u32 %v625, 2147483648
    %v669 = vor.u32 1.1754944e-38, %v668
    %v670 = vsel %vm667, %v669, %v665
    %v671 = vmul.f32 127.0, %v670
    %v672 = vrcp.pop %v626
    %v673 = vmul.f32 %v626, %v672
    %v674 = vsub.f32 1.0, %v673
    %v675 = vmul.f32 %v672, %v674
    %v676 = vadd.f32 %v672, %v675
    %vm677 = vweird.f32 %v626
    %vm678 = vweird.f32 %v672
    %vm679 = vmor %vm677, %vm678
    %v680 = vsel %vm679, %v672, %v676
    %v681 = vand.u32 2147483647, %v626
    %vm682 = vcmp.eq.f32.partialorder %v681, 8.507059e+37
    %v683 = vand.u32 %v626, 2147483648
    %v684 = vor.u32 1.1754944e-38, %v683
    %v685 = vsel %vm682, %v684, %v680
    %v686 = vmul.f32 127.0, %v685
    %v687 = vmul.f32 %v571, %v641
    %v688 = vmul.f32 %v572, %v641
    %v689 = vmul.f32 %v573, %v641
    %v690 = vmul.f32 %v574, %v641
    %v691 = vmul.f32 %v575, %v656
    %v692 = vmul.f32 %v576, %v656
    %v693 = vmul.f32 %v577, %v656
    %v694 = vmul.f32 %v578, %v656
    %v695 = vmul.f32 %v579, %v671
    %v696 = vmul.f32 %v580, %v671
    %v697 = vmul.f32 %v581, %v671
    %v698 = vmul.f32 %v582, %v671
    %v699 = vmul.f32 %v583, %v686
    %v700 = vmul.f32 %v584, %v686
    %v701 = vmul.f32 %v585, %v686
    %v702 = vmul.f32 %v586, %v686
    %v703 = vround.ne.pseudo %v687
    %v704 = vround.ne.pseudo %v688
    %v705 = vround.ne.pseudo %v689
    %v706 = vround.ne.pseudo %v690
    %v707 = vround.ne.pseudo %v691
    %v708 = vround.ne.pseudo %v692
    %v709 = vround.ne.pseudo %v693
    %v710 = vround.ne.pseudo %v694
    %v711 = vround.ne.pseudo %v695
    %v712 = vround.ne.pseudo %v696
    %v713 = vround.ne.pseudo %v697
    %v714 = vround.ne.pseudo %v698
    %v715 = vround.ne.pseudo %v699
    %v716 = vround.ne.pseudo %v700
    %v717 = vround.ne.pseudo %v701
    %v718 = vround.ne.pseudo %v702
    %v719 = vmax.f32 %v703, -128.0
    %v720 = vmax.f32 %v704, -128.0
    %v721 = vmax.f32 %v705, -128.0
    %v722 = vmax.f32 %v706, -128.0
    %v723 = vmax.f32 %v707, -128.0
    %v724 = vmax.f32 %v708, -128.0
    %v725 = vmax.f32 %v709, -128.0
    %v726 = vmax.f32 %v710, -128.0
    %v727 = vmax.f32 %v711, -128.0
    %v728 = vmax.f32 %v712, -128.0
    %v729 = vmax.f32 %v713, -128.0
    %v730 = vmax.f32 %v714, -128.0
    %v731 = vmax.f32 %v715, -128.0
    %v732 = vmax.f32 %v716, -128.0
    %v733 = vmax.f32 %v717, -128.0
    %v734 = vmax.f32 %v718, -128.0
    %v735 = vmin.f32 %v719, 127.0
    %v736 = vmin.f32 %v720, 127.0
    %v737 = vmin.f32 %v721, 127.0
    %v738 = vmin.f32 %v722, 127.0
    %v739 = vmin.f32 %v723, 127.0
    %v740 = vmin.f32 %v724, 127.0
    %v741 = vmin.f32 %v725, 127.0
    %v742 = vmin.f32 %v726, 127.0
    %v743 = vmin.f32 %v727, 127.0
    %v744 = vmin.f32 %v728, 127.0
    %v745 = vmin.f32 %v729, 127.0
    %v746 = vmin.f32 %v730, 127.0
    %v747 = vmin.f32 %v731, 127.0
    %v748 = vmin.f32 %v732, 127.0
    %v749 = vmin.f32 %v733, 127.0
    %v750 = vmin.f32 %v734, 127.0
    %v751 = vpack.c.bf16 %v736, %v735
    %v752 = vpack.c.bf16 %v738, %v737
    %v753 = vpack.c.bf16 %v740, %v739
    %v754 = vpack.c.bf16 %v742, %v741
    %v755 = vpack.c.bf16 %v744, %v743
    %v756 = vpack.c.bf16 %v746, %v745
    %v757 = vpack.c.bf16 %v748, %v747
    %v758 = vpack.c.bf16 %v750, %v749
    %759 = vst [vmem:[%s2] sm:$0xff] %v751
    %760 = vst [vmem:[%s2 + $0x8] sm:$0xff] %v752
    %761 = vst [vmem:[%s2 + $0x10] sm:$0xff] %v753
    %762 = vst [vmem:[%s2 + $0x18] sm:$0xff] %v754
    %763 = vst [vmem:[%s2 + $0x20] sm:$0xff] %v755
    %764 = vst [vmem:[%s2 + $0x28] sm:$0xff] %v756
    %765 = vst [vmem:[%s2 + $0x30] sm:$0xff] %v757
    %766 = vst [vmem:[%s2 + $0x38] sm:$0xff] %v758
    %v767 = vmul.f32 %v623, 0.007874016
    %v768 = vmul.f32 %v624, 0.007874016
    %v769 = vmul.f32 %v625, 0.007874016
    %v770 = vmul.f32 %v626, 0.007874016
    %vm771 = vcmask 7168
    %772 = vst.msk [vmem:[%s3] sm:$0xff] %vm771, %v767
    %773 = vst.msk [vmem:[%s3 + $0x8] sm:$0xff] %vm771, %v768
    %774 = vst.msk [vmem:[%s3 + $0x10] sm:$0xff] %vm771, %v769
    %775 = vst.msk [vmem:[%s3 + $0x18] sm:$0xff] %vm771, %v770
    // Predicated region
    $region56: #{transformer_block.16} parent=1 // pred_check
      _
    $region57: #{transformer_block.16} parent=1 // pred_check_branch
      %777 = sbr.rel (0) target = $region59
    $region58: #{transformer_block.16} parent=1 // pred_region
      _
    $region59: #{transformer_block.16} parent=1 // pred_fallthru
      _
    // Predicated region
    $region60: #{transformer_block.16} parent=1 // pred_check
      _
    $region61: #{transformer_block.16} parent=1 // pred_check_branch
      %779 = sbr.rel (0) target = $region63
    $region62: #{transformer_block.16} parent=1 // pred_region
      _
    $region63: #{transformer_block.16} parent=1 // pred_fallthru
      _
    // Predicated region
    $region64: #{transformer_block.16} parent=1 // pred_check
      _
    $region65: #{transformer_block.16} parent=1 // pred_check_branch
      %781 = sbr.rel (0) target = $region67
    $region66: #{transformer_block.16} parent=1 // pred_region
      _
    $region67: #{transformer_block.16} parent=1 // pred_fallthru
      _
    // Predicated region
    $region68: #{transformer_block.16} parent=1 // pred_check
      _
    $region69: #{transformer_block.16} parent=1 // pred_check_branch
      %783 = sbr.rel (0) target = $region71
    $region70: #{transformer_block.16} parent=1 // pred_region
      _
    $region71: #{transformer_block.16} parent=1 // pred_fallthru
      _

// kernel: transformer_block.15
$region0: #{transformer_block.15}
  #allocation0 [shape = 'u32[]', space=smem, size = 0x4, offset = 0x4, fixed_abs, tag = 'smem constant byte address 0x4 - core index']
  #allocation1 [shape = 'u32[72,128]{1,0:T(1,128)}', space=vmem, size = 0x9000, scoped, tag = 'internal scratch']
  #allocation2 [shape = 'f32[32,512]{1,0:T(8,128)}', space=vmem, size = 0x10000, scoped, tag = 'scratch operand']
  %s0 = inlined_call_operand.vmem [shape: bf16[32,128], index: 0, kind: input, shape index: {}]
  %s1 = inlined_call_operand.vmem [shape: bf16[128,1024], index: 1, kind: input, shape index: {}]
  %s2 = inlined_call_operand.vmem [shape: f32[32,1], index: 2, kind: input, shape index: {}]
  %s3 = inlined_call_operand.vmem [shape: f32[1,1024], index: 3, kind: input, shape index: {}]
  %s4 = inlined_call_operand.vmem [shape: f32[32,1024], index: 4, kind: output, shape index: {}]
  %s5 = sld [smem:[#allocation0]]
  $region99: #{transformer_block.15} parent=0
    _
  %s7 = ssub.s32 1, %s5
  %s8 = scalar_select 0, %s7, %s5
  $region1: #{transformer_block.15} parent=0
    #allocation3 [shape = 'u8[262144]{0}', space=vmem, size = 0x40000, scoped, tag = 'input window, operand 1']
    #allocation4 [shape = 'u8[131072]{0}', space=vmem, size = 0x20000, scoped, tag = 'output window, operand 0']
    loop: start=0, step=1, limit=4
    $region2: #{transformer_block.15} parent=1 // loop_pre_header
      _
    $region3: #{transformer_block.15} parent=1 // loop_header
      %s10 = sphi 0, %s14
      %p11 = scmp.ge.s32.totalorder %s10, 4
      %s17 = sphi 0, %s36
      %s18 = sphi 0, %s32
      %s19 = sphi 0, %s28
      %s20 = sphi 0, %s17
      %s21 = sphi 0, %s18
      %s22 = sphi 0, %s19
      %s23 = sphi 0, %s20
      %s24 = sphi 0, %s21
      %s25 = sphi 0, %s22
      %s41 = sphi 0, %s43
      %s44 = sphi 0, %s41
      %s45 = sphi 0, %s44
      %s61 = sphi 0, %s45
      %s69 = sphi 0, %s71
      %s72 = sphi 0, %s69
      %s73 = sphi 0, %s72
      %s89 = sphi 0, %s73
      %s95 = sphi 0, %s97
      %s98 = sphi 0, %s95
      %s99 = sphi 0, %s98
      %s115 = sphi 0, %s99
      %s121 = sphi 0, %s123
      %s124 = sphi 0, %s121
      %s125 = sphi 0, %s124
      %s141 = sphi 0, %s125
      %s149 = sphi 0, %s151
      %s152 = sphi 0, %s149
      %s153 = sphi 0, %s152
      %s169 = sphi 0, %s153
    $region4: #{transformer_block.15} parent=1 // loop_header_branch
      %13 = sbr.rel (%p11) target = $region8
    $region5: #{transformer_block.15} parent=1 // loop_body
      %s15 = ssub.s32 %s10, 1
      %s16 = ssub.s32 %s10, 2
      %s26 = sadd.s32 1, %s19
      %p27 = scmp.ge.s32.totalorder %s26, 1
      %s28 = scalar_select %p27, 0, %s26
      %s29 = sadd.s32 1, %s18
      %s30 = scalar_select %p27, %s29, %s18
      %p31 = scmp.ge.s32.totalorder %s30, 2
      %s32 = scalar_select %p31, 0, %s30
      %s33 = sadd.s32 1, %s17
      %s34 = scalar_select %p31, %s33, %s17
      %p35 = scmp.ge.s32.totalorder %s34, 1
      %s36 = scalar_select %p35, 0, %s34
      %s37 = ssub.s32 %s17, %s36
      %s38 = ssub.s32 %s19, %s28
      %s39 = sor.u32 %s37, %s38
      %p40 = scmp.eq.s32.totalorder %s39, 0
      %s42 = sadd.s32 %s41, 1
      %s43 = scalar_select %p40, %s41, %s42
      %p46 = pneg %p40
      %p47 = scmp.eq.s32.totalorder %s10, 1
      %p48 = por %p46, %p47
      %p49 = scmp.ne.s32.totalorder %s41, %s44
      %p50 = scmp.eq.s32.totalorder %s10, 0
      %p51 = por %p49, %p50
      %p52 = scmp.ne.s32.totalorder %s41, %s44
      %p53 = scmp.eq.s32.totalorder %s15, 1
      %p54 = por %p52, %p53
      %p55 = scmp.ne.s32.totalorder %s44, %s45
      %p56 = scmp.eq.s32.totalorder %s15, 0
      %p57 = por %p55, %p56
      %p58 = scmp.ne.s32.totalorder %s44, %s45
      %p59 = scmp.eq.s32.totalorder %s16, 1
      %p60 = por %p58, %p59
      %p62 = scmp.ne.s32.totalorder %s45, %s61
      %p63 = scmp.eq.s32.totalorder %s16, 0
      %p64 = por %p62, %p63
      %s65 = ssub.s32 %s19, %s28
      %s66 = ssub.s32 %s18, %s32
      %s67 = sor.u32 %s65, %s66
      %p68 = scmp.eq.s32.totalorder %s67, 0
      %s70 = sadd.s32 %s69, 1
      %s71 = scalar_select %p68, %s69, %s70
      %p74 = pneg %p68
      %p75 = scmp.eq.s32.totalorder %s10, 1
      %p76 = por %p74, %p75
      %p77 = scmp.ne.s32.totalorder %s69, %s72
      %p78 = scmp.eq.s32.totalorder %s10, 0
      %p79 = por %p77, %p78
      %p80 = scmp.ne.s32.totalorder %s69, %s72
      %p81 = scmp.eq.s32.totalorder %s15, 1
      %p82 = por %p80, %p81
      %p83 = scmp.ne.s32.totalorder %s72, %s73
      %p84 = scmp.eq.s32.totalorder %s15, 0
      %p85 = por %p83, %p84
      %p86 = scmp.ne.s32.totalorder %s72, %s73
      %p87 = scmp.eq.s32.totalorder %s16, 1
      %p88 = por %p86, %p87
      %p90 = scmp.ne.s32.totalorder %s73, %s89
      %p91 = scmp.eq.s32.totalorder %s16, 0
      %p92 = por %p90, %p91
      %s93 = ssub.s32 %s17, %s36
      %p94 = scmp.eq.s32.totalorder %s93, 0
      %s96 = sadd.s32 %s95, 1
      %s97 = scalar_select %p94, %s95, %s96
      %p100 = pneg %p94
      %p101 = scmp.eq.s32.totalorder %s10, 1
      %p102 = por %p100, %p101
      %p103 = scmp.ne.s32.totalorder %s95, %s98
      %p104 = scmp.eq.s32.totalorder %s10, 0
      %p105 = por %p103, %p104
      %p106 = scmp.ne.s32.totalorder %s95, %s98
      %p107 = scmp.eq.s32.totalorder %s15, 1
      %p108 = por %p106, %p107
      %p109 = scmp.ne.s32.totalorder %s98, %s99
      %p110 = scmp.eq.s32.totalorder %s15, 0
      %p111 = por %p109, %p110
      %p112 = scmp.ne.s32.totalorder %s98, %s99
      %p113 = scmp.eq.s32.totalorder %s16, 1
      %p114 = por %p112, %p113
      %p116 = scmp.ne.s32.totalorder %s99, %s115
      %p117 = scmp.eq.s32.totalorder %s16, 0
      %p118 = por %p116, %p117
      %s119 = ssub.s32 %s18, %s32
      %p120 = scmp.eq.s32.totalorder %s119, 0
      %s122 = sadd.s32 %s121, 1
      %s123 = scalar_select %p120, %s121, %s122
      %p126 = pneg %p120
      %p127 = scmp.eq.s32.totalorder %s10, 1
      %p128 = por %p126, %p127
      %p129 = scmp.ne.s32.totalorder %s121, %s124
      %p130 = scmp.eq.s32.totalorder %s10, 0
      %p131 = por %p129, %p130
      %p132 = scmp.ne.s32.totalorder %s121, %s124
      %p133 = scmp.eq.s32.totalorder %s15, 1
      %p134 = por %p132, %p133
      %p135 = scmp.ne.s32.totalorder %s124, %s125
      %p136 = scmp.eq.s32.totalorder %s15, 0
      %p137 = por %p135, %p136
      %p138 = scmp.ne.s32.totalorder %s124, %s125
      %p139 = scmp.eq.s32.totalorder %s16, 1
      %p140 = por %p138, %p139
      %p142 = scmp.ne.s32.totalorder %s125, %s141
      %p143 = scmp.eq.s32.totalorder %s16, 0
      %p144 = por %p142, %p143
      %s145 = ssub.s32 %s17, %s36
      %s146 = ssub.s32 %s18, %s32
      %s147 = sor.u32 %s145, %s146
      %p148 = scmp.eq.s32.totalorder %s147, 0
      %s150 = sadd.s32 %s149, 1
      %s151 = scalar_select %p148, %s149, %s150
      %p154 = pneg %p148
      %p155 = scmp.eq.s32.totalorder %s10, 1
      %p156 = por %p154, %p155
      %p157 = scmp.ne.s32.totalorder %s149, %s152
      %p158 = scmp.eq.s32.totalorder %s10, 0
      %p159 = por %p157, %p158
      %p160 = scmp.ne.s32.totalorder %s149, %s152
      %p161 = scmp.eq.s32.totalorder %s15, 1
      %p162 = por %p160, %p161
      %p163 = scmp.ne.s32.totalorder %s152, %s153
      %p164 = scmp.eq.s32.totalorder %s15, 0
      %p165 = por %p163, %p164
      %p166 = scmp.ne.s32.totalorder %s152, %s153
      %p167 = scmp.eq.s32.totalorder %s16, 1
      %p168 = por %p166, %p167
      %p170 = scmp.ne.s32.totalorder %s153, %s169
      %p171 = scmp.eq.s32.totalorder %s16, 0
      %p172 = por %p170, %p171
      %p173 = scmp.le.s32.totalorder 1, %s10
      %p174 = scmp.lt.s32.totalorder %s10, 3
      %p175 = pnand %p173, %p174
      %p176 = pneg %p175
      // Predicated region
      $region9: #{transformer_block.15} parent=5 // pred_check
        _
      $region10: #{transformer_block.15} parent=5 // pred_check_branch
        %178 = sbr.rel (%p175) target = $region12
      $region11: #{transformer_block.15} parent=5 // pred_region
        %s179 = ssub.s32 %s10, 1
        // Predicated region
        $region13: #{transformer_block.15} parent=11 // pred_check
          %p180 = pneg %p57
        $region14: #{transformer_block.15} parent=11 // pred_check_branch
          %182 = sbr.rel (%p180) target = $region16
        $region15: #{transformer_block.15} parent=11 // pred_region
          %s183 = smul.u32 4, %s20
          %p184 = scmp.lt.s32.totalorder %s183, 3
          %s185 = scalar_select %p184, %s183, 3
          %p186 = scmp.lt.s32.totalorder %s22, 0
          %s187 = scalar_select %p186, %s22, 0
          %s188 = sadd.s32 %s187, %s185
          %s189 = smul.addr %s188, 4
          %s190 = scalar_lea.vmem %s0, %s189
          %s191 = smul.u32 4, %s20
        $region16: #{transformer_block.15} parent=11 // pred_fallthru
          _
        // Predicated region
        $region17: #{transformer_block.15} parent=11 // pred_check
          %p192 = pneg %p111
        $region18: #{transformer_block.15} parent=11 // pred_check_branch
          %194 = sbr.rel (%p192) target = $region20
        $region19: #{transformer_block.15} parent=11 // pred_region
          %s195 = smul.u32 4, %s20
          %p196 = scmp.lt.s32.totalorder %s195, 3
          %s197 = scalar_select %p196, %s195, 3
          %s198 = smul.addr %s197, 8
          %s199 = scalar_lea.vmem %s2, %s198
          %s200 = smul.u32 4, %s20
        $region20: #{transformer_block.15} parent=11 // pred_fallthru
          _
      $region12: #{transformer_block.15} parent=5 // pred_fallthru
        _
      %p201 = scmp.lt.s32.totalorder %s10, 2
      // Predicated region
      $region21: #{transformer_block.15} parent=5 // pred_check
        %p202 = pneg %p201
      $region22: #{transformer_block.15} parent=5 // pred_check_branch
        %204 = sbr.rel (%p202) target = $region24
      $region23: #{transformer_block.15} parent=5 // pred_region
        // Predicated region
        $region25: #{transformer_block.15} parent=23 // pred_check
          %p205 = pneg %p79
        $region26: #{transformer_block.15} parent=23 // pred_check_branch
          %207 = sbr.rel (%p205) target = $region28
        $region27: #{transformer_block.15} parent=23 // pred_region
          %s208 = sand.u32 %s69, 1
          %s209 = sand.u32 %s69, 1
          %s210 = smul.addr %s209, 256
          %s211 = scalar_lea.vmem [#allocation3], %s210
          %s212 = smul.u32 16, %s19
          %s213 = smul.u32 4, %s18
          %s214 = smul.addr %s212, 8
          %s215 = sadd.s32 %s213, %s214
          %s216 = smul.addr %s215, 4
          %s217 = scalar_lea.vmem %s1, %s216
          // Predicated region
          $region29: #{transformer_block.15} parent=27 // pred_check
            _
          $region30: #{transformer_block.15} parent=27 // pred_check_branch
            %219 = sbr.rel (0) target = $region32
          $region31: #{transformer_block.15} parent=27 // pred_region
            // Predicated region
            $region33: #{transformer_block.15} parent=31 // pred_check
              _
            $region34: #{transformer_block.15} parent=31 // pred_check_branch
              %221 = sbr.rel (0) target = $region36
            $region35: #{transformer_block.15} parent=31 // pred_region
              loop: start=0, step=1, limit=1
              $region37: #{transformer_block.15} parent=35 // loop_pre_header
                _
              $region38: #{transformer_block.15} parent=35 // loop_header
                %s223 = sphi 0, %s227
                %p224 = scmp.ge.s32.totalorder %s223, 1
                %s228 = sphi %s217, %s217
                %s229 = sphi %s211, %s211
              $region39: #{transformer_block.15} parent=35 // loop_header_branch
                %226 = sbr.rel (%p224) target = $region43
              $region40: #{transformer_block.15} parent=35 // loop_body
                %v230 = vld [vmem:[%s228] sm:$0xff]
                %231 = vst [vmem:[%s229] sm:$0xff] %v230
                %v232 = vld [vmem:[%s228 + $0x8] sm:$0xff]
                %233 = vst [vmem:[%s229 + $0x8] sm:$0xff] %v232
                %v234 = vld [vmem:[%s228 + $0x20] sm:$0xff]
                %235 = vst [vmem:[%s229 + $0x10] sm:$0xff] %v234
                %v236 = vld [vmem:[%s228 + $0x28] sm:$0xff]
                %237 = vst [vmem:[%s229 + $0x18] sm:$0xff] %v236
                %v238 = vld [vmem:[%s228 + $0x40] sm:$0xff]
                %239 = vst [vmem:[%s229 + $0x20] sm:$0xff] %v238
                %v240 = vld [vmem:[%s228 + $0x48] sm:$0xff]
                %241 = vst [vmem:[%s229 + $0x28] sm:$0xff] %v240
                %v242 = vld [vmem:[%s228 + $0x60] sm:$0xff]
                %243 = vst [vmem:[%s229 + $0x30] sm:$0xff] %v242
                %v244 = vld [vmem:[%s228 + $0x68] sm:$0xff]
                %245 = vst [vmem:[%s229 + $0x38] sm:$0xff] %v244
                %v246 = vld [vmem:[%s228 + $0x80] sm:$0xff]
                %247 = vst [vmem:[%s229 + $0x40] sm:$0xff] %v246
                %v248 = vld [vmem:[%s228 + $0x88] sm:$0xff]
                %249 = vst [vmem:[%s229 + $0x48] sm:$0xff] %v248
                %v250 = vld [vmem:[%s228 + $0xa0] sm:$0xff]
                %251 = vst [vmem:[%s229 + $0x50] sm:$0xff] %v250
                %v252 = vld [vmem:[%s228 + $0xa8] sm:$0xff]
                %253 = vst [vmem:[%s229 + $0x58] sm:$0xff] %v252
                %v254 = vld [vmem:[%s228 + $0xc0] sm:$0xff]
                %255 = vst [vmem:[%s229 + $0x60] sm:$0xff] %v254
                %v256 = vld [vmem:[%s228 + $0xc8] sm:$0xff]
                %257 = vst [vmem:[%s229 + $0x68] sm:$0xff] %v256
                %v258 = vld [vmem:[%s228 + $0xe0] sm:$0xff]
                %259 = vst [vmem:[%s229 + $0x70] sm:$0xff] %v258
                %v260 = vld [vmem:[%s228 + $0xe8] sm:$0xff]
                %261 = vst [vmem:[%s229 + $0x78] sm:$0xff] %v260
                %v262 = vld [vmem:[%s228 + $0x100] sm:$0xff]
                %263 = vst [vmem:[%s229 + $0x80] sm:$0xff] %v262
                %v264 = vld [vmem:[%s228 + $0x108] sm:$0xff]
                %265 = vst [vmem:[%s229 + $0x88] sm:$0xff] %v264
                %v266 = vld [vmem:[%s228 + $0x120] sm:$0xff]
                %267 = vst [vmem:[%s229 + $0x90] sm:$0xff] %v266
                %v268 = vld [vmem:[%s228 + $0x128] sm:$0xff]
                %269 = vst [vmem:[%s229 + $0x98] sm:$0xff] %v268
                %v270 = vld [vmem:[%s228 + $0x140] sm:$0xff]
                %271 = vst [vmem:[%s229 + $0xa0] sm:$0xff] %v270
                %v272 = vld [vmem:[%s228 + $0x148] sm:$0xff]
                %273 = vst [vmem:[%s229 + $0xa8] sm:$0xff] %v272
                %v274 = vld [vmem:[%s228 + $0x160] sm:$0xff]
                %275 = vst [vmem:[%s229 + $0xb0] sm:$0xff] %v274
                %v276 = vld [vmem:[%s228 + $0x168] sm:$0xff]
                %277 = vst [vmem:[%s229 + $0xb8] sm:$0xff] %v276
                %v278 = vld [vmem:[%s228 + $0x180] sm:$0xff]
                %279 = vst [vmem:[%s229 + $0xc0] sm:$0xff] %v278
                %v280 = vld [vmem:[%s228 + $0x188] sm:$0xff]
                %281 = vst [vmem:[%s229 + $0xc8] sm:$0xff] %v280
                %v282 = vld [vmem:[%s228 + $0x1a0] sm:$0xff]
                %283 = vst [vmem:[%s229 + $0xd0] sm:$0xff] %v282
                %v284 = vld [vmem:[%s228 + $0x1a8] sm:$0xff]
                %285 = vst [vmem:[%s229 + $0xd8] sm:$0xff] %v284
                %v286 = vld [vmem:[%s228 + $0x1c0] sm:$0xff]
                %287 = vst [vmem:[%s229 + $0xe0] sm:$0xff] %v286
                %v288 = vld [vmem:[%s228 + $0x1c8] sm:$0xff]
                %289 = vst [vmem:[%s229 + $0xe8] sm:$0xff] %v288
                %v290 = vld [vmem:[%s228 + $0x1e0] sm:$0xff]
                %291 = vst [vmem:[%s229 + $0xf0] sm:$0xff] %v290
                %v292 = vld [vmem:[%s228 + $0x1e8] sm:$0xff]
                %293 = vst [vmem:[%s229 + $0xf8] sm:$0xff] %v292
              $region41: #{transformer_block.15} parent=35 // loop_footer
                %s227 = sadd.s32 1, %s223
              $region42: #{transformer_block.15} parent=35 // loop_footer_branch
                %222 = sbr.rel target = $region38
              $region43: #{transformer_block.15} parent=35 // loop_exit
                _
            $region36: #{transformer_block.15} parent=31 // pred_fallthru
              _
            // Predicated region
            $region44: #{transformer_block.15} parent=31 // pred_check
              _
            $region45: #{transformer_block.15} parent=31 // pred_check_branch
              %295 = sbr.rel target = $region47
            $region46: #{transformer_block.15} parent=31 // pred_region
              _
            $region47: #{transformer_block.15} parent=31 // pred_fallthru
              _
          $region32: #{transformer_block.15} parent=27 // pred_fallthru
            _
          %296 = vnop
        $region28: #{transformer_block.15} parent=23 // pred_fallthru
          _
        // Predicated region
        $region48: #{transformer_block.15} parent=23 // pred_check
          %p297 = pneg %p131
        $region49: #{transformer_block.15} parent=23 // pred_check_branch
          %299 = sbr.rel (%p297) target = $region51
        $region50: #{transformer_block.15} parent=23 // pred_region
          %s300 = smul.u32 4, %s18
          %p301 = scmp.lt.s32.totalorder %s300, 7
          %s302 = scalar_select %p301, %s300, 7
          %s303 = scalar_lea.vmem %s3, %s302
          %s304 = smul.u32 4, %s18
        $region51: #{transformer_block.15} parent=23 // pred_fallthru
          _
      $region24: #{transformer_block.15} parent=5 // pred_fallthru
        _
      %p305 = scmp.le.s32.totalorder 1, %s10
      %p306 = scmp.lt.s32.totalorder %s10, 3
      %p307 = pnand %p305, %p306
      %p308 = pneg %p307
      // Predicated region
      $region52: #{transformer_block.15} parent=5 // pred_check
        _
      $region53: #{transformer_block.15} parent=5 // pred_check_branch
        %310 = sbr.rel (%p307) target = $region55
      $region54: #{transformer_block.15} parent=5 // pred_region
        %s311 = ssub.s32 %s10, 1
        %s312 = sand.u32 %s72, 1
        %s313 = sand.u32 %s72, 1
        %s314 = smul.addr %s313, 256
        %s315 = scalar_lea.vmem [#allocation3], %s314
        // Predicated region
        $region56: #{transformer_block.15} parent=54 // pred_check
          %p316 = pneg %p85
        $region57: #{transformer_block.15} parent=54 // pred_check_branch
          %318 = sbr.rel (%p316) target = $region59
        $region58: #{transformer_block.15} parent=54 // pred_region
          _
        $region59: #{transformer_block.15} parent=54 // pred_fallthru
          _
        %s319 = smul.u32 4, %s20
        %p320 = scmp.lt.s32.totalorder %s319, 3
        %s321 = scalar_select %p320, %s319, 3
        %p322 = scmp.lt.s32.totalorder %s22, 0
        %s323 = scalar_select %p322, %s22, 0
        %s324 = sadd.s32 %s323, %s321
        %s325 = smul.addr %s324, 4
        %s326 = scalar_lea.vmem %s0, %s325
        %p327 = pneg %p57
        %p328 = pneg %p54
        %s329 = sand.u32 %s72, 1
        %s330 = sand.u32 %s72, 1
        %s331 = smul.addr %s330, 256
        %s332 = scalar_lea.vmem [#allocation3], %s331
        %p333 = pneg %p85
        %p334 = pneg %p82
        %s335 = smul.u32 4, %s20
        %p336 = scmp.lt.s32.totalorder %s335, 3
        %s337 = scalar_select %p336, %s335, 3
        %s338 = smul.addr %s337, 8
        %s339 = scalar_lea.vmem %s2, %s338
        %p340 = pneg %p111
        %p341 = pneg %p108
        %s342 = smul.u32 4, %s21
        %p343 = scmp.lt.s32.totalorder %s342, 7
        %s344 = scalar_select %p343, %s342, 7
        %s345 = scalar_lea.vmem %s3, %s344
        %p346 = pneg %p137
        %p347 = pneg %p134
        %p348 = pneg %p165
        %p349 = pneg %p162
        %s350 = sand.u32 %s152, 1
        %s351 = sand.u32 %s152, 1
        %s352 = smul.addr %s351, 128
        %s353 = scalar_lea.vmem [#allocation4], %s352
        %s354 = smul.u32 4, %s20
        %p355 = scmp.lt.s32.totalorder %s354, 3
        %s356 = scalar_select %p355, %s354, 3
        %p357 = scmp.lt.s32.totalorder %s22, 0
        %s358 = scalar_select %p357, %s22, 0
        %s359 = sadd.s32 %s358, %s356
        %s360 = smul.addr %s359, 4
        %s361 = scalar_lea.vmem %s0, %s360
        %s362 = smul.u32 4, %s20
        %s363 = smul.u32 16, %s22
        %s364 = smul.u32 4, %s21
        %s365 = smul.u32 4, %s20
        %p366 = scmp.lt.s32.totalorder %s365, 3
        %s367 = scalar_select %p366, %s365, 3
        %s368 = smul.addr %s367, 8
        %s369 = scalar_lea.vmem %s2, %s368
        %s370 = smul.u32 4, %s20
        %s371 = smul.u32 4, %s21
        %p372 = scmp.lt.s32.totalorder %s371, 7
        %s373 = scalar_select %p372, %s371, 7
        %s374 = scalar_lea.vmem %s3, %s373
        %s375 = smul.u32 4, %s21
        %s376 = smul.u32 4, %s20
        %s377 = smul.u32 4, %s21
        %p378 = scmp.eq.s32.totalorder %s22, 0
        // Predicated region
        $region60: #{transformer_block.15} parent=54 // pred_check
          %p379 = pneg %p378
        $region61: #{transformer_block.15} parent=54 // pred_check_branch
          %381 = sbr.rel (%p379) target = $region63
        $region62: #{transformer_block.15} parent=54 // pred_region
          %382 = vst [vmem:[#allocation2] sm:$0xff] 0.0
          %383 = vst [vmem:[#allocation2 + $0x8] sm:$0xff] 0.0
          %384 = vst [vmem:[#allocation2 + $0x10] sm:$0xff] 0.0
          %385 = vst [vmem:[#allocation2 + $0x18] sm:$0xff] 0.0
          %386 = vst [vmem:[#allocation2 + $0x20] sm:$0xff] 0.0
          %387 = vst [vmem:[#allocation2 + $0x28] sm:$0xff] 0.0
          %388 = vst [vmem:[#allocation2 + $0x30] sm:$0xff] 0.0
          %389 = vst [vmem:[#allocation2 + $0x38] sm:$0xff] 0.0
          %390 = vst [vmem:[#allocation2 + $0x40] sm:$0xff] 0.0
          %391 = vst [vmem:[#allocation2 + $0x48] sm:$0xff] 0.0
          %392 = vst [vmem:[#allocation2 + $0x50] sm:$0xff] 0.0
          %393 = vst [vmem:[#allocation2 + $0x58] sm:$0xff] 0.0
          %394 = vst [vmem:[#allocation2 + $0x60] sm:$0xff] 0.0
          %395 = vst [vmem:[#allocation2 + $0x68] sm:$0xff] 0.0
          %396 = vst [vmem:[#allocation2 + $0x70] sm:$0xff] 0.0
          %397 = vst [vmem:[#allocation2 + $0x78] sm:$0xff] 0.0
        $region63: #{transformer_block.15} parent=54 // pred_fallthru
          _
        %v398 = vld [vmem:[#allocation2] sm:$0xff]
        %v399 = vld [vmem:[#allocation2 + $0x8] sm:$0xff]
        %v400 = vld [vmem:[#allocation2 + $0x10] sm:$0xff]
        %v401 = vld [vmem:[#allocation2 + $0x18] sm:$0xff]
        %v402 = vld [vmem:[#allocation2 + $0x20] sm:$0xff]
        %v403 = vld [vmem:[#allocation2 + $0x28] sm:$0xff]
        %v404 = vld [vmem:[#allocation2 + $0x30] sm:$0xff]
        %v405 = vld [vmem:[#allocation2 + $0x38] sm:$0xff]
        %v406 = vld [vmem:[#allocation2 + $0x40] sm:$0xff]
        %v407 = vld [vmem:[#allocation2 + $0x48] sm:$0xff]
        %v408 = vld [vmem:[#allocation2 + $0x50] sm:$0xff]
        %v409 = vld [vmem:[#allocation2 + $0x58] sm:$0xff]
        %v410 = vld [vmem:[#allocation2 + $0x60] sm:$0xff]
        %v411 = vld [vmem:[#allocation2 + $0x68] sm:$0xff]
        %v412 = vld [vmem:[#allocation2 + $0x70] sm:$0xff]
        %v413 = vld [vmem:[#allocation2 + $0x78] sm:$0xff]
        %v414 = vld [vmem:[%s361] sm:$0xf]
        %v415 = vld [vmem:[%s361 + $0x4] sm:$0xf]
        %v416 = vld [vmem:[%s361 + $0x8] sm:$0xf]
        %v417 = vld [vmem:[%s361 + $0xc] sm:$0xf]
        %v418 = vld [vmem:[%s315] sm:$0xff]
        %v419 = vld [vmem:[%s315 + $0x8] sm:$0xff]
        %v420 = vld [vmem:[%s315 + $0x10] sm:$0xff]
        %v421 = vld [vmem:[%s315 + $0x18] sm:$0xff]
        %v422 = vld [vmem:[%s315 + $0x20] sm:$0xff]
        %v423 = vld [vmem:[%s315 + $0x28] sm:$0xff]
        %v424 = vld [vmem:[%s315 + $0x30] sm:$0xff]
        %v425 = vld [vmem:[%s315 + $0x38] sm:$0xff]
        %v426 = vld [vmem:[%s315 + $0x40] sm:$0xff]
        %v427 = vld [vmem:[%s315 + $0x48] sm:$0xff]
        %v428 = vld [vmem:[%s315 + $0x50] sm:$0xff]
        %v429 = vld [vmem:[%s315 + $0x58] sm:$0xff]
        %v430 = vld [vmem:[%s315 + $0x60] sm:$0xff]
        %v431 = vld [vmem:[%s315 + $0x68] sm:$0xff]
        %v432 = vld [vmem:[%s315 + $0x70] sm:$0xff]
        %v433 = vld [vmem:[%s315 + $0x78] sm:$0xff]
        %v434 = vld [vmem:[%s315 + $0x80] sm:$0xff]
        %v435 = vld [vmem:[%s315 + $0x88] sm:$0xff]
        %v436 = vld [vmem:[%s315 + $0x90] sm:$0xff]
        %v437 = vld [vmem:[%s315 + $0x98] sm:$0xff]
        %v438 = vld [vmem:[%s315 + $0xa0] sm:$0xff]
        %v439 = vld [vmem:[%s315 + $0xa8] sm:$0xff]
        %v440 = vld [vmem:[%s315 + $0xb0] sm:$0xff]
        %v441 = vld [vmem:[%s315 + $0xb8] sm:$0xff]
        %v442 = vld [vmem:[%s315 + $0xc0] sm:$0xff]
        %v443 = vld [vmem:[%s315 + $0xc8] sm:$0xff]
        %v444 = vld [vmem:[%s315 + $0xd0] sm:$0xff]
        %v445 = vld [vmem:[%s315 + $0xd8] sm:$0xff]
        %v446 = vld [vmem:[%s315 + $0xe0] sm:$0xff]
        %v447 = vld [vmem:[%s315 + $0xe8] sm:$0xff]
        %v448 = vld [vmem:[%s315 + $0xf0] sm:$0xff]
        %v449 = vld [vmem:[%s315 + $0xf8] sm:$0xff]
        %v454 = vunpack.c.l.b16 %v414
        %v455 = vunpack.c.l.b16 %v415
        %v456 = vunpack.c.l.b16 %v416
        %v457 = vunpack.c.l.b16 %v417
        %v458 = vpack.c.b16 %v455, %v454
        %v459 = vpack.c.b16 %v457, %v456
        %v494 = vunpack.c.l.b16 %v418
        %v495 = vunpack.c.h.b16 %v418
        %v496 = vunpack.c.l.b16 %v419
        %v497 = vunpack.c.h.b16 %v419
        %v498 = vunpack.c.l.b16 %v420
        %v499 = vunpack.c.h.b16 %v420
        %v500 = vunpack.c.l.b16 %v421
        %v501 = vunpack.c.h.b16 %v421
        %v502 = vunpack.c.l.b16 %v422
        %v503 = vunpack.c.h.b16 %v422
        %v504 = vunpack.c.l.b16 %v423
        %v505 = vunpack.c.h.b16 %v423
        %v506 = vunpack.c.l.b16 %v424
        %v507 = vunpack.c.h.b16 %v424
        %v508 = vunpack.c.l.b16 %v425
        %v509 = vunpack.c.h.b16 %v425
        %v510 = vunpack.c.l.b16 %v426
        %v511 = vunpack.c.h.b16 %v426
        %v512 = vunpack.c.l.b16 %v427
        %v513 = vunpack.c.h.b16 %v427
        %v514 = vunpack.c.l.b16 %v428
        %v515 = vunpack.c.h.b16 %v428
        %v516 = vunpack.c.l.b16 %v429
        %v517 = vunpack.c.h.b16 %v429
        %v518 = vunpack.c.l.b16 %v430
        %v519 = vunpack.c.h.b16 %v430
        %v520 = vunpack.c.l.b16 %v431
        %v521 = vunpack.c.h.b16 %v431
        %v522 = vunpack.c.l.b16 %v432
        %v523 = vunpack.c.h.b16 %v432
        %v524 = vunpack.c.l.b16 %v433
        %v525 = vunpack.c.h.b16 %v433
        %v526 = vunpack.c.l.b16 %v434
        %v527 = vunpack.c.h.b16 %v434
        %v528 = vunpack.c.l.b16 %v435
        %v529 = vunpack.c.h.b16 %v435
        %v530 = vunpack.c.l.b16 %v436
        %v531 = vunpack.c.h.b16 %v436
        %v532 = vunpack.c.l.b16 %v437
        %v533 = vunpack.c.h.b16 %v437
        %v534 = vunpack.c.l.b16 %v438
        %v535 = vunpack.c.h.b16 %v438
        %v536 = vunpack.c.l.b16 %v439
        %v537 = vunpack.c.h.b16 %v439
        %v538 = vunpack.c.l.b16 %v440
        %v539 = vunpack.c.h.b16 %v440
        %v540 = vunpack.c.l.b16 %v441
        %v541 = vunpack.c.h.b16 %v441
        %v542 = vunpack.c.l.b16 %v442
        %v543 = vunpack.c.h.b16 %v442
        %v544 = vunpack.c.l.b16 %v443
        %v545 = vunpack.c.h.b16 %v443
        %v546 = vunpack.c.l.b16 %v444
        %v547 = vunpack.c.h.b16 %v444
        %v548 = vunpack.c.l.b16 %v445
        %v549 = vunpack.c.h.b16 %v445
        %v550 = vunpack.c.l.b16 %v446
        %v551 = vunpack.c.h.b16 %v446
        %v552 = vunpack.c.l.b16 %v447
        %v553 = vunpack.c.h.b16 %v447
        %v554 = vunpack.c.l.b16 %v448
        %v555 = vunpack.c.h.b16 %v448
        %v556 = vunpack.c.l.b16 %v449
        %v557 = vunpack.c.h.b16 %v449
        %v558 = vpack.c.b16 %v498, %v494
        %v559 = vpack.c.b16 %v499, %v495
        %v560 = vpack.c.b16 %v500, %v496
        %v561 = vpack.c.b16 %v501, %v497
        %v562 = vpack.c.b16 %v506, %v502
        %v563 = vpack.c.b16 %v507, %v503
        %v564 = vpack.c.b16 %v508, %v504
        %v565 = vpack.c.b16 %v509, %v505
        %v566 = vpack.c.b16 %v514, %v510
        %v567 = vpack.c.b16 %v515, %v511
        %v568 = vpack.c.b16 %v516, %v512
        %v569 = vpack.c.b16 %v517, %v513
        %v570 = vpack.c.b16 %v522, %v518
        %v571 = vpack.c.b16 %v523, %v519
        %v572 = vpack.c.b16 %v524, %v520
        %v573 = vpack.c.b16 %v525, %v521
        %v574 = vpack.c.b16 %v530, %v526
        %v575 = vpack.c.b16 %v531, %v527
        %v576 = vpack.c.b16 %v532, %v528
        %v577 = vpack.c.b16 %v533, %v529
        %v578 = vpack.c.b16 %v538, %v534
        %v579 = vpack.c.b16 %v539, %v535
        %v580 = vpack.c.b16 %v540, %v536
        %v581 = vpack.c.b16 %v541, %v537
        %v582 = vpack.c.b16 %v546, %v542
        %v583 = vpack.c.b16 %v547, %v543
        %v584 = vpack.c.b16 %v548, %v544
        %v585 = vpack.c.b16 %v549, %v545
        %v586 = vpack.c.b16 %v554, %v550
        %v587 = vpack.c.b16 %v555, %v551
        %v588 = vpack.c.b16 %v556, %v552
        %v589 = vpack.c.b16 %v557, %v553
        %622 = vmatpush.bf16.msra.mxu0 %v586
        %623 = vmatpush.bf16.msra.mxu0 %v582
        %624 = vmatpush.bf16.msra.mxu0 %v578
        %625 = vmatpush.bf16.msra.mxu0 %v574
        %626 = vmatpush.bf16.msra.mxu0 %v570
        %627 = vmatpush.bf16.msra.mxu0 %v566
        %628 = vmatpush.bf16.msra.mxu0 %v562
        %629 = vmatpush.bf16.msra.mxu0 %v558
        %630 = vmatmul.bf16.gmra.mxu0 %v458
        %v631 = vpop.f32.mrf.mxu0
        %v632 = vadd.f32 0.0, %v631
        %v633 = vpop.f32.mrf.mxu0
        %v634 = vadd.f32 0.0, %v633
        %635 = vmatmul.bf16.gmra.mxu0 %v459
        %v636 = vpop.f32.mrf.mxu0
        %v637 = vadd.f32 0.0, %v636
        %v638 = vpop.f32.mrf.mxu0
        %v639 = vadd.f32 0.0, %v638
        %640 = vdwg.mxu0
        %641 = vmatpush.bf16.msra.mxu0 %v587
        %642 = vmatpush.bf16.msra.mxu0 %v583
        %643 = vmatpush.bf16.msra.mxu0 %v579
        %644 = vmatpush.bf16.msra.mxu0 %v575
        %645 = vmatpush.bf16.msra.mxu0 %v571
        %646 = vmatpush.bf16.msra.mxu0 %v567
        %647 = vmatpush.bf16.msra.mxu0 %v563
        %648 = vmatpush.bf16.msra.mxu0 %v559
        %649 = vmatmul.bf16.gmra.mxu0 %v458
        %v650 = vpop.f32.mrf.mxu0
        %v651 = vadd.f32 0.0, %v650
        %v652 = vpop.f32.mrf.mxu0
        %v653 = vadd.f32 0.0, %v652
        %654 = vmatmul.bf16.gmra.mxu0 %v459
        %v655 = vpop.f32.mrf.mxu0
        %v656 = vadd.f32 0.0, %v655
        %v657 = vpop.f32.mrf.mxu0
        %v658 = vadd.f32 0.0, %v657
        %659 = vdwg.mxu0
        %660 = vmatpush.bf16.msra.mxu0 %v588
        %661 = vmatpush.bf16.msra.mxu0 %v584
        %662 = vmatpush.bf16.msra.mxu0 %v580
        %663 = vmatpush.bf16.msra.mxu0 %v576
        %664 = vmatpush.bf16.msra.mxu0 %v572
        %665 = vmatpush.bf16.msra.mxu0 %v568
        %666 = vmatpush.bf16.msra.mxu0 %v564
        %667 = vmatpush.bf16.msra.mxu0 %v560
        %668 = vmatmul.bf16.gmra.mxu0 %v458
        %v669 = vpop.f32.mrf.mxu0
        %v670 = vadd.f32 0.0, %v669
        %v671 = vpop.f32.mrf.mxu0
        %v672 = vadd.f32 0.0, %v671
        %673 = vmatmul.bf16.gmra.mxu0 %v459
        %v674 = vpop.f32.mrf.mxu0
        %v675 = vadd.f32 0.0, %v674
        %v676 = vpop.f32.mrf.mxu0
        %v677 = vadd.f32 0.0, %v676
        %678 = vdwg.mxu0
        %679 = vmatpush.bf16.msra.mxu0 %v589
        %680 = vmatpush.bf16.msra.mxu0 %v585
        %681 = vmatpush.bf16.msra.mxu0 %v581
        %682 = vmatpush.bf16.msra.mxu0 %v577
        %683 = vmatpush.bf16.msra.mxu0 %v573
        %684 = vmatpush.bf16.msra.mxu0 %v569
        %685 = vmatpush.bf16.msra.mxu0 %v565
        %686 = vmatpush.bf16.msra.mxu0 %v561
        %687 = vmatmul.bf16.gmra.mxu0 %v458
        %v688 = vpop.f32.mrf.mxu0
        %v689 = vadd.f32 0.0, %v688
        %v690 = vpop.f32.mrf.mxu0
        %v691 = vadd.f32 0.0, %v690
        %692 = vmatmul.bf16.gmra.mxu0 %v459
        %v693 = vpop.f32.mrf.mxu0
        %v694 = vadd.f32 0.0, %v693
        %v695 = vpop.f32.mrf.mxu0
        %v696 = vadd.f32 0.0, %v695
        %697 = vdwg.mxu0
        %v698 = vadd.f32 %v398, %v632
        %v699 = vadd.f32 %v399, %v651
        %v700 = vadd.f32 %v400, %v670
        %v701 = vadd.f32 %v401, %v689
        %v702 = vadd.f32 %v402, %v634
        %v703 = vadd.f32 %v403, %v653
        %v704 = vadd.f32 %v404, %v672
        %v705 = vadd.f32 %v405, %v691
        %v706 = vadd.f32 %v406, %v637
        %v707 = vadd.f32 %v407, %v656
        %v708 = vadd.f32 %v408, %v675
        %v709 = vadd.f32 %v409, %v694
        %v710 = vadd.f32 %v410, %v639
        %v711 = vadd.f32 %v411, %v658
        %v712 = vadd.f32 %v412, %v677
        %v713 = vadd.f32 %v413, %v696
        %714 = vst [vmem:[#allocation2] sm:$0xff] %v698
        %715 = vst [vmem:[#allocation2 + $0x8] sm:$0xff] %v699
        %716 = vst [vmem:[#allocation2 + $0x10] sm:$0xff] %v700
        %717 = vst [vmem:[#allocation2 + $0x18] sm:$0xff] %v701
        %718 = vst [vmem:[#allocation2 + $0x20] sm:$0xff] %v702
        %719 = vst [vmem:[#allocation2 + $0x28] sm:$0xff] %v703
        %720 = vst [vmem:[#allocation2 + $0x30] sm:$0xff] %v704
        %721 = vst [vmem:[#allocation2 + $0x38] sm:$0xff] %v705
        %722 = vst [vmem:[#allocation2 + $0x40] sm:$0xff] %v706
        %723 = vst [vmem:[#allocation2 + $0x48] sm:$0xff] %v707
        %724 = vst [vmem:[#allocation2 + $0x50] sm:$0xff] %v708
        %725 = vst [vmem:[#allocation2 + $0x58] sm:$0xff] %v709
        %726 = vst [vmem:[#allocation2 + $0x60] sm:$0xff] %v710
        %727 = vst [vmem:[#allocation2 + $0x68] sm:$0xff] %v711
        %728 = vst [vmem:[#allocation2 + $0x70] sm:$0xff] %v712
        %729 = vst [vmem:[#allocation2 + $0x78] sm:$0xff] %v713
        // Predicated region
        $region64: #{transformer_block.15} parent=54 // pred_check
          %p730 = pneg %p378
        $region65: #{transformer_block.15} parent=54 // pred_check_branch
          %732 = sbr.rel (%p730) target = $region67
        $region66: #{transformer_block.15} parent=54 // pred_region
          %v733 = vld [vmem:[#allocation2] sm:$0xff]
          %v734 = vld [vmem:[#allocation2 + $0x8] sm:$0xff]
          %v735 = vld [vmem:[#allocation2 + $0x10] sm:$0xff]
          %v736 = vld [vmem:[#allocation2 + $0x18] sm:$0xff]
          %v737 = vld [vmem:[#allocation2 + $0x20] sm:$0xff]
          %v738 = vld [vmem:[#allocation2 + $0x28] sm:$0xff]
          %v739 = vld [vmem:[#allocation2 + $0x30] sm:$0xff]
          %v740 = vld [vmem:[#allocation2 + $0x38] sm:$0xff]
          %v741 = vld [vmem:[#allocation2 + $0x40] sm:$0xff]
          %v742 = vld [vmem:[#allocation2 + $0x48] sm:$0xff]
          %v743 = vld [vmem:[#allocation2 + $0x50] sm:$0xff]
          %v744 = vld [vmem:[#allocation2 + $0x58] sm:$0xff]
          %v745 = vld [vmem:[#allocation2 + $0x60] sm:$0xff]
          %v746 = vld [vmem:[#allocation2 + $0x68] sm:$0xff]
          %v747 = vld [vmem:[#allocation2 + $0x70] sm:$0xff]
          %v748 = vld [vmem:[#allocation2 + $0x78] sm:$0xff]
          %v749 = vld [vmem:[%s369] sm:$0xff]
          %v750 = vld [vmem:[%s369 + $0x8] sm:$0xff]
          %v751 = vld [vmem:[%s369 + $0x10] sm:$0xff]
          %v752 = vld [vmem:[%s369 + $0x18] sm:$0xff]
          %754 = vset.pattern.permute.xlu0 0
          %755 = vperm.xlu0 %754, %v749
          %v756 = vpop.permute.xlu0 %755
          %759 = vset.pattern.permute.xlu0 0
          %760 = vperm.xlu0 %759, %v750
          %v761 = vpop.permute.xlu0 %760
          %764 = vset.pattern.permute.xlu0 0
          %765 = vperm.xlu0 %764, %v751
          %v766 = vpop.permute.xlu0 %765
          %769 = vset.pattern.permute.xlu0 0
          %770 = vperm.xlu0 %769, %v752
          %v771 = vpop.permute.xlu0 %770
          %v773 = vmul.f32 %v733, %v756
          %v774 = vmul.f32 %v734, %v756
          %v775 = vmul.f32 %v735, %v756
          %v776 = vmul.f32 %v736, %v756
          %v777 = vmul.f32 %v737, %v761
          %v778 = vmul.f32 %v738, %v761
          %v779 = vmul.f32 %v739, %v761
          %v780 = vmul.f32 %v740, %v761
          %v781 = vmul.f32 %v741, %v766
          %v782 = vmul.f32 %v742, %v766
          %v783 = vmul.f32 %v743, %v766
          %v784 = vmul.f32 %v744, %v766
          %v785 = vmul.f32 %v745, %v771
          %v786 = vmul.f32 %v746, %v771
          %v787 = vmul.f32 %v747, %v771
          %v788 = vmul.f32 %v748, %v771
          %v789 = vld [vmem:[%s374] sm:$0xf]
          %v791 = vperm.slane %v789, 0
          %v792 = vperm.slane %v789, 1
          %v793 = vperm.slane %v789, 2
          %v794 = vperm.slane %v789, 3
          %v799 = vmul.f32 %v773, %v791
          %v800 = vmul.f32 %v774, %v792
          %v801 = vmul.f32 %v775, %v793
          %v802 = vmul.f32 %v776, %v794
          %v803 = vmul.f32 %v777, %v791
          %v804 = vmul.f32 %v778, %v792
          %v805 = vmul.f32 %v779, %v793
          %v806 = vmul.f32 %v780, %v794
          %v807 = vmul.f32 %v781, %v791
          %v808 = vmul.f32 %v782, %v792
          %v809 = vmul.f32 %v783, %v793
          %v810 = vmul.f32 %v784, %v794
          %v811 = vmul.f32 %v785, %v791
          %v812 = vmul.f32 %v786, %v792
          %v813 = vmul.f32 %v787, %v793
          %v814 = vmul.f32 %v788, %v794
          %815 = vst [vmem:[%s353] sm:$0xff] %v799
          %816 = vst [vmem:[%s353 + $0x8] sm:$0xff] %v800
          %817 = vst [vmem:[%s353 + $0x10] sm:$0xff] %v801
          %818 = vst [vmem:[%s353 + $0x18] sm:$0xff] %v802
          %819 = vst [vmem:[%s353 + $0x20] sm:$0xff] %v803
          %820 = vst [vmem:[%s353 + $0x28] sm:$0xff] %v804
          %821 = vst [vmem:[%s353 + $0x30] sm:$0xff] %v805
          %822 = vst [vmem:[%s353 + $0x38] sm:$0xff] %v806
          %823 = vst [vmem:[%s353 + $0x40] sm:$0xff] %v807
          %824 = vst [vmem:[%s353 + $0x48] sm:$0xff] %v808
          %825 = vst [vmem:[%s353 + $0x50] sm:$0xff] %v809
          %826 = vst [vmem:[%s353 + $0x58] sm:$0xff] %v810
          %827 = vst [vmem:[%s353 + $0x60] sm:$0xff] %v811
          %828 = vst [vmem:[%s353 + $0x68] sm:$0xff] %v812
          %829 = vst [vmem:[%s353 + $0x70] sm:$0xff] %v813
          %830 = vst [vmem:[%s353 + $0x78] sm:$0xff] %v814
        $region67: #{transformer_block.15} parent=54 // pred_fallthru
          _
        %s831 = sand.u32 %s152, 1
        %s832 = sand.u32 %s152, 1
        %s833 = smul.addr %s832, 128
        %s834 = scalar_lea.vmem [#allocation4], %s833
        // Predicated region
        $region68: #{transformer_block.15} parent=54 // pred_check
          %p835 = pneg %p162
        $region69: #{transformer_block.15} parent=54 // pred_check_branch
          %837 = sbr.rel (%p835) target = $region71
        $region70: #{transformer_block.15} parent=54 // pred_region
          %s838 = smul.u32 4, %s20
          %s839 = smul.u32 4, %s21
          %s840 = smul.addr %s838, 8
          %s841 = sadd.s32 %s839, %s840
          %s842 = smul.addr %s841, 8
          %s843 = scalar_lea.vmem %s4, %s842
          // Predicated region
          $region72: #{transformer_block.15} parent=70 // pred_check
            _
          $region73: #{transformer_block.15} parent=70 // pred_check_branch
            %845 = sbr.rel (0) target = $region75
          $region74: #{transformer_block.15} parent=70 // pred_region
            // Predicated region
            $region76: #{transformer_block.15} parent=74 // pred_check
              _
            $region77: #{transformer_block.15} parent=74 // pred_check_branch
              %847 = sbr.rel (0) target = $region79
            $region78: #{transformer_block.15} parent=74 // pred_region
              loop: start=0, step=1, limit=1
              $region80: #{transformer_block.15} parent=78 // loop_pre_header
                _
              $region81: #{transformer_block.15} parent=78 // loop_header
                %s849 = sphi 0, %s853
                %p850 = scmp.ge.s32.totalorder %s849, 1
                %s854 = sphi %s834, %s834
                %s855 = sphi %s843, %s843
              $region82: #{transformer_block.15} parent=78 // loop_header_branch
                %852 = sbr.rel (%p850) target = $region86
              $region83: #{transformer_block.15} parent=78 // loop_body
                %v856 = vld [vmem:[%s854] sm:$0xff]
                %857 = vst [vmem:[%s855] sm:$0xff] %v856
                %v858 = vld [vmem:[%s854 + $0x8] sm:$0xff]
                %859 = vst [vmem:[%s855 + $0x8] sm:$0xff] %v858
                %v860 = vld [vmem:[%s854 + $0x10] sm:$0xff]
                %861 = vst [vmem:[%s855 + $0x10] sm:$0xff] %v860
                %v862 = vld [vmem:[%s854 + $0x18] sm:$0xff]
                %863 = vst [vmem:[%s855 + $0x18] sm:$0xff] %v862
                %v864 = vld [vmem:[%s854 + $0x20] sm:$0xff]
                %865 = vst [vmem:[%s855 + $0x40] sm:$0xff] %v864
                %v866 = vld [vmem:[%s854 + $0x28] sm:$0xff]
                %867 = vst [vmem:[%s855 + $0x48] sm:$0xff] %v866
                %v868 = vld [vmem:[%s854 + $0x30] sm:$0xff]
                %869 = vst [vmem:[%s855 + $0x50] sm:$0xff] %v868
                %v870 = vld [vmem:[%s854 + $0x38] sm:$0xff]
                %871 = vst [vmem:[%s855 + $0x58] sm:$0xff] %v870
                %v872 = vld [vmem:[%s854 + $0x40] sm:$0xff]
                %873 = vst [vmem:[%s855 + $0x80] sm:$0xff] %v872
                %v874 = vld [vmem:[%s854 + $0x48] sm:$0xff]
                %875 = vst [vmem:[%s855 + $0x88] sm:$0xff] %v874
                %v876 = vld [vmem:[%s854 + $0x50] sm:$0xff]
                %877 = vst [vmem:[%s855 + $0x90] sm:$0xff] %v876
                %v878 = vld [vmem:[%s854 + $0x58] sm:$0xff]
                %879 = vst [vmem:[%s855 + $0x98] sm:$0xff] %v878
                %v880 = vld [vmem:[%s854 + $0x60] sm:$0xff]
                %881 = vst [vmem:[%s855 + $0xc0] sm:$0xff] %v880
                %v882 = vld [vmem:[%s854 + $0x68] sm:$0xff]
                %883 = vst [vmem:[%s855 + $0xc8] sm:$0xff] %v882
                %v884 = vld [vmem:[%s854 + $0x70] sm:$0xff]
                %885 = vst [vmem:[%s855 + $0xd0] sm:$0xff] %v884
                %v886 = vld [vmem:[%s854 + $0x78] sm:$0xff]
                %887 = vst [vmem:[%s855 + $0xd8] sm:$0xff] %v886
              $region84: #{transformer_block.15} parent=78 // loop_footer
                %s853 = sadd.s32 1, %s849
              $region85: #{transformer_block.15} parent=78 // loop_footer_branch
                %848 = sbr.rel target = $region81
              $region86: #{transformer_block.15} parent=78 // loop_exit
                _
            $region79: #{transformer_block.15} parent=74 // pred_fallthru
              _
            // Predicated region
            $region87: #{transformer_block.15} parent=74 // pred_check
              _
            $region88: #{transformer_block.15} parent=74 // pred_check_branch
              %889 = sbr.rel target = $region90
            $region89: #{transformer_block.15} parent=74 // pred_region
              _
            $region90: #{transformer_block.15} parent=74 // pred_fallthru
              _
          $region75: #{transformer_block.15} parent=70 // pred_fallthru
            _
          %890 = vnop
        $region71: #{transformer_block.15} parent=54 // pred_fallthru
          _
      $region55: #{transformer_block.15} parent=5 // pred_fallthru
        _
      %p891 = scmp.le.s32.totalorder 2, %s10
      // Predicated region
      $region91: #{transformer_block.15} parent=5 // pred_check
        %p892 = pneg %p891
      $region92: #{transformer_block.15} parent=5 // pred_check_branch
        %894 = sbr.rel (%p892) target = $region94
      $region93: #{transformer_block.15} parent=5 // pred_region
        %s895 = ssub.s32 %s10, 2
        // Predicated region
        $region95: #{transformer_block.15} parent=93 // pred_check
          %p896 = pneg %p168
        $region96: #{transformer_block.15} parent=93 // pred_check_branch
          %898 = sbr.rel (%p896) target = $region98
        $region97: #{transformer_block.15} parent=93 // pred_region
          %s899 = sand.u32 %s153, 1
          %s900 = sand.u32 %s153, 1
          %s901 = smul.addr %s900, 128
          %s902 = scalar_lea.vmem [#allocation4], %s901
        $region98: #{transformer_block.15} parent=93 // pred_fallthru
          _
      $region94: #{transformer_block.15} parent=5 // pred_fallthru
        _
    $region6: #{transformer_block.15} parent=1 // loop_footer
      %s14 = sadd.s32 1, %s10
    $region7: #{transformer_block.15} parent=1 // loop_footer_branch
      %9 = sbr.rel target = $region3
    $region8: #{transformer_block.15} parent=1 // loop_exit
      _

// kernel: transformer_block.17
$region0: #{transformer_block.17}
  #allocation0 [shape = 'u32[]', space=smem, size = 0x4, offset = 0x4, fixed_abs, tag = 'smem constant byte address 0x4 - core index']
  #allocation1 [shape = 'u32[72,128]{1,0:T(1,128)}', space=vmem, size = 0x9000, scoped, tag = 'internal scratch']
  #allocation2 [shape = 'f32[32,128]{1,0:T(8,128)}', space=vmem, size = 0x4000, scoped, tag = 'scratch operand']
  %s0 = inlined_call_operand.vmem [shape: bf16[32,512], index: 0, kind: input, shape index: {}]
  %s1 = inlined_call_operand.vmem [shape: bf16[512,128], index: 1, kind: input, shape index: {}]
  %s2 = inlined_call_operand.vmem [shape: f32[32,1], index: 2, kind: input, shape index: {}]
  %s3 = inlined_call_operand.vmem [shape: f32[1,128], index: 3, kind: input, shape index: {}]
  %s4 = inlined_call_operand.vmem [shape: f32[32,128], index: 4, kind: output, shape index: {}]
  %s5 = sld [smem:[#allocation0]]
  $region34: #{transformer_block.17} parent=0
    _
  %s7 = ssub.s32 1, %s5
  %s8 = scalar_select 0, %s7, %s5
  // Predicated region
  $region2: #{transformer_block.17} parent=0 // pred_check
    _
  $region3: #{transformer_block.17} parent=0 // pred_check_branch
    %10 = sbr.rel (0) target = $region5
  $region4: #{transformer_block.17} parent=0 // pred_region
    _
  $region5: #{transformer_block.17} parent=0 // pred_fallthru
    _
  // Predicated region
  $region6: #{transformer_block.17} parent=0 // pred_check
    _
  $region7: #{transformer_block.17} parent=0 // pred_check_branch
    %12 = sbr.rel (0) target = $region9
  $region8: #{transformer_block.17} parent=0 // pred_region
    _
  $region9: #{transformer_block.17} parent=0 // pred_fallthru
    _
  // Predicated region
  $region10: #{transformer_block.17} parent=0 // pred_check
    _
  $region11: #{transformer_block.17} parent=0 // pred_check_branch
    %14 = sbr.rel (0) target = $region13
  $region12: #{transformer_block.17} parent=0 // pred_region
    _
  $region13: #{transformer_block.17} parent=0 // pred_fallthru
    _
  // Predicated region
  $region14: #{transformer_block.17} parent=0 // pred_check
    _
  $region15: #{transformer_block.17} parent=0 // pred_check_branch
    %16 = sbr.rel (0) target = $region17
  $region16: #{transformer_block.17} parent=0 // pred_region
    _
  $region17: #{transformer_block.17} parent=0 // pred_fallthru
    _
  %p17 = scmp.eq.s32.totalorder 0, 0
  // Predicated region
  $region18: #{transformer_block.17} parent=0 // pred_check
    %p18 = pneg %p17
  $region19: #{transformer_block.17} parent=0 // pred_check_branch
    %20 = sbr.rel (%p18) target = $region21
  $region20: #{transformer_block.17} parent=0 // pred_region
    %21 = vst [vmem:[#allocation2] sm:$0xff] 0.0
    %22 = vst [vmem:[#allocation2 + $0x8] sm:$0xff] 0.0
    %23 = vst [vmem:[#allocation2 + $0x10] sm:$0xff] 0.0
    %24 = vst [vmem:[#allocation2 + $0x18] sm:$0xff] 0.0
  $region21: #{transformer_block.17} parent=0 // pred_fallthru
    _
  %v25 = vld [vmem:[#allocation2] sm:$0xff]
  %v26 = vld [vmem:[#allocation2 + $0x8] sm:$0xff]
  %v27 = vld [vmem:[#allocation2 + $0x10] sm:$0xff]
  %v28 = vld [vmem:[#allocation2 + $0x18] sm:$0xff]
  %v29 = vld [vmem:[%s0] sm:$0xff]
  %v30 = vld [vmem:[%s0 + $0x8] sm:$0xff]
  %v31 = vld [vmem:[%s0 + $0x10] sm:$0xff]
  %v32 = vld [vmem:[%s0 + $0x18] sm:$0xff]
  %v33 = vld [vmem:[%s0 + $0x20] sm:$0xff]
  %v34 = vld [vmem:[%s0 + $0x28] sm:$0xff]
  %v35 = vld [vmem:[%s0 + $0x30] sm:$0xff]
  %v36 = vld [vmem:[%s0 + $0x38] sm:$0xff]
  %v37 = vld [vmem:[%s1] sm:$0xf]
  %v38 = vld [vmem:[%s1 + $0x4] sm:$0xf]
  %v39 = vld [vmem:[%s1 + $0x8] sm:$0xf]
  %v40 = vld [vmem:[%s1 + $0xc] sm:$0xf]
  %v41 = vld [vmem:[%s1 + $0x10] sm:$0xf]
  %v42 = vld [vmem:[%s1 + $0x14] sm:$0xf]
  %v43 = vld [vmem:[%s1 + $0x18] sm:$0xf]
  %v44 = vld [vmem:[%s1 + $0x1c] sm:$0xf]
  %v45 = vld [vmem:[%s1 + $0x20] sm:$0xf]
  %v46 = vld [vmem:[%s1 + $0x24] sm:$0xf]
  %v47 = vld [vmem:[%s1 + $0x28] sm:$0xf]
  %v48 = vld [vmem:[%s1 + $0x2c] sm:$0xf]
  %v49 = vld [vmem:[%s1 + $0x30] sm:$0xf]
  %v50 = vld [vmem:[%s1 + $0x34] sm:$0xf]
  %v51 = vld [vmem:[%s1 + $0x38] sm:$0xf]
  %v52 = vld [vmem:[%s1 + $0x3c] sm:$0xf]
  %v53 = vld [vmem:[%s1 + $0x40] sm:$0xf]
  %v54 = vld [vmem:[%s1 + $0x44] sm:$0xf]
  %v55 = vld [vmem:[%s1 + $0x48] sm:$0xf]
  %v56 = vld [vmem:[%s1 + $0x4c] sm:$0xf]
  %v57 = vld [vmem:[%s1 + $0x50] sm:$0xf]
  %v58 = vld [vmem:[%s1 + $0x54] sm:$0xf]
  %v59 = vld [vmem:[%s1 + $0x58] sm:$0xf]
  %v60 = vld [vmem:[%s1 + $0x5c] sm:$0xf]
  %v61 = vld [vmem:[%s1 + $0x60] sm:$0xf]
  %v62 = vld [vmem:[%s1 + $0x64] sm:$0xf]
  %v63 = vld [vmem:[%s1 + $0x68] sm:$0xf]
  %v64 = vld [vmem:[%s1 + $0x6c] sm:$0xf]
  %v65 = vld [vmem:[%s1 + $0x70] sm:$0xf]
  %v66 = vld [vmem:[%s1 + $0x74] sm:$0xf]
  %v67 = vld [vmem:[%s1 + $0x78] sm:$0xf]
  %v68 = vld [vmem:[%s1 + $0x7c] sm:$0xf]
  %v69 = vld [vmem:[%s1 + $0x80] sm:$0xf]
  %v70 = vld [vmem:[%s1 + $0x84] sm:$0xf]
  %v71 = vld [vmem:[%s1 + $0x88] sm:$0xf]
  %v72 = vld [vmem:[%s1 + $0x8c] sm:$0xf]
  %v73 = vld [vmem:[%s1 + $0x90] sm:$0xf]
  %v74 = vld [vmem:[%s1 + $0x94] sm:$0xf]
  %v75 = vld [vmem:[%s1 + $0x98] sm:$0xf]
  %v76 = vld [vmem:[%s1 + $0x9c] sm:$0xf]
  %v77 = vld [vmem:[%s1 + $0xa0] sm:$0xf]
  %v78 = vld [vmem:[%s1 + $0xa4] sm:$0xf]
  %v79 = vld [vmem:[%s1 + $0xa8] sm:$0xf]
  %v80 = vld [vmem:[%s1 + $0xac] sm:$0xf]
  %v81 = vld [vmem:[%s1 + $0xb0] sm:$0xf]
  %v82 = vld [vmem:[%s1 + $0xb4] sm:$0xf]
  %v83 = vld [vmem:[%s1 + $0xb8] sm:$0xf]
  %v84 = vld [vmem:[%s1 + $0xbc] sm:$0xf]
  %v85 = vld [vmem:[%s1 + $0xc0] sm:$0xf]
  %v86 = vld [vmem:[%s1 + $0xc4] sm:$0xf]
  %v87 = vld [vmem:[%s1 + $0xc8] sm:$0xf]
  %v88 = vld [vmem:[%s1 + $0xcc] sm:$0xf]
  %v89 = vld [vmem:[%s1 + $0xd0] sm:$0xf]
  %v90 = vld [vmem:[%s1 + $0xd4] sm:$0xf]
  %v91 = vld [vmem:[%s1 + $0xd8] sm:$0xf]
  %v92 = vld [vmem:[%s1 + $0xdc] sm:$0xf]
  %v93 = vld [vmem:[%s1 + $0xe0] sm:$0xf]
  %v94 = vld [vmem:[%s1 + $0xe4] sm:$0xf]
  %v95 = vld [vmem:[%s1 + $0xe8] sm:$0xf]
  %v96 = vld [vmem:[%s1 + $0xec] sm:$0xf]
  %v97 = vld [vmem:[%s1 + $0xf0] sm:$0xf]
  %v98 = vld [vmem:[%s1 + $0xf4] sm:$0xf]
  %v99 = vld [vmem:[%s1 + $0xf8] sm:$0xf]
  %v100 = vld [vmem:[%s1 + $0xfc] sm:$0xf]
  %v109 = vunpack.c.l.b16 %v29
  %v110 = vunpack.c.h.b16 %v29
  %v111 = vunpack.c.l.b16 %v30
  %v112 = vunpack.c.h.b16 %v30
  %v113 = vunpack.c.l.b16 %v31
  %v114 = vunpack.c.h.b16 %v31
  %v115 = vunpack.c.l.b16 %v32
  %v116 = vunpack.c.h.b16 %v32
  %v117 = vunpack.c.l.b16 %v33
  %v118 = vunpack.c.h.b16 %v33
  %v119 = vunpack.c.l.b16 %v34
  %v120 = vunpack.c.h.b16 %v34
  %v121 = vunpack.c.l.b16 %v35
  %v122 = vunpack.c.h.b16 %v35
  %v123 = vunpack.c.l.b16 %v36
  %v124 = vunpack.c.h.b16 %v36
  %v125 = vpack.c.b16 %v113, %v109
  %v126 = vpack.c.b16 %v114, %v110
  %v127 = vpack.c.b16 %v115, %v111
  %v128 = vpack.c.b16 %v116, %v112
  %v129 = vpack.c.b16 %v121, %v117
  %v130 = vpack.c.b16 %v122, %v118
  %v131 = vpack.c.b16 %v123, %v119
  %v132 = vpack.c.b16 %v124, %v120
  %v205 = vunpack.c.l.b16 %v37
  %v206 = vunpack.c.l.b16 %v38
  %v207 = vunpack.c.l.b16 %v39
  %v208 = vunpack.c.l.b16 %v40
  %v209 = vunpack.c.l.b16 %v41
  %v210 = vunpack.c.l.b16 %v42
  %v211 = vunpack.c.l.b16 %v43
  %v212 = vunpack.c.l.b16 %v44
  %v213 = vunpack.c.l.b16 %v45
  %v214 = vunpack.c.l.b16 %v46
  %v215 = vunpack.c.l.b16 %v47
  %v216 = vunpack.c.l.b16 %v48
  %v217 = vunpack.c.l.b16 %v49
  %v218 = vunpack.c.l.b16 %v50
  %v219 = vunpack.c.l.b16 %v51
  %v220 = vunpack.c.l.b16 %v52
  %v221 = vunpack.c.l.b16 %v53
  %v222 = vunpack.c.l.b16 %v54
  %v223 = vunpack.c.l.b16 %v55
  %v224 = vunpack.c.l.b16 %v56
  %v225 = vunpack.c.l.b16 %v57
  %v226 = vunpack.c.l.b16 %v58
  %v227 = vunpack.c.l.b16 %v59
  %v228 = vunpack.c.l.b16 %v60
  %v229 = vunpack.c.l.b16 %v61
  %v230 = vunpack.c.l.b16 %v62
  %v231 = vunpack.c.l.b16 %v63
  %v232 = vunpack.c.l.b16 %v64
  %v233 = vunpack.c.l.b16 %v65
  %v234 = vunpack.c.l.b16 %v66
  %v235 = vunpack.c.l.b16 %v67
  %v236 = vunpack.c.l.b16 %v68
  %v237 = vunpack.c.l.b16 %v69
  %v238 = vunpack.c.l.b16 %v70
  %v239 = vunpack.c.l.b16 %v71
  %v240 = vunpack.c.l.b16 %v72
  %v241 = vunpack.c.l.b16 %v73
  %v242 = vunpack.c.l.b16 %v74
  %v243 = vunpack.c.l.b16 %v75
  %v244 = vunpack.c.l.b16 %v76
  %v245 = vunpack.c.l.b16 %v77
  %v246 = vunpack.c.l.b16 %v78
  %v247 = vunpack.c.l.b16 %v79
  %v248 = vunpack.c.l.b16 %v80
  %v249 = vunpack.c.l.b16 %v81
  %v250 = vunpack.c.l.b16 %v82
  %v251 = vunpack.c.l.b16 %v83
  %v252 = vunpack.c.l.b16 %v84
  %v253 = vunpack.c.l.b16 %v85
  %v254 = vunpack.c.l.b16 %v86
  %v255 = vunpack.c.l.b16 %v87
  %v256 = vunpack.c.l.b16 %v88
  %v257 = vunpack.c.l.b16 %v89
  %v258 = vunpack.c.l.b16 %v90
  %v259 = vunpack.c.l.b16 %v91
  %v260 = vunpack.c.l.b16 %v92
  %v261 = vunpack.c.l.b16 %v93
  %v262 = vunpack.c.l.b16 %v94
  %v263 = vunpack.c.l.b16 %v95
  %v264 = vunpack.c.l.b16 %v96
  %v265 = vunpack.c.l.b16 %v97
  %v266 = vunpack.c.l.b16 %v98
  %v267 = vunpack.c.l.b16 %v99
  %v268 = vunpack.c.l.b16 %v100
  %v269 = vpack.c.b16 %v206, %v205
  %v270 = vpack.c.b16 %v208, %v207
  %v271 = vpack.c.b16 %v210, %v209
  %v272 = vpack.c.b16 %v212, %v211
  %v273 = vpack.c.b16 %v214, %v213
  %v274 = vpack.c.b16 %v216, %v215
  %v275 = vpack.c.b16 %v218, %v217
  %v276 = vpack.c.b16 %v220, %v219
  %v277 = vpack.c.b16 %v222, %v221
  %v278 = vpack.c.b16 %v224, %v223
  %v279 = vpack.c.b16 %v226, %v225
  %v280 = vpack.c.b16 %v228, %v227
  %v281 = vpack.c.b16 %v230, %v229
  %v282 = vpack.c.b16 %v232, %v231
  %v283 = vpack.c.b16 %v234, %v233
  %v284 = vpack.c.b16 %v236, %v235
  %v285 = vpack.c.b16 %v238, %v237
  %v286 = vpack.c.b16 %v240, %v239
  %v287 = vpack.c.b16 %v242, %v241
  %v288 = vpack.c.b16 %v244, %v243
  %v289 = vpack.c.b16 %v246, %v245
  %v290 = vpack.c.b16 %v248, %v247
  %v291 = vpack.c.b16 %v250, %v249
  %v292 = vpack.c.b16 %v252, %v251
  %v293 = vpack.c.b16 %v254, %v253
  %v294 = vpack.c.b16 %v256, %v255
  %v295 = vpack.c.b16 %v258, %v257
  %v296 = vpack.c.b16 %v260, %v259
  %v297 = vpack.c.b16 %v262, %v261
  %v298 = vpack.c.b16 %v264, %v263
  %v299 = vpack.c.b16 %v266, %v265
  %v300 = vpack.c.b16 %v268, %v267
  %333 = vmatpush.bf16.msra.mxu0 %v276
  %334 = vmatpush.bf16.msra.mxu0 %v275
  %335 = vmatpush.bf16.msra.mxu0 %v274
  %336 = vmatpush.bf16.msra.mxu0 %v273
  %337 = vmatpush.bf16.msra.mxu0 %v272
  %338 = vmatpush.bf16.msra.mxu0 %v271
  %339 = vmatpush.bf16.msra.mxu0 %v270
  %340 = vmatpush.bf16.msra.mxu0 %v269
  %341 = vmatmul.bf16.gmra.mxu0 %v125
  %v342 = vpop.f32.mrf.mxu0
  %v343 = vadd.f32 0.0, %v342
  %v344 = vpop.f32.mrf.mxu0
  %v345 = vadd.f32 0.0, %v344
  %346 = vmatmul.bf16.gmra.mxu0 %v129
  %v347 = vpop.f32.mrf.mxu0
  %v348 = vadd.f32 0.0, %v347
  %v349 = vpop.f32.mrf.mxu0
  %v350 = vadd.f32 0.0, %v349
  %351 = vdwg.mxu0
  %352 = vmatpush.bf16.msra.mxu0 %v284
  %353 = vmatpush.bf16.msra.mxu0 %v283
  %354 = vmatpush.bf16.msra.mxu0 %v282
  %355 = vmatpush.bf16.msra.mxu0 %v281
  %356 = vmatpush.bf16.msra.mxu0 %v280
  %357 = vmatpush.bf16.msra.mxu0 %v279
  %358 = vmatpush.bf16.msra.mxu0 %v278
  %359 = vmatpush.bf16.msra.mxu0 %v277
  %360 = vmatmul.bf16.gmra.mxu0 %v126
  %v361 = vpop.f32.mrf.mxu0
  %v362 = vadd.f32 %v343, %v361
  %v363 = vpop.f32.mrf.mxu0
  %v364 = vadd.f32 %v345, %v363
  %365 = vmatmul.bf16.gmra.mxu0 %v130
  %v366 = vpop.f32.mrf.mxu0
  %v367 = vadd.f32 %v348, %v366
  %v368 = vpop.f32.mrf.mxu0
  %v369 = vadd.f32 %v350, %v368
  %370 = vdwg.mxu0
  %371 = vmatpush.bf16.msra.mxu0 %v292
  %372 = vmatpush.bf16.msra.mxu0 %v291
  %373 = vmatpush.bf16.msra.mxu0 %v290
  %374 = vmatpush.bf16.msra.mxu0 %v289
  %375 = vmatpush.bf16.msra.mxu0 %v288
  %376 = vmatpush.bf16.msra.mxu0 %v287
  %377 = vmatpush.bf16.msra.mxu0 %v286
  %378 = vmatpush.bf16.msra.mxu0 %v285
  %379 = vmatmul.bf16.gmra.mxu0 %v127
  %v380 = vpop.f32.mrf.mxu0
  %v381 = vadd.f32 %v362, %v380
  %v382 = vpop.f32.mrf.mxu0
  %v383 = vadd.f32 %v364, %v382
  %384 = vmatmul.bf16.gmra.mxu0 %v131
  %v385 = vpop.f32.mrf.mxu0
  %v386 = vadd.f32 %v367, %v385
  %v387 = vpop.f32.mrf.mxu0
  %v388 = vadd.f32 %v369, %v387
  %389 = vdwg.mxu0
  %390 = vmatpush.bf16.msra.mxu0 %v300
  %391 = vmatpush.bf16.msra.mxu0 %v299
  %392 = vmatpush.bf16.msra.mxu0 %v298
  %393 = vmatpush.bf16.msra.mxu0 %v297
  %394 = vmatpush.bf16.msra.mxu0 %v296
  %395 = vmatpush.bf16.msra.mxu0 %v295
  %396 = vmatpush.bf16.msra.mxu0 %v294
  %397 = vmatpush.bf16.msra.mxu0 %v293
  %398 = vmatmul.bf16.gmra.mxu0 %v128
  %v399 = vpop.f32.mrf.mxu0
  %v400 = vadd.f32 %v381, %v399
  %v401 = vpop.f32.mrf.mxu0
  %v402 = vadd.f32 %v383, %v401
  %403 = vmatmul.bf16.gmra.mxu0 %v132
  %v404 = vpop.f32.mrf.mxu0
  %v405 = vadd.f32 %v386, %v404
  %v406 = vpop.f32.mrf.mxu0
  %v407 = vadd.f32 %v388, %v406
  %408 = vdwg.mxu0
  %v409 = vadd.f32 %v25, %v400
  %v410 = vadd.f32 %v26, %v402
  %v411 = vadd.f32 %v27, %v405
  %v412 = vadd.f32 %v28, %v407
  %413 = vst [vmem:[#allocation2] sm:$0xff] %v409
  %414 = vst [vmem:[#allocation2 + $0x8] sm:$0xff] %v410
  %415 = vst [vmem:[#allocation2 + $0x10] sm:$0xff] %v411
  %416 = vst [vmem:[#allocation2 + $0x18] sm:$0xff] %v412
  // Predicated region
  $region22: #{transformer_block.17} parent=0 // pred_check
    %p417 = pneg %p17
  $region23: #{transformer_block.17} parent=0 // pred_check_branch
    %419 = sbr.rel (%p417) target = $region25
  $region24: #{transformer_block.17} parent=0 // pred_region
    %v420 = vld [vmem:[#allocation2] sm:$0xff]
    %v421 = vld [vmem:[#allocation2 + $0x8] sm:$0xff]
    %v422 = vld [vmem:[#allocation2 + $0x10] sm:$0xff]
    %v423 = vld [vmem:[#allocation2 + $0x18] sm:$0xff]
    %v424 = vld [vmem:[%s2] sm:$0xff]
    %v425 = vld [vmem:[%s2 + $0x8] sm:$0xff]
    %v426 = vld [vmem:[%s2 + $0x10] sm:$0xff]
    %v427 = vld [vmem:[%s2 + $0x18] sm:$0xff]
    %429 = vset.pattern.permute.xlu0 0
    %430 = vperm.xlu0 %429, %v424
    %v431 = vpop.permute.xlu0 %430
    %434 = vset.pattern.permute.xlu0 0
    %435 = vperm.xlu0 %434, %v425
    %v436 = vpop.permute.xlu0 %435
    %439 = vset.pattern.permute.xlu0 0
    %440 = vperm.xlu0 %439, %v426
    %v441 = vpop.permute.xlu0 %440
    %444 = vset.pattern.permute.xlu0 0
    %445 = vperm.xlu0 %444, %v427
    %v446 = vpop.permute.xlu0 %445
    %v448 = vmul.f32 %v420, %v431
    %v449 = vmul.f32 %v421, %v436
    %v450 = vmul.f32 %v422, %v441
    %v451 = vmul.f32 %v423, %v446
    %v452 = vld [vmem:[%s3] sm:$0x1]
    %v454 = vperm.slane %v452, 0
    %v456 = vmul.f32 %v448, %v454
    %v457 = vmul.f32 %v449, %v454
    %v458 = vmul.f32 %v450, %v454
    %v459 = vmul.f32 %v451, %v454
    %460 = vst [vmem:[%s4] sm:$0xff] %v456
    %461 = vst [vmem:[%s4 + $0x8] sm:$0xff] %v457
    %462 = vst [vmem:[%s4 + $0x10] sm:$0xff] %v458
    %463 = vst [vmem:[%s4 + $0x18] sm:$0xff] %v459
  $region25: #{transformer_block.17} parent=0 // pred_fallthru
    _
  // Predicated region
  $region26: #{transformer_block.17} parent=0 // pred_check
    _
  $region27: #{transformer_block.17} parent=0 // pred_check_branch
    %465 = sbr.rel (0) target = $region29
  $region28: #{transformer_block.17} parent=0 // pred_region
    _
  $region29: #{transformer_block.17} parent=0 // pred_fallthru
    _
  // Predicated region
  $region30: #{transformer_block.17} parent=0 // pred_check
    _
  $region31: #{transformer_block.17} parent=0 // pred_check_branch
    %467 = sbr.rel (0) target = $region33
  $region32: #{transformer_block.17} parent=0 // pred_region
    _
  $region33: #{transformer_block.17} parent=0 // pred_fallthru
    _

</llo_original>
